<compile_context>
chip_gen: v7x
topology: tpu7x:2x2x1
jax: 0.10.0
libtpu: 0.0.40
codegen_flags: <defaults>
</compile_context>

<pallas_src>
import functools

import numpy as np
import jax
import jax.numpy as jnp
from jax.experimental import pallas as pl
from jax.experimental.pallas import tpu as pltpu


def _generator_kernel(x_ref, w1_ref, b1_ref, w2_ref, b2_ref, w3_ref, b3_ref,
                      o_ref, g_ref, p_ref, *, H, W, Wg, S_pad, B_tile):
    """Fused 3-layer generator for a tile of B_tile images.

    Layout: channel-major, (channels, B_tile * flattened padded grid).  Each
    image's padded grid is Wg x Wg (Wg = W + 4) flattened to S_pad lanes.  The
    valid image starts at grid offset (3, 3) and drifts up-left by one per conv
    layer (offsets 3 -> 2 -> 1 -> 0), so no inter-layer re-shifting is needed:
    we only re-mask around the valid region to emulate zero padding.
    """
    f32 = jnp.float32
    bf16 = jnp.bfloat16
    L = B_tile * S_pad
    lead = 3 * Wg + 3                       # image starts at grid offset (3, 3)

    # ---------- Prologue: embed images into the zeroed padded grid ----------
    # Per-row slice stores into a VMEM scratch (no giant concatenate).
    g_ref[...] = jnp.zeros_like(g_ref)
    for b in range(B_tile):
        for h in range(H):
            dst = b * S_pad + lead + h * Wg
            g_ref[:, dst:dst + W] = x_ref[b, :, h * W:(h + 1) * W]

    # ---------- Border masks, generated in-kernel from iota compares --------
    # valid_mask(a): True inside the H x W image placed at grid offset (a, a),
    # False elsewhere -- including the padded tail and the lanes pltpu.roll
    # wraps around, so rolled junk is zeroed before the next layer.
    flat = jax.lax.broadcasted_iota(jnp.int32, (1, S_pad), 1)

    def valid_mask(a):
        m = None
        for h in range(H):
            s = (a + h) * Wg + a
            row = (flat >= s) & (flat < s + W)
            m = row if m is None else (m | row)
        if B_tile > 1:
            m = jnp.tile(m, (1, B_tile))
        return m

    m2 = valid_mask(2)                      # valid region after conv1
    m1 = valid_mask(1)                      # valid region after conv2

    # ---------- One conv layer = 9 XLU lane-rolls + 1 MXU matmul ------------
    def conv3x3(g, w_ref, b_ref):
        # g: (cin, L) f32, valid image at some offset on the flattened grid,
        # zeros elsewhere.  Tap (dy, dx) is a pure lane rotation by dy*Wg+dx;
        # each tap is written once (bf16) into the patch scratch, then one
        # (cout, 9*cin) x (9*cin, L) matmul with f32 accumulation.
        cin = g.shape[0]
        t = 0
        for dy in range(3):
            for dx in range(3):
                off = dy * Wg + dx
                tap = g if off == 0 else pltpu.roll(g, L - off, axis=1)
                p_ref[t * cin:(t + 1) * cin, :] = tap.astype(bf16)
                t += 1
        y = jnp.dot(w_ref[...], p_ref[0:9 * cin, :],
                    preferred_element_type=f32)
        return y + b_ref[...]

    g0 = g_ref[...]
    h1 = jnp.where(m2, jnp.maximum(conv3x3(g0, w1_ref, b1_ref), 0.0), 0.0)
    h2 = jnp.where(m1, jnp.maximum(conv3x3(h1, w2_ref, b2_ref), 0.0), 0.0)
    y3 = jnp.tanh(conv3x3(h2, w3_ref, b3_ref))          # valid region at offset 0

    # ---------- Epilogue: per-row stores straight into the output -----------
    for b in range(B_tile):
        for h in range(H):
            src = b * S_pad + h * Wg
            o_ref[b, :, h * W:(h + 1) * W] = y3[:, src:src + W].astype(o_ref.dtype)


def _pick_batch_tile(N):
    """Largest divisor of N that keeps >= 2 grid steps (one per v7x TC), <= 8."""
    best = 1
    for d in range(1, min(N, 8) + 1):
        if N % d == 0 and N // d >= 2:
            best = d
    return best


def generator_forward(x_nchw, params):
    """netG(x): fused Conv-ReLU, Conv-ReLU, Conv-Tanh.  NCHW in / NCHW out."""
    N, C, H, W = x_nchw.shape
    Wg, Hg = W + 4, H + 4                   # padded grid; the spare row/col keeps
                                            # roll wrap-around out of every valid tap
    S_pad = ((Hg * Wg + 127) // 128) * 128  # flattened grid, lane aligned
    assert H * W % 128 == 0, "lane-dense I/O expects H*W to be a multiple of 128"

    B_tile = _pick_batch_tile(N)
    hidden = params["conv1"][0].shape[0]

    def prep(wb):
        w, b = wb                           # w: (Cout, 3, 3, Cin)
        cout, _, _, cin = w.shape
        return (w.reshape(cout, 9 * cin).astype(jnp.bfloat16),
                b.reshape(cout, 1).astype(jnp.float32))

    wm1, bc1 = prep(params["conv1"])
    wm2, bc2 = prep(params["conv2"])
    wm3, bc3 = prep(params["conv3"])

    x2 = x_nchw.reshape(N, C, H * W)        # free reshape, no transpose

    kernel = functools.partial(_generator_kernel, H=H, W=W, Wg=Wg,
                               S_pad=S_pad, B_tile=B_tile)
    full = lambda n: (0, 0)
    out = pl.pallas_call(
        kernel,
        out_shape=jax.ShapeDtypeStruct((N, C, H * W), x_nchw.dtype),
        grid=(N // B_tile,),
        in_specs=[
            pl.BlockSpec((B_tile, C, H * W), lambda n: (n, 0, 0)),
            pl.BlockSpec(wm1.shape, full),
            pl.BlockSpec(bc1.shape, full),
            pl.BlockSpec(wm2.shape, full),
            pl.BlockSpec(bc2.shape, full),
            pl.BlockSpec(wm3.shape, full),
            pl.BlockSpec(bc3.shape, full),
        ],
        out_specs=pl.BlockSpec((B_tile, C, H * W), lambda n: (n, 0, 0)),
        scratch_shapes=[
            pltpu.VMEM((C, B_tile * S_pad), jnp.float32),               # padded grid
            pltpu.VMEM((9 * max(C, hidden), B_tile * S_pad), jnp.bfloat16),  # im2col
        ],
        # Batch-tile axis "parallel": v7x's two TensorCores split the steps;
        # a no-op on single-core v5e/v6e.  Weights use constant block indices,
        # so they are DMA'd into VMEM only once.
        compiler_params=pltpu.CompilerParams(
            dimension_semantics=("parallel",)),
    )(x2, wm1, bc1, wm2, bc2, wm3, bc3)
    return out.reshape(N, C, H, W)


def init_generator_params(key, c_in, hidden):
    """Deterministic stand-in Generator parameters (OHWI conv weights + biases)."""
    def conv_init(k, cin, cout):
        kw, kb = jax.random.split(k)
        bound = 1.0 / float(np.sqrt(cin * 9))
        w = jax.random.uniform(kw, (cout, 3, 3, cin), jnp.float32, -bound, bound)
        b = jax.random.uniform(kb, (cout,), jnp.float32, -bound, bound)
        return w, b

    k1, k2, k3 = jax.random.split(key, 3)
    return {
        "conv1": conv_init(k1, c_in, hidden),
        "conv2": conv_init(k2, hidden, hidden),
        "conv3": conv_init(k3, hidden, c_in),
    }


def gan_forward(x_nchw, params):
    """GAN.forward: returns x_gen = netG(x)."""
    return generator_forward(x_nchw, params)


def _reference_forward(x, params):
    """Pure-XLA reference of the same generator.

    Matches the kernel's quantization: matmul inputs (weights and the per-layer
    activations that form the im2col taps) are rounded to bf16, accumulation,
    bias and activations stay f32.
    """
    def conv(h, w, b, act):
        n, cin, hh, ww = h.shape
        w = w.astype(jnp.bfloat16).astype(jnp.float32)
        h = h.astype(jnp.bfloat16).astype(jnp.float32)
        hp = jnp.pad(h, ((0, 0), (0, 0), (1, 1), (1, 1)))
        acc = jnp.zeros((n, w.shape[0], hh, ww), jnp.float32)
        for dy in range(3):
            for dx in range(3):
                acc = acc + jnp.einsum(
                    "ncij,oc->noij",
                    hp[:, :, dy:dy + hh, dx:dx + ww], w[:, dy, dx, :])
        acc = acc + b[None, :, None, None]
        return act(acc)

    relu = lambda t: jnp.maximum(t, 0.0)
    h = conv(x, *params["conv1"], relu)
    h = conv(h, *params["conv2"], relu)
    return conv(h, *params["conv3"], jnp.tanh)


if __name__ == "__main__":
    key = jax.random.PRNGKey(0)
    k_x, k_p = jax.random.split(key)

    # Small shapes consistent with the module: batch=2, channels=4, 16x16.
    N, C, H, W = 2, 4, 16, 16
    HIDDEN = 8
    x = jax.random.normal(k_x, (N, C, H, W), dtype=jnp.float32)
    params = init_generator_params(k_p, C, HIDDEN)

    fwd = jax.jit(gan_forward)
    x_gen = jax.block_until_ready(fwd(x, params))

    assert x_gen.shape == (N, C, H, W), x_gen.shape
    assert x_gen.dtype == jnp.float32

    # Validate against the pure-XLA reference (bf16 matmul inputs in both).
    ref = _reference_forward(x, params)
    err = float(jnp.max(jnp.abs(x_gen - ref)))
    assert err < 2e-2, f"max abs error vs reference: {err}"

    print("KERNEL_OK")
</pallas_src>

<mosaic_0001>
module attributes {stable_mosaic.version = 11 : i64} {
  func.func @_generator_kernel(%arg0: i32, %arg1: memref<1x4x256xf32, #tpu.memory_space<vmem>>, %arg2: memref<8x36xbf16, #tpu.memory_space<vmem>>, %arg3: memref<8x1xf32, #tpu.memory_space<vmem>>, %arg4: memref<8x72xbf16, #tpu.memory_space<vmem>>, %arg5: memref<8x1xf32, #tpu.memory_space<vmem>>, %arg6: memref<4x72xbf16, #tpu.memory_space<vmem>>, %arg7: memref<4x1xf32, #tpu.memory_space<vmem>>, %arg8: memref<1x4x256xf32, #tpu.memory_space<vmem>>, %arg9: memref<4x512xf32, #tpu.memory_space<vmem>>, %arg10: memref<72x512xbf16, #tpu.memory_space<vmem>>) attributes {dimension_semantics = [#tpu.dimension_semantics<parallel>], iteration_bounds = array<i64: 2>, scalar_prefetch = 0 : i64, scratch_operands = 2 : i64, tpu.core_type = #tpu.core_type<tc>, window_params = [{transform_indices = @transform_0, window_bounds = array<i64: 1, 4, 256>}, {pipeline_mode = #tpu.pipeline_mode<synchronous>, transform_indices = @transform_1, window_bounds = array<i64: 8, 36>}, {pipeline_mode = #tpu.pipeline_mode<synchronous>, transform_indices = @transform_2, window_bounds = array<i64: 8, 1>}, {pipeline_mode = #tpu.pipeline_mode<synchronous>, transform_indices = @transform_3, window_bounds = array<i64: 8, 72>}, {pipeline_mode = #tpu.pipeline_mode<synchronous>, transform_indices = @transform_4, window_bounds = array<i64: 8, 1>}, {pipeline_mode = #tpu.pipeline_mode<synchronous>, transform_indices = @transform_5, window_bounds = array<i64: 4, 72>}, {pipeline_mode = #tpu.pipeline_mode<synchronous>, transform_indices = @transform_6, window_bounds = array<i64: 4, 1>}, {transform_indices = @transform_7, window_bounds = array<i64: 1, 4, 256>}]} {
    %cst = arith.constant 0.000000e+00 : f32
    %0 = vector.broadcast %cst : f32 to vector<4x512xf32>
    %c0 = arith.constant 0 : index
    %c0_0 = arith.constant 0 : index
    %1 = vector.load %arg9[%c0, %c0_0] : memref<4x512xf32, #tpu.memory_space<vmem>>, vector<4x512xf32>
    tpu.vector_store %arg9[%c0, %c0_0], %0 {strides = array<i32>} : memref<4x512xf32, #tpu.memory_space<vmem>>, vector<4x512xf32>,
    %c0_1 = arith.constant 0 : index
    %c0_2 = arith.constant 0 : index
    %c0_3 = arith.constant 0 : index
    %2 = vector.load %arg1[%c0_1, %c0_2, %c0_3] : memref<1x4x256xf32, #tpu.memory_space<vmem>>, vector<1x4x16xf32>
    %3 = vector.shape_cast %2 : vector<1x4x16xf32> to vector<4x16xf32>
    %c0_4 = arith.constant 0 : index
    %c63 = arith.constant 63 : index
    %4 = vector.load %arg9[%c0_4, %c63] : memref<4x512xf32, #tpu.memory_space<vmem>>, vector<4x16xf32>
    tpu.vector_store %arg9[%c0_4, %c63], %3 {strides = array<i32>} : memref<4x512xf32, #tpu.memory_space<vmem>>, vector<4x16xf32>,
    %c0_5 = arith.constant 0 : index
    %c0_6 = arith.constant 0 : index
    %c16 = arith.constant 16 : index
    %5 = vector.load %arg1[%c0_5, %c0_6, %c16] : memref<1x4x256xf32, #tpu.memory_space<vmem>>, vector<1x4x16xf32>
    %6 = vector.shape_cast %5 : vector<1x4x16xf32> to vector<4x16xf32>
    %c0_7 = arith.constant 0 : index
    %c83 = arith.constant 83 : index
    %7 = vector.load %arg9[%c0_7, %c83] : memref<4x512xf32, #tpu.memory_space<vmem>>, vector<4x16xf32>
    tpu.vector_store %arg9[%c0_7, %c83], %6 {strides = array<i32>} : memref<4x512xf32, #tpu.memory_space<vmem>>, vector<4x16xf32>,
    %c0_8 = arith.constant 0 : index
    %c0_9 = arith.constant 0 : index
    %c32 = arith.constant 32 : index
    %8 = vector.load %arg1[%c0_8, %c0_9, %c32] : memref<1x4x256xf32, #tpu.memory_space<vmem>>, vector<1x4x16xf32>
    %9 = vector.shape_cast %8 : vector<1x4x16xf32> to vector<4x16xf32>
    %c0_10 = arith.constant 0 : index
    %c103 = arith.constant 103 : index
    %10 = vector.load %arg9[%c0_10, %c103] : memref<4x512xf32, #tpu.memory_space<vmem>>, vector<4x16xf32>
    tpu.vector_store %arg9[%c0_10, %c103], %9 {strides = array<i32>} : memref<4x512xf32, #tpu.memory_space<vmem>>, vector<4x16xf32>,
    %c0_11 = arith.constant 0 : index
    %c0_12 = arith.constant 0 : index
    %c48 = arith.constant 48 : index
    %11 = vector.load %arg1[%c0_11, %c0_12, %c48] : memref<1x4x256xf32, #tpu.memory_space<vmem>>, vector<1x4x16xf32>
    %12 = vector.shape_cast %11 : vector<1x4x16xf32> to vector<4x16xf32>
    %c0_13 = arith.constant 0 : index
    %c123 = arith.constant 123 : index
    %13 = vector.load %arg9[%c0_13, %c123] : memref<4x512xf32, #tpu.memory_space<vmem>>, vector<4x16xf32>
    tpu.vector_store %arg9[%c0_13, %c123], %12 {strides = array<i32>} : memref<4x512xf32, #tpu.memory_space<vmem>>, vector<4x16xf32>,
    %c0_14 = arith.constant 0 : index
    %c0_15 = arith.constant 0 : index
    %c64 = arith.constant 64 : index
    %14 = vector.load %arg1[%c0_14, %c0_15, %c64] : memref<1x4x256xf32, #tpu.memory_space<vmem>>, vector<1x4x16xf32>
    %15 = vector.shape_cast %14 : vector<1x4x16xf32> to vector<4x16xf32>
    %c0_16 = arith.constant 0 : index
    %c143 = arith.constant 143 : index
    %16 = vector.load %arg9[%c0_16, %c143] : memref<4x512xf32, #tpu.memory_space<vmem>>, vector<4x16xf32>
    tpu.vector_store %arg9[%c0_16, %c143], %15 {strides = array<i32>} : memref<4x512xf32, #tpu.memory_space<vmem>>, vector<4x16xf32>,
    %c0_17 = arith.constant 0 : index
    %c0_18 = arith.constant 0 : index
    %c80 = arith.constant 80 : index
    %17 = vector.load %arg1[%c0_17, %c0_18, %c80] : memref<1x4x256xf32, #tpu.memory_space<vmem>>, vector<1x4x16xf32>
    %18 = vector.shape_cast %17 : vector<1x4x16xf32> to vector<4x16xf32>
    %c0_19 = arith.constant 0 : index
    %c163 = arith.constant 163 : index
    %19 = vector.load %arg9[%c0_19, %c163] : memref<4x512xf32, #tpu.memory_space<vmem>>, vector<4x16xf32>
    tpu.vector_store %arg9[%c0_19, %c163], %18 {strides = array<i32>} : memref<4x512xf32, #tpu.memory_space<vmem>>, vector<4x16xf32>,
    %c0_20 = arith.constant 0 : index
    %c0_21 = arith.constant 0 : index
    %c96 = arith.constant 96 : index
    %20 = vector.load %arg1[%c0_20, %c0_21, %c96] : memref<1x4x256xf32, #tpu.memory_space<vmem>>, vector<1x4x16xf32>
    %21 = vector.shape_cast %20 : vector<1x4x16xf32> to vector<4x16xf32>
    %c0_22 = arith.constant 0 : index
    %c183 = arith.constant 183 : index
    %22 = vector.load %arg9[%c0_22, %c183] : memref<4x512xf32, #tpu.memory_space<vmem>>, vector<4x16xf32>
    tpu.vector_store %arg9[%c0_22, %c183], %21 {strides = array<i32>} : memref<4x512xf32, #tpu.memory_space<vmem>>, vector<4x16xf32>,
    %c0_23 = arith.constant 0 : index
    %c0_24 = arith.constant 0 : index
    %c112 = arith.constant 112 : index
    %23 = vector.load %arg1[%c0_23, %c0_24, %c112] : memref<1x4x256xf32, #tpu.memory_space<vmem>>, vector<1x4x16xf32>
    %24 = vector.shape_cast %23 : vector<1x4x16xf32> to vector<4x16xf32>
    %c0_25 = arith.constant 0 : index
    %c203 = arith.constant 203 : index
    %25 = vector.load %arg9[%c0_25, %c203] : memref<4x512xf32, #tpu.memory_space<vmem>>, vector<4x16xf32>
    tpu.vector_store %arg9[%c0_25, %c203], %24 {strides = array<i32>} : memref<4x512xf32, #tpu.memory_space<vmem>>, vector<4x16xf32>,
    %c0_26 = arith.constant 0 : index
    %c0_27 = arith.constant 0 : index
    %c128 = arith.constant 128 : index
    %26 = vector.load %arg1[%c0_26, %c0_27, %c128] : memref<1x4x256xf32, #tpu.memory_space<vmem>>, vector<1x4x16xf32>
    %27 = vector.shape_cast %26 : vector<1x4x16xf32> to vector<4x16xf32>
    %c0_28 = arith.constant 0 : index
    %c223 = arith.constant 223 : index
    %28 = vector.load %arg9[%c0_28, %c223] : memref<4x512xf32, #tpu.memory_space<vmem>>, vector<4x16xf32>
    tpu.vector_store %arg9[%c0_28, %c223], %27 {strides = array<i32>} : memref<4x512xf32, #tpu.memory_space<vmem>>, vector<4x16xf32>,
    %c0_29 = arith.constant 0 : index
    %c0_30 = arith.constant 0 : index
    %c144 = arith.constant 144 : index
    %29 = vector.load %arg1[%c0_29, %c0_30, %c144] : memref<1x4x256xf32, #tpu.memory_space<vmem>>, vector<1x4x16xf32>
    %30 = vector.shape_cast %29 : vector<1x4x16xf32> to vector<4x16xf32>
    %c0_31 = arith.constant 0 : index
    %c243 = arith.constant 243 : index
    %31 = vector.load %arg9[%c0_31, %c243] : memref<4x512xf32, #tpu.memory_space<vmem>>, vector<4x16xf32>
    tpu.vector_store %arg9[%c0_31, %c243], %30 {strides = array<i32>} : memref<4x512xf32, #tpu.memory_space<vmem>>, vector<4x16xf32>,
    %c0_32 = arith.constant 0 : index
    %c0_33 = arith.constant 0 : index
    %c160 = arith.constant 160 : index
    %32 = vector.load %arg1[%c0_32, %c0_33, %c160] : memref<1x4x256xf32, #tpu.memory_space<vmem>>, vector<1x4x16xf32>
    %33 = vector.shape_cast %32 : vector<1x4x16xf32> to vector<4x16xf32>
    %c0_34 = arith.constant 0 : index
    %c263 = arith.constant 263 : index
    %34 = vector.load %arg9[%c0_34, %c263] : memref<4x512xf32, #tpu.memory_space<vmem>>, vector<4x16xf32>
    tpu.vector_store %arg9[%c0_34, %c263], %33 {strides = array<i32>} : memref<4x512xf32, #tpu.memory_space<vmem>>, vector<4x16xf32>,
    %c0_35 = arith.constant 0 : index
    %c0_36 = arith.constant 0 : index
    %c176 = arith.constant 176 : index
    %35 = vector.load %arg1[%c0_35, %c0_36, %c176] : memref<1x4x256xf32, #tpu.memory_space<vmem>>, vector<1x4x16xf32>
    %36 = vector.shape_cast %35 : vector<1x4x16xf32> to vector<4x16xf32>
    %c0_37 = arith.constant 0 : index
    %c283 = arith.constant 283 : index
    %37 = vector.load %arg9[%c0_37, %c283] : memref<4x512xf32, #tpu.memory_space<vmem>>, vector<4x16xf32>
    tpu.vector_store %arg9[%c0_37, %c283], %36 {strides = array<i32>} : memref<4x512xf32, #tpu.memory_space<vmem>>, vector<4x16xf32>,
    %c0_38 = arith.constant 0 : index
    %c0_39 = arith.constant 0 : index
    %c192 = arith.constant 192 : index
    %38 = vector.load %arg1[%c0_38, %c0_39, %c192] : memref<1x4x256xf32, #tpu.memory_space<vmem>>, vector<1x4x16xf32>
    %39 = vector.shape_cast %38 : vector<1x4x16xf32> to vector<4x16xf32>
    %c0_40 = arith.constant 0 : index
    %c303 = arith.constant 303 : index
    %40 = vector.load %arg9[%c0_40, %c303] : memref<4x512xf32, #tpu.memory_space<vmem>>, vector<4x16xf32>
    tpu.vector_store %arg9[%c0_40, %c303], %39 {strides = array<i32>} : memref<4x512xf32, #tpu.memory_space<vmem>>, vector<4x16xf32>,
    %c0_41 = arith.constant 0 : index
    %c0_42 = arith.constant 0 : index
    %c208 = arith.constant 208 : index
    %41 = vector.load %arg1[%c0_41, %c0_42, %c208] : memref<1x4x256xf32, #tpu.memory_space<vmem>>, vector<1x4x16xf32>
    %42 = vector.shape_cast %41 : vector<1x4x16xf32> to vector<4x16xf32>
    %c0_43 = arith.constant 0 : index
    %c323 = arith.constant 323 : index
    %43 = vector.load %arg9[%c0_43, %c323] : memref<4x512xf32, #tpu.memory_space<vmem>>, vector<4x16xf32>
    tpu.vector_store %arg9[%c0_43, %c323], %42 {strides = array<i32>} : memref<4x512xf32, #tpu.memory_space<vmem>>, vector<4x16xf32>,
    %c0_44 = arith.constant 0 : index
    %c0_45 = arith.constant 0 : index
    %c224 = arith.constant 224 : index
    %44 = vector.load %arg1[%c0_44, %c0_45, %c224] : memref<1x4x256xf32, #tpu.memory_space<vmem>>, vector<1x4x16xf32>
    %45 = vector.shape_cast %44 : vector<1x4x16xf32> to vector<4x16xf32>
    %c0_46 = arith.constant 0 : index
    %c343 = arith.constant 343 : index
    %46 = vector.load %arg9[%c0_46, %c343] : memref<4x512xf32, #tpu.memory_space<vmem>>, vector<4x16xf32>
    tpu.vector_store %arg9[%c0_46, %c343], %45 {strides = array<i32>} : memref<4x512xf32, #tpu.memory_space<vmem>>, vector<4x16xf32>,
    %c0_47 = arith.constant 0 : index
    %c0_48 = arith.constant 0 : index
    %c240 = arith.constant 240 : index
    %47 = vector.load %arg1[%c0_47, %c0_48, %c240] : memref<1x4x256xf32, #tpu.memory_space<vmem>>, vector<1x4x16xf32>
    %48 = vector.shape_cast %47 : vector<1x4x16xf32> to vector<4x16xf32>
    %c0_49 = arith.constant 0 : index
    %c363 = arith.constant 363 : index
    %49 = vector.load %arg9[%c0_49, %c363] : memref<4x512xf32, #tpu.memory_space<vmem>>, vector<4x16xf32>
    tpu.vector_store %arg9[%c0_49, %c363], %48 {strides = array<i32>} : memref<4x512xf32, #tpu.memory_space<vmem>>, vector<4x16xf32>,
    %50 = tpu.iota {dimensions = array<i32: 1>} : vector<1x512xi32>
    %c42_i32 = arith.constant 42 : i32
    %51 = vector.broadcast %c42_i32 : i32 to vector<1x512xi32>
    %52 = arith.cmpi sge, %50, %51 : vector<1x512xi32>
    %c58_i32 = arith.constant 58 : i32
    %53 = vector.broadcast %c58_i32 : i32 to vector<1x512xi32>
    %54 = arith.cmpi slt, %50, %53 : vector<1x512xi32>
    %55 = arith.andi %52, %54 : vector<1x512xi1>
    %c62_i32 = arith.constant 62 : i32
    %56 = vector.broadcast %c62_i32 : i32 to vector<1x512xi32>
    %57 = arith.cmpi sge, %50, %56 : vector<1x512xi32>
    %c78_i32 = arith.constant 78 : i32
    %58 = vector.broadcast %c78_i32 : i32 to vector<1x512xi32>
    %59 = arith.cmpi slt, %50, %58 : vector<1x512xi32>
    %60 = arith.andi %57, %59 : vector<1x512xi1>
    %61 = arith.ori %55, %60 : vector<1x512xi1>
    %c82_i32 = arith.constant 82 : i32
    %62 = vector.broadcast %c82_i32 : i32 to vector<1x512xi32>
    %63 = arith.cmpi sge, %50, %62 : vector<1x512xi32>
    %c98_i32 = arith.constant 98 : i32
    %64 = vector.broadcast %c98_i32 : i32 to vector<1x512xi32>
    %65 = arith.cmpi slt, %50, %64 : vector<1x512xi32>
    %66 = arith.andi %63, %65 : vector<1x512xi1>
    %67 = arith.ori %61, %66 : vector<1x512xi1>
    %c102_i32 = arith.constant 102 : i32
    %68 = vector.broadcast %c102_i32 : i32 to vector<1x512xi32>
    %69 = arith.cmpi sge, %50, %68 : vector<1x512xi32>
    %c118_i32 = arith.constant 118 : i32
    %70 = vector.broadcast %c118_i32 : i32 to vector<1x512xi32>
    %71 = arith.cmpi slt, %50, %70 : vector<1x512xi32>
    %72 = arith.andi %69, %71 : vector<1x512xi1>
    %73 = arith.ori %67, %72 : vector<1x512xi1>
    %c122_i32 = arith.constant 122 : i32
    %74 = vector.broadcast %c122_i32 : i32 to vector<1x512xi32>
    %75 = arith.cmpi sge, %50, %74 : vector<1x512xi32>
    %c138_i32 = arith.constant 138 : i32
    %76 = vector.broadcast %c138_i32 : i32 to vector<1x512xi32>
    %77 = arith.cmpi slt, %50, %76 : vector<1x512xi32>
    %78 = arith.andi %75, %77 : vector<1x512xi1>
    %79 = arith.ori %73, %78 : vector<1x512xi1>
    %c142_i32 = arith.constant 142 : i32
    %80 = vector.broadcast %c142_i32 : i32 to vector<1x512xi32>
    %81 = arith.cmpi sge, %50, %80 : vector<1x512xi32>
    %c158_i32 = arith.constant 158 : i32
    %82 = vector.broadcast %c158_i32 : i32 to vector<1x512xi32>
    %83 = arith.cmpi slt, %50, %82 : vector<1x512xi32>
    %84 = arith.andi %81, %83 : vector<1x512xi1>
    %85 = arith.ori %79, %84 : vector<1x512xi1>
    %c162_i32 = arith.constant 162 : i32
    %86 = vector.broadcast %c162_i32 : i32 to vector<1x512xi32>
    %87 = arith.cmpi sge, %50, %86 : vector<1x512xi32>
    %c178_i32 = arith.constant 178 : i32
    %88 = vector.broadcast %c178_i32 : i32 to vector<1x512xi32>
    %89 = arith.cmpi slt, %50, %88 : vector<1x512xi32>
    %90 = arith.andi %87, %89 : vector<1x512xi1>
    %91 = arith.ori %85, %90 : vector<1x512xi1>
    %c182_i32 = arith.constant 182 : i32
    %92 = vector.broadcast %c182_i32 : i32 to vector<1x512xi32>
    %93 = arith.cmpi sge, %50, %92 : vector<1x512xi32>
    %c198_i32 = arith.constant 198 : i32
    %94 = vector.broadcast %c198_i32 : i32 to vector<1x512xi32>
    %95 = arith.cmpi slt, %50, %94 : vector<1x512xi32>
    %96 = arith.andi %93, %95 : vector<1x512xi1>
    %97 = arith.ori %91, %96 : vector<1x512xi1>
    %c202_i32 = arith.constant 202 : i32
    %98 = vector.broadcast %c202_i32 : i32 to vector<1x512xi32>
    %99 = arith.cmpi sge, %50, %98 : vector<1x512xi32>
    %c218_i32 = arith.constant 218 : i32
    %100 = vector.broadcast %c218_i32 : i32 to vector<1x512xi32>
    %101 = arith.cmpi slt, %50, %100 : vector<1x512xi32>
    %102 = arith.andi %99, %101 : vector<1x512xi1>
    %103 = arith.ori %97, %102 : vector<1x512xi1>
    %c222_i32 = arith.constant 222 : i32
    %104 = vector.broadcast %c222_i32 : i32 to vector<1x512xi32>
    %105 = arith.cmpi sge, %50, %104 : vector<1x512xi32>
    %c238_i32 = arith.constant 238 : i32
    %106 = vector.broadcast %c238_i32 : i32 to vector<1x512xi32>
    %107 = arith.cmpi slt, %50, %106 : vector<1x512xi32>
    %108 = arith.andi %105, %107 : vector<1x512xi1>
    %109 = arith.ori %103, %108 : vector<1x512xi1>
    %c242_i32 = arith.constant 242 : i32
    %110 = vector.broadcast %c242_i32 : i32 to vector<1x512xi32>
    %111 = arith.cmpi sge, %50, %110 : vector<1x512xi32>
    %c258_i32 = arith.constant 258 : i32
    %112 = vector.broadcast %c258_i32 : i32 to vector<1x512xi32>
    %113 = arith.cmpi slt, %50, %112 : vector<1x512xi32>
    %114 = arith.andi %111, %113 : vector<1x512xi1>
    %115 = arith.ori %109, %114 : vector<1x512xi1>
    %c262_i32 = arith.constant 262 : i32
    %116 = vector.broadcast %c262_i32 : i32 to vector<1x512xi32>
    %117 = arith.cmpi sge, %50, %116 : vector<1x512xi32>
    %c278_i32 = arith.constant 278 : i32
    %118 = vector.broadcast %c278_i32 : i32 to vector<1x512xi32>
    %119 = arith.cmpi slt, %50, %118 : vector<1x512xi32>
    %120 = arith.andi %117, %119 : vector<1x512xi1>
    %121 = arith.ori %115, %120 : vector<1x512xi1>
    %c282_i32 = arith.constant 282 : i32
    %122 = vector.broadcast %c282_i32 : i32 to vector<1x512xi32>
    %123 = arith.cmpi sge, %50, %122 : vector<1x512xi32>
    %c298_i32 = arith.constant 298 : i32
    %124 = vector.broadcast %c298_i32 : i32 to vector<1x512xi32>
    %125 = arith.cmpi slt, %50, %124 : vector<1x512xi32>
    %126 = arith.andi %123, %125 : vector<1x512xi1>
    %127 = arith.ori %121, %126 : vector<1x512xi1>
    %c302_i32 = arith.constant 302 : i32
    %128 = vector.broadcast %c302_i32 : i32 to vector<1x512xi32>
    %129 = arith.cmpi sge, %50, %128 : vector<1x512xi32>
    %c318_i32 = arith.constant 318 : i32
    %130 = vector.broadcast %c318_i32 : i32 to vector<1x512xi32>
    %131 = arith.cmpi slt, %50, %130 : vector<1x512xi32>
    %132 = arith.andi %129, %131 : vector<1x512xi1>
    %133 = arith.ori %127, %132 : vector<1x512xi1>
    %c322_i32 = arith.constant 322 : i32
    %134 = vector.broadcast %c322_i32 : i32 to vector<1x512xi32>
    %135 = arith.cmpi sge, %50, %134 : vector<1x512xi32>
    %c338_i32 = arith.constant 338 : i32
    %136 = vector.broadcast %c338_i32 : i32 to vector<1x512xi32>
    %137 = arith.cmpi slt, %50, %136 : vector<1x512xi32>
    %138 = arith.andi %135, %137 : vector<1x512xi1>
    %139 = arith.ori %133, %138 : vector<1x512xi1>
    %c342_i32 = arith.constant 342 : i32
    %140 = vector.broadcast %c342_i32 : i32 to vector<1x512xi32>
    %141 = arith.cmpi sge, %50, %140 : vector<1x512xi32>
    %c358_i32 = arith.constant 358 : i32
    %142 = vector.broadcast %c358_i32 : i32 to vector<1x512xi32>
    %143 = arith.cmpi slt, %50, %142 : vector<1x512xi32>
    %144 = arith.andi %141, %143 : vector<1x512xi1>
    %145 = arith.ori %139, %144 : vector<1x512xi1>
    %c21_i32 = arith.constant 21 : i32
    %146 = vector.broadcast %c21_i32 : i32 to vector<1x512xi32>
    %147 = arith.cmpi sge, %50, %146 : vector<1x512xi32>
    %c37_i32 = arith.constant 37 : i32
    %148 = vector.broadcast %c37_i32 : i32 to vector<1x512xi32>
    %149 = arith.cmpi slt, %50, %148 : vector<1x512xi32>
    %150 = arith.andi %147, %149 : vector<1x512xi1>
    %c41_i32 = arith.constant 41 : i32
    %151 = vector.broadcast %c41_i32 : i32 to vector<1x512xi32>
    %152 = arith.cmpi sge, %50, %151 : vector<1x512xi32>
    %c57_i32 = arith.constant 57 : i32
    %153 = vector.broadcast %c57_i32 : i32 to vector<1x512xi32>
    %154 = arith.cmpi slt, %50, %153 : vector<1x512xi32>
    %155 = arith.andi %152, %154 : vector<1x512xi1>
    %156 = arith.ori %150, %155 : vector<1x512xi1>
    %c61_i32 = arith.constant 61 : i32
    %157 = vector.broadcast %c61_i32 : i32 to vector<1x512xi32>
    %158 = arith.cmpi sge, %50, %157 : vector<1x512xi32>
    %c77_i32 = arith.constant 77 : i32
    %159 = vector.broadcast %c77_i32 : i32 to vector<1x512xi32>
    %160 = arith.cmpi slt, %50, %159 : vector<1x512xi32>
    %161 = arith.andi %158, %160 : vector<1x512xi1>
    %162 = arith.ori %156, %161 : vector<1x512xi1>
    %c81_i32 = arith.constant 81 : i32
    %163 = vector.broadcast %c81_i32 : i32 to vector<1x512xi32>
    %164 = arith.cmpi sge, %50, %163 : vector<1x512xi32>
    %c97_i32 = arith.constant 97 : i32
    %165 = vector.broadcast %c97_i32 : i32 to vector<1x512xi32>
    %166 = arith.cmpi slt, %50, %165 : vector<1x512xi32>
    %167 = arith.andi %164, %166 : vector<1x512xi1>
    %168 = arith.ori %162, %167 : vector<1x512xi1>
    %c101_i32 = arith.constant 101 : i32
    %169 = vector.broadcast %c101_i32 : i32 to vector<1x512xi32>
    %170 = arith.cmpi sge, %50, %169 : vector<1x512xi32>
    %c117_i32 = arith.constant 117 : i32
    %171 = vector.broadcast %c117_i32 : i32 to vector<1x512xi32>
    %172 = arith.cmpi slt, %50, %171 : vector<1x512xi32>
    %173 = arith.andi %170, %172 : vector<1x512xi1>
    %174 = arith.ori %168, %173 : vector<1x512xi1>
    %c121_i32 = arith.constant 121 : i32
    %175 = vector.broadcast %c121_i32 : i32 to vector<1x512xi32>
    %176 = arith.cmpi sge, %50, %175 : vector<1x512xi32>
    %c137_i32 = arith.constant 137 : i32
    %177 = vector.broadcast %c137_i32 : i32 to vector<1x512xi32>
    %178 = arith.cmpi slt, %50, %177 : vector<1x512xi32>
    %179 = arith.andi %176, %178 : vector<1x512xi1>
    %180 = arith.ori %174, %179 : vector<1x512xi1>
    %c141_i32 = arith.constant 141 : i32
    %181 = vector.broadcast %c141_i32 : i32 to vector<1x512xi32>
    %182 = arith.cmpi sge, %50, %181 : vector<1x512xi32>
    %c157_i32 = arith.constant 157 : i32
    %183 = vector.broadcast %c157_i32 : i32 to vector<1x512xi32>
    %184 = arith.cmpi slt, %50, %183 : vector<1x512xi32>
    %185 = arith.andi %182, %184 : vector<1x512xi1>
    %186 = arith.ori %180, %185 : vector<1x512xi1>
    %c161_i32 = arith.constant 161 : i32
    %187 = vector.broadcast %c161_i32 : i32 to vector<1x512xi32>
    %188 = arith.cmpi sge, %50, %187 : vector<1x512xi32>
    %c177_i32 = arith.constant 177 : i32
    %189 = vector.broadcast %c177_i32 : i32 to vector<1x512xi32>
    %190 = arith.cmpi slt, %50, %189 : vector<1x512xi32>
    %191 = arith.andi %188, %190 : vector<1x512xi1>
    %192 = arith.ori %186, %191 : vector<1x512xi1>
    %c181_i32 = arith.constant 181 : i32
    %193 = vector.broadcast %c181_i32 : i32 to vector<1x512xi32>
    %194 = arith.cmpi sge, %50, %193 : vector<1x512xi32>
    %c197_i32 = arith.constant 197 : i32
    %195 = vector.broadcast %c197_i32 : i32 to vector<1x512xi32>
    %196 = arith.cmpi slt, %50, %195 : vector<1x512xi32>
    %197 = arith.andi %194, %196 : vector<1x512xi1>
    %198 = arith.ori %192, %197 : vector<1x512xi1>
    %c201_i32 = arith.constant 201 : i32
    %199 = vector.broadcast %c201_i32 : i32 to vector<1x512xi32>
    %200 = arith.cmpi sge, %50, %199 : vector<1x512xi32>
    %c217_i32 = arith.constant 217 : i32
    %201 = vector.broadcast %c217_i32 : i32 to vector<1x512xi32>
    %202 = arith.cmpi slt, %50, %201 : vector<1x512xi32>
    %203 = arith.andi %200, %202 : vector<1x512xi1>
    %204 = arith.ori %198, %203 : vector<1x512xi1>
    %c221_i32 = arith.constant 221 : i32
    %205 = vector.broadcast %c221_i32 : i32 to vector<1x512xi32>
    %206 = arith.cmpi sge, %50, %205 : vector<1x512xi32>
    %c237_i32 = arith.constant 237 : i32
    %207 = vector.broadcast %c237_i32 : i32 to vector<1x512xi32>
    %208 = arith.cmpi slt, %50, %207 : vector<1x512xi32>
    %209 = arith.andi %206, %208 : vector<1x512xi1>
    %210 = arith.ori %204, %209 : vector<1x512xi1>
    %c241_i32 = arith.constant 241 : i32
    %211 = vector.broadcast %c241_i32 : i32 to vector<1x512xi32>
    %212 = arith.cmpi sge, %50, %211 : vector<1x512xi32>
    %c257_i32 = arith.constant 257 : i32
    %213 = vector.broadcast %c257_i32 : i32 to vector<1x512xi32>
    %214 = arith.cmpi slt, %50, %213 : vector<1x512xi32>
    %215 = arith.andi %212, %214 : vector<1x512xi1>
    %216 = arith.ori %210, %215 : vector<1x512xi1>
    %c261_i32 = arith.constant 261 : i32
    %217 = vector.broadcast %c261_i32 : i32 to vector<1x512xi32>
    %218 = arith.cmpi sge, %50, %217 : vector<1x512xi32>
    %c277_i32 = arith.constant 277 : i32
    %219 = vector.broadcast %c277_i32 : i32 to vector<1x512xi32>
    %220 = arith.cmpi slt, %50, %219 : vector<1x512xi32>
    %221 = arith.andi %218, %220 : vector<1x512xi1>
    %222 = arith.ori %216, %221 : vector<1x512xi1>
    %c281_i32 = arith.constant 281 : i32
    %223 = vector.broadcast %c281_i32 : i32 to vector<1x512xi32>
    %224 = arith.cmpi sge, %50, %223 : vector<1x512xi32>
    %c297_i32 = arith.constant 297 : i32
    %225 = vector.broadcast %c297_i32 : i32 to vector<1x512xi32>
    %226 = arith.cmpi slt, %50, %225 : vector<1x512xi32>
    %227 = arith.andi %224, %226 : vector<1x512xi1>
    %228 = arith.ori %222, %227 : vector<1x512xi1>
    %c301_i32 = arith.constant 301 : i32
    %229 = vector.broadcast %c301_i32 : i32 to vector<1x512xi32>
    %230 = arith.cmpi sge, %50, %229 : vector<1x512xi32>
    %c317_i32 = arith.constant 317 : i32
    %231 = vector.broadcast %c317_i32 : i32 to vector<1x512xi32>
    %232 = arith.cmpi slt, %50, %231 : vector<1x512xi32>
    %233 = arith.andi %230, %232 : vector<1x512xi1>
    %234 = arith.ori %228, %233 : vector<1x512xi1>
    %c321_i32 = arith.constant 321 : i32
    %235 = vector.broadcast %c321_i32 : i32 to vector<1x512xi32>
    %236 = arith.cmpi sge, %50, %235 : vector<1x512xi32>
    %c337_i32 = arith.constant 337 : i32
    %237 = vector.broadcast %c337_i32 : i32 to vector<1x512xi32>
    %238 = arith.cmpi slt, %50, %237 : vector<1x512xi32>
    %239 = arith.andi %236, %238 : vector<1x512xi1>
    %240 = arith.ori %234, %239 : vector<1x512xi1>
    %c0_50 = arith.constant 0 : index
    %c0_51 = arith.constant 0 : index
    %241 = vector.load %arg9[%c0_50, %c0_51] : memref<4x512xf32, #tpu.memory_space<vmem>>, vector<4x512xf32>
    %242 = arith.truncf %241 : vector<4x512xf32> to vector<4x512xbf16>
    %c0_52 = arith.constant 0 : index
    %c0_53 = arith.constant 0 : index
    %243 = vector.load %arg10[%c0_52, %c0_53] : memref<72x512xbf16, #tpu.memory_space<vmem>>, vector<4x512xbf16>
    tpu.vector_store %arg10[%c0_52, %c0_53], %242 {strides = array<i32>} : memref<72x512xbf16, #tpu.memory_space<vmem>>, vector<4x512xbf16>,
    %c511_i32 = arith.constant 511 : i32
    %244 = tpu.dynamic_rotate %241 by %c511_i32 dim 1 : vector<4x512xf32>, i32 -> vector<4x512xf32>
    %245 = arith.truncf %244 : vector<4x512xf32> to vector<4x512xbf16>
    %c4 = arith.constant 4 : index
    %c0_54 = arith.constant 0 : index
    %246 = vector.load %arg10[%c4, %c0_54] : memref<72x512xbf16, #tpu.memory_space<vmem>>, vector<4x512xbf16>
    tpu.vector_store %arg10[%c4, %c0_54], %245 {strides = array<i32>} : memref<72x512xbf16, #tpu.memory_space<vmem>>, vector<4x512xbf16>,
    %c510_i32 = arith.constant 510 : i32
    %247 = tpu.dynamic_rotate %241 by %c510_i32 dim 1 : vector<4x512xf32>, i32 -> vector<4x512xf32>
    %248 = arith.truncf %247 : vector<4x512xf32> to vector<4x512xbf16>
    %c8 = arith.constant 8 : index
    %c0_55 = arith.constant 0 : index
    %249 = vector.load %arg10[%c8, %c0_55] : memref<72x512xbf16, #tpu.memory_space<vmem>>, vector<4x512xbf16>
    tpu.vector_store %arg10[%c8, %c0_55], %248 {strides = array<i32>} : memref<72x512xbf16, #tpu.memory_space<vmem>>, vector<4x512xbf16>,
    %c492_i32 = arith.constant 492 : i32
    %250 = tpu.dynamic_rotate %241 by %c492_i32 dim 1 : vector<4x512xf32>, i32 -> vector<4x512xf32>
    %251 = arith.truncf %250 : vector<4x512xf32> to vector<4x512xbf16>
    %c12 = arith.constant 12 : index
    %c0_56 = arith.constant 0 : index
    %252 = vector.load %arg10[%c12, %c0_56] : memref<72x512xbf16, #tpu.memory_space<vmem>>, vector<4x512xbf16>
    tpu.vector_store %arg10[%c12, %c0_56], %251 {strides = array<i32>} : memref<72x512xbf16, #tpu.memory_space<vmem>>, vector<4x512xbf16>,
    %c491_i32 = arith.constant 491 : i32
    %253 = tpu.dynamic_rotate %241 by %c491_i32 dim 1 : vector<4x512xf32>, i32 -> vector<4x512xf32>
    %254 = arith.truncf %253 : vector<4x512xf32> to vector<4x512xbf16>
    %c16_57 = arith.constant 16 : index
    %c0_58 = arith.constant 0 : index
    %255 = vector.load %arg10[%c16_57, %c0_58] : memref<72x512xbf16, #tpu.memory_space<vmem>>, vector<4x512xbf16>
    tpu.vector_store %arg10[%c16_57, %c0_58], %254 {strides = array<i32>} : memref<72x512xbf16, #tpu.memory_space<vmem>>, vector<4x512xbf16>,
    %c490_i32 = arith.constant 490 : i32
    %256 = tpu.dynamic_rotate %241 by %c490_i32 dim 1 : vector<4x512xf32>, i32 -> vector<4x512xf32>
    %257 = arith.truncf %256 : vector<4x512xf32> to vector<4x512xbf16>
    %c20 = arith.constant 20 : index
    %c0_59 = arith.constant 0 : index
    %258 = vector.load %arg10[%c20, %c0_59] : memref<72x512xbf16, #tpu.memory_space<vmem>>, vector<4x512xbf16>
    tpu.vector_store %arg10[%c20, %c0_59], %257 {strides = array<i32>} : memref<72x512xbf16, #tpu.memory_space<vmem>>, vector<4x512xbf16>,
    %c472_i32 = arith.constant 472 : i32
    %259 = tpu.dynamic_rotate %241 by %c472_i32 dim 1 : vector<4x512xf32>, i32 -> vector<4x512xf32>
    %260 = arith.truncf %259 : vector<4x512xf32> to vector<4x512xbf16>
    %c24 = arith.constant 24 : index
    %c0_60 = arith.constant 0 : index
    %261 = vector.load %arg10[%c24, %c0_60] : memref<72x512xbf16, #tpu.memory_space<vmem>>, vector<4x512xbf16>
    tpu.vector_store %arg10[%c24, %c0_60], %260 {strides = array<i32>} : memref<72x512xbf16, #tpu.memory_space<vmem>>, vector<4x512xbf16>,
    %c471_i32 = arith.constant 471 : i32
    %262 = tpu.dynamic_rotate %241 by %c471_i32 dim 1 : vector<4x512xf32>, i32 -> vector<4x512xf32>
    %263 = arith.truncf %262 : vector<4x512xf32> to vector<4x512xbf16>
    %c28 = arith.constant 28 : index
    %c0_61 = arith.constant 0 : index
    %264 = vector.load %arg10[%c28, %c0_61] : memref<72x512xbf16, #tpu.memory_space<vmem>>, vector<4x512xbf16>
    tpu.vector_store %arg10[%c28, %c0_61], %263 {strides = array<i32>} : memref<72x512xbf16, #tpu.memory_space<vmem>>, vector<4x512xbf16>,
    %c470_i32 = arith.constant 470 : i32
    %265 = tpu.dynamic_rotate %241 by %c470_i32 dim 1 : vector<4x512xf32>, i32 -> vector<4x512xf32>
    %266 = arith.truncf %265 : vector<4x512xf32> to vector<4x512xbf16>
    %c32_62 = arith.constant 32 : index
    %c0_63 = arith.constant 0 : index
    %267 = vector.load %arg10[%c32_62, %c0_63] : memref<72x512xbf16, #tpu.memory_space<vmem>>, vector<4x512xbf16>
    tpu.vector_store %arg10[%c32_62, %c0_63], %266 {strides = array<i32>} : memref<72x512xbf16, #tpu.memory_space<vmem>>, vector<4x512xbf16>,
    %c0_64 = arith.constant 0 : index
    %c0_65 = arith.constant 0 : index
    %268 = vector.load %arg2[%c0_64, %c0_65] : memref<8x36xbf16, #tpu.memory_space<vmem>>, vector<8x36xbf16>
    %c0_66 = arith.constant 0 : index
    %c0_67 = arith.constant 0 : index
    %269 = vector.load %arg10[%c0_66, %c0_67] : memref<72x512xbf16, #tpu.memory_space<vmem>>, vector<36x512xbf16>
    %cst_68 = arith.constant dense<0.000000e+00> : vector<8x512xf32>
    %270 = tpu.matmul %268, %269, %cst_68 {dimension_numbers = #tpu.dot_dimension_numbers<[1], [0], [0], [1], [0, 0, 1, 1], [], []>} : vector<8x36xbf16>, vector<36x512xbf16>, vector<8x512xf32> -> vector<8x512xf32>
    %c0_69 = arith.constant 0 : index
    %c0_70 = arith.constant 0 : index
    %271 = vector.load %arg3[%c0_69, %c0_70] : memref<8x1xf32, #tpu.memory_space<vmem>>, vector<8x1xf32>
    %272 = vector.broadcast %271 : vector<8x1xf32> to vector<8x512xf32>
    %273 = arith.addf %270, %272 : vector<8x512xf32>
    %cst_71 = arith.constant 0.000000e+00 : f32
    %274 = vector.broadcast %cst_71 : f32 to vector<8x512xf32>
    %275 = arith.maximumf %273, %274 : vector<8x512xf32>
    %cst_72 = arith.constant 0.000000e+00 : f32
    %276 = vector.shape_cast %145 : vector<1x512xi1> to vector<1x512xi1>
    %277 = vector.broadcast %276 : vector<1x512xi1> to vector<8x512xi1>
    %278 = vector.broadcast %cst_72 : f32 to vector<8x512xf32>
    %279 = arith.select %277, %275, %278 : vector<8x512xi1>, vector<8x512xf32>
    %280 = arith.truncf %279 : vector<8x512xf32> to vector<8x512xbf16>
    %c0_73 = arith.constant 0 : index
    %c0_74 = arith.constant 0 : index
    %281 = vector.load %arg10[%c0_73, %c0_74] : memref<72x512xbf16, #tpu.memory_space<vmem>>, vector<8x512xbf16>
    tpu.vector_store %arg10[%c0_73, %c0_74], %280 {strides = array<i32>} : memref<72x512xbf16, #tpu.memory_space<vmem>>, vector<8x512xbf16>,
    %c511_i32_75 = arith.constant 511 : i32
    %282 = tpu.dynamic_rotate %279 by %c511_i32_75 dim 1 : vector<8x512xf32>, i32 -> vector<8x512xf32>
    %283 = arith.truncf %282 : vector<8x512xf32> to vector<8x512xbf16>
    %c8_76 = arith.constant 8 : index
    %c0_77 = arith.constant 0 : index
    %284 = vector.load %arg10[%c8_76, %c0_77] : memref<72x512xbf16, #tpu.memory_space<vmem>>, vector<8x512xbf16>
    tpu.vector_store %arg10[%c8_76, %c0_77], %283 {strides = array<i32>} : memref<72x512xbf16, #tpu.memory_space<vmem>>, vector<8x512xbf16>,
    %c510_i32_78 = arith.constant 510 : i32
    %285 = tpu.dynamic_rotate %279 by %c510_i32_78 dim 1 : vector<8x512xf32>, i32 -> vector<8x512xf32>
    %286 = arith.truncf %285 : vector<8x512xf32> to vector<8x512xbf16>
    %c16_79 = arith.constant 16 : index
    %c0_80 = arith.constant 0 : index
    %287 = vector.load %arg10[%c16_79, %c0_80] : memref<72x512xbf16, #tpu.memory_space<vmem>>, vector<8x512xbf16>
    tpu.vector_store %arg10[%c16_79, %c0_80], %286 {strides = array<i32>} : memref<72x512xbf16, #tpu.memory_space<vmem>>, vector<8x512xbf16>,
    %c492_i32_81 = arith.constant 492 : i32
    %288 = tpu.dynamic_rotate %279 by %c492_i32_81 dim 1 : vector<8x512xf32>, i32 -> vector<8x512xf32>
    %289 = arith.truncf %288 : vector<8x512xf32> to vector<8x512xbf16>
    %c24_82 = arith.constant 24 : index
    %c0_83 = arith.constant 0 : index
    %290 = vector.load %arg10[%c24_82, %c0_83] : memref<72x512xbf16, #tpu.memory_space<vmem>>, vector<8x512xbf16>
    tpu.vector_store %arg10[%c24_82, %c0_83], %289 {strides = array<i32>} : memref<72x512xbf16, #tpu.memory_space<vmem>>, vector<8x512xbf16>,
    %c491_i32_84 = arith.constant 491 : i32
    %291 = tpu.dynamic_rotate %279 by %c491_i32_84 dim 1 : vector<8x512xf32>, i32 -> vector<8x512xf32>
    %292 = arith.truncf %291 : vector<8x512xf32> to vector<8x512xbf16>
    %c32_85 = arith.constant 32 : index
    %c0_86 = arith.constant 0 : index
    %293 = vector.load %arg10[%c32_85, %c0_86] : memref<72x512xbf16, #tpu.memory_space<vmem>>, vector<8x512xbf16>
    tpu.vector_store %arg10[%c32_85, %c0_86], %292 {strides = array<i32>} : memref<72x512xbf16, #tpu.memory_space<vmem>>, vector<8x512xbf16>,
    %c490_i32_87 = arith.constant 490 : i32
    %294 = tpu.dynamic_rotate %279 by %c490_i32_87 dim 1 : vector<8x512xf32>, i32 -> vector<8x512xf32>
    %295 = arith.truncf %294 : vector<8x512xf32> to vector<8x512xbf16>
    %c40 = arith.constant 40 : index
    %c0_88 = arith.constant 0 : index
    %296 = vector.load %arg10[%c40, %c0_88] : memref<72x512xbf16, #tpu.memory_space<vmem>>, vector<8x512xbf16>
    tpu.vector_store %arg10[%c40, %c0_88], %295 {strides = array<i32>} : memref<72x512xbf16, #tpu.memory_space<vmem>>, vector<8x512xbf16>,
    %c472_i32_89 = arith.constant 472 : i32
    %297 = tpu.dynamic_rotate %279 by %c472_i32_89 dim 1 : vector<8x512xf32>, i32 -> vector<8x512xf32>
    %298 = arith.truncf %297 : vector<8x512xf32> to vector<8x512xbf16>
    %c48_90 = arith.constant 48 : index
    %c0_91 = arith.constant 0 : index
    %299 = vector.load %arg10[%c48_90, %c0_91] : memref<72x512xbf16, #tpu.memory_space<vmem>>, vector<8x512xbf16>
    tpu.vector_store %arg10[%c48_90, %c0_91], %298 {strides = array<i32>} : memref<72x512xbf16, #tpu.memory_space<vmem>>, vector<8x512xbf16>,
    %c471_i32_92 = arith.constant 471 : i32
    %300 = tpu.dynamic_rotate %279 by %c471_i32_92 dim 1 : vector<8x512xf32>, i32 -> vector<8x512xf32>
    %301 = arith.truncf %300 : vector<8x512xf32> to vector<8x512xbf16>
    %c56 = arith.constant 56 : index
    %c0_93 = arith.constant 0 : index
    %302 = vector.load %arg10[%c56, %c0_93] : memref<72x512xbf16, #tpu.memory_space<vmem>>, vector<8x512xbf16>
    tpu.vector_store %arg10[%c56, %c0_93], %301 {strides = array<i32>} : memref<72x512xbf16, #tpu.memory_space<vmem>>, vector<8x512xbf16>,
    %c470_i32_94 = arith.constant 470 : i32
    %303 = tpu.dynamic_rotate %279 by %c470_i32_94 dim 1 : vector<8x512xf32>, i32 -> vector<8x512xf32>
    %304 = arith.truncf %303 : vector<8x512xf32> to vector<8x512xbf16>
    %c64_95 = arith.constant 64 : index
    %c0_96 = arith.constant 0 : index
    %305 = vector.load %arg10[%c64_95, %c0_96] : memref<72x512xbf16, #tpu.memory_space<vmem>>, vector<8x512xbf16>
    tpu.vector_store %arg10[%c64_95, %c0_96], %304 {strides = array<i32>} : memref<72x512xbf16, #tpu.memory_space<vmem>>, vector<8x512xbf16>,
    %c0_97 = arith.constant 0 : index
    %c0_98 = arith.constant 0 : index
    %306 = vector.load %arg4[%c0_97, %c0_98] : memref<8x72xbf16, #tpu.memory_space<vmem>>, vector<8x72xbf16>
    %c0_99 = arith.constant 0 : index
    %c0_100 = arith.constant 0 : index
    %307 = vector.load %arg10[%c0_99, %c0_100] : memref<72x512xbf16, #tpu.memory_space<vmem>>, vector<72x512xbf16>
    %cst_101 = arith.constant dense<0.000000e+00> : vector<8x512xf32>
    %308 = tpu.matmul %306, %307, %cst_101 {dimension_numbers = #tpu.dot_dimension_numbers<[1], [0], [0], [1], [0, 0, 1, 1], [], []>} : vector<8x72xbf16>, vector<72x512xbf16>, vector<8x512xf32> -> vector<8x512xf32>
    %c0_102 = arith.constant 0 : index
    %c0_103 = arith.constant 0 : index
    %309 = vector.load %arg5[%c0_102, %c0_103] : memref<8x1xf32, #tpu.memory_space<vmem>>, vector<8x1xf32>
    %310 = vector.broadcast %309 : vector<8x1xf32> to vector<8x512xf32>
    %311 = arith.addf %308, %310 : vector<8x512xf32>
    %cst_104 = arith.constant 0.000000e+00 : f32
    %312 = vector.broadcast %cst_104 : f32 to vector<8x512xf32>
    %313 = arith.maximumf %311, %312 : vector<8x512xf32>
    %cst_105 = arith.constant 0.000000e+00 : f32
    %314 = vector.shape_cast %240 : vector<1x512xi1> to vector<1x512xi1>
    %315 = vector.broadcast %314 : vector<1x512xi1> to vector<8x512xi1>
    %316 = vector.broadcast %cst_105 : f32 to vector<8x512xf32>
    %317 = arith.select %315, %313, %316 : vector<8x512xi1>, vector<8x512xf32>
    %318 = arith.truncf %317 : vector<8x512xf32> to vector<8x512xbf16>
    %c0_106 = arith.constant 0 : index
    %c0_107 = arith.constant 0 : index
    %319 = vector.load %arg10[%c0_106, %c0_107] : memref<72x512xbf16, #tpu.memory_space<vmem>>, vector<8x512xbf16>
    tpu.vector_store %arg10[%c0_106, %c0_107], %318 {strides = array<i32>} : memref<72x512xbf16, #tpu.memory_space<vmem>>, vector<8x512xbf16>,
    %c511_i32_108 = arith.constant 511 : i32
    %320 = tpu.dynamic_rotate %317 by %c511_i32_108 dim 1 : vector<8x512xf32>, i32 -> vector<8x512xf32>
    %321 = arith.truncf %320 : vector<8x512xf32> to vector<8x512xbf16>
    %c8_109 = arith.constant 8 : index
    %c0_110 = arith.constant 0 : index
    %322 = vector.load %arg10[%c8_109, %c0_110] : memref<72x512xbf16, #tpu.memory_space<vmem>>, vector<8x512xbf16>
    tpu.vector_store %arg10[%c8_109, %c0_110], %321 {strides = array<i32>} : memref<72x512xbf16, #tpu.memory_space<vmem>>, vector<8x512xbf16>,
    %c510_i32_111 = arith.constant 510 : i32
    %323 = tpu.dynamic_rotate %317 by %c510_i32_111 dim 1 : vector<8x512xf32>, i32 -> vector<8x512xf32>
    %324 = arith.truncf %323 : vector<8x512xf32> to vector<8x512xbf16>
    %c16_112 = arith.constant 16 : index
    %c0_113 = arith.constant 0 : index
    %325 = vector.load %arg10[%c16_112, %c0_113] : memref<72x512xbf16, #tpu.memory_space<vmem>>, vector<8x512xbf16>
    tpu.vector_store %arg10[%c16_112, %c0_113], %324 {strides = array<i32>} : memref<72x512xbf16, #tpu.memory_space<vmem>>, vector<8x512xbf16>,
    %c492_i32_114 = arith.constant 492 : i32
    %326 = tpu.dynamic_rotate %317 by %c492_i32_114 dim 1 : vector<8x512xf32>, i32 -> vector<8x512xf32>
    %327 = arith.truncf %326 : vector<8x512xf32> to vector<8x512xbf16>
    %c24_115 = arith.constant 24 : index
    %c0_116 = arith.constant 0 : index
    %328 = vector.load %arg10[%c24_115, %c0_116] : memref<72x512xbf16, #tpu.memory_space<vmem>>, vector<8x512xbf16>
    tpu.vector_store %arg10[%c24_115, %c0_116], %327 {strides = array<i32>} : memref<72x512xbf16, #tpu.memory_space<vmem>>, vector<8x512xbf16>,
    %c491_i32_117 = arith.constant 491 : i32
    %329 = tpu.dynamic_rotate %317 by %c491_i32_117 dim 1 : vector<8x512xf32>, i32 -> vector<8x512xf32>
    %330 = arith.truncf %329 : vector<8x512xf32> to vector<8x512xbf16>
    %c32_118 = arith.constant 32 : index
    %c0_119 = arith.constant 0 : index
    %331 = vector.load %arg10[%c32_118, %c0_119] : memref<72x512xbf16, #tpu.memory_space<vmem>>, vector<8x512xbf16>
    tpu.vector_store %arg10[%c32_118, %c0_119], %330 {strides = array<i32>} : memref<72x512xbf16, #tpu.memory_space<vmem>>, vector<8x512xbf16>,
    %c490_i32_120 = arith.constant 490 : i32
    %332 = tpu.dynamic_rotate %317 by %c490_i32_120 dim 1 : vector<8x512xf32>, i32 -> vector<8x512xf32>
    %333 = arith.truncf %332 : vector<8x512xf32> to vector<8x512xbf16>
    %c40_121 = arith.constant 40 : index
    %c0_122 = arith.constant 0 : index
    %334 = vector.load %arg10[%c40_121, %c0_122] : memref<72x512xbf16, #tpu.memory_space<vmem>>, vector<8x512xbf16>
    tpu.vector_store %arg10[%c40_121, %c0_122], %333 {strides = array<i32>} : memref<72x512xbf16, #tpu.memory_space<vmem>>, vector<8x512xbf16>,
    %c472_i32_123 = arith.constant 472 : i32
    %335 = tpu.dynamic_rotate %317 by %c472_i32_123 dim 1 : vector<8x512xf32>, i32 -> vector<8x512xf32>
    %336 = arith.truncf %335 : vector<8x512xf32> to vector<8x512xbf16>
    %c48_124 = arith.constant 48 : index
    %c0_125 = arith.constant 0 : index
    %337 = vector.load %arg10[%c48_124, %c0_125] : memref<72x512xbf16, #tpu.memory_space<vmem>>, vector<8x512xbf16>
    tpu.vector_store %arg10[%c48_124, %c0_125], %336 {strides = array<i32>} : memref<72x512xbf16, #tpu.memory_space<vmem>>, vector<8x512xbf16>,
    %c471_i32_126 = arith.constant 471 : i32
    %338 = tpu.dynamic_rotate %317 by %c471_i32_126 dim 1 : vector<8x512xf32>, i32 -> vector<8x512xf32>
    %339 = arith.truncf %338 : vector<8x512xf32> to vector<8x512xbf16>
    %c56_127 = arith.constant 56 : index
    %c0_128 = arith.constant 0 : index
    %340 = vector.load %arg10[%c56_127, %c0_128] : memref<72x512xbf16, #tpu.memory_space<vmem>>, vector<8x512xbf16>
    tpu.vector_store %arg10[%c56_127, %c0_128], %339 {strides = array<i32>} : memref<72x512xbf16, #tpu.memory_space<vmem>>, vector<8x512xbf16>,
    %c470_i32_129 = arith.constant 470 : i32
    %341 = tpu.dynamic_rotate %317 by %c470_i32_129 dim 1 : vector<8x512xf32>, i32 -> vector<8x512xf32>
    %342 = arith.truncf %341 : vector<8x512xf32> to vector<8x512xbf16>
    %c64_130 = arith.constant 64 : index
    %c0_131 = arith.constant 0 : index
    %343 = vector.load %arg10[%c64_130, %c0_131] : memref<72x512xbf16, #tpu.memory_space<vmem>>, vector<8x512xbf16>
    tpu.vector_store %arg10[%c64_130, %c0_131], %342 {strides = array<i32>} : memref<72x512xbf16, #tpu.memory_space<vmem>>, vector<8x512xbf16>,
    %c0_132 = arith.constant 0 : index
    %c0_133 = arith.constant 0 : index
    %344 = vector.load %arg6[%c0_132, %c0_133] : memref<4x72xbf16, #tpu.memory_space<vmem>>, vector<4x72xbf16>
    %c0_134 = arith.constant 0 : index
    %c0_135 = arith.constant 0 : index
    %345 = vector.load %arg10[%c0_134, %c0_135] : memref<72x512xbf16, #tpu.memory_space<vmem>>, vector<72x512xbf16>
    %cst_136 = arith.constant dense<0.000000e+00> : vector<4x512xf32>
    %346 = tpu.matmul %344, %345, %cst_136 {dimension_numbers = #tpu.dot_dimension_numbers<[1], [0], [0], [1], [0, 0, 1, 1], [], []>} : vector<4x72xbf16>, vector<72x512xbf16>, vector<4x512xf32> -> vector<4x512xf32>
    %c0_137 = arith.constant 0 : index
    %c0_138 = arith.constant 0 : index
    %347 = vector.load %arg7[%c0_137, %c0_138] : memref<4x1xf32, #tpu.memory_space<vmem>>, vector<4x1xf32>
    %348 = vector.broadcast %347 : vector<4x1xf32> to vector<4x512xf32>
    %349 = arith.addf %346, %348 : vector<4x512xf32>
    %350 = math.tanh %349 : vector<4x512xf32>
    %351 = vector.extract_strided_slice %350 {offsets = [0, 0], sizes = [4, 16], strides = [1, 1]} : vector<4x512xf32> to vector<4x16xf32>
    %c0_139 = arith.constant 0 : index
    %c0_140 = arith.constant 0 : index
    %c0_141 = arith.constant 0 : index
    %352 = vector.load %arg8[%c0_139, %c0_140, %c0_141] : memref<1x4x256xf32, #tpu.memory_space<vmem>>, vector<1x4x16xf32>
    %353 = vector.shape_cast %352 : vector<1x4x16xf32> to vector<4x16xf32>
    %354 = vector.shape_cast %351 : vector<4x16xf32> to vector<1x4x16xf32>
    tpu.vector_store %arg8[%c0_139, %c0_140, %c0_141], %354 {strides = array<i32>} : memref<1x4x256xf32, #tpu.memory_space<vmem>>, vector<1x4x16xf32>,
    %355 = vector.extract_strided_slice %350 {offsets = [0, 20], sizes = [4, 16], strides = [1, 1]} : vector<4x512xf32> to vector<4x16xf32>
    %c0_142 = arith.constant 0 : index
    %c0_143 = arith.constant 0 : index
    %c16_144 = arith.constant 16 : index
    %356 = vector.load %arg8[%c0_142, %c0_143, %c16_144] : memref<1x4x256xf32, #tpu.memory_space<vmem>>, vector<1x4x16xf32>
    %357 = vector.shape_cast %356 : vector<1x4x16xf32> to vector<4x16xf32>
    %358 = vector.shape_cast %355 : vector<4x16xf32> to vector<1x4x16xf32>
    tpu.vector_store %arg8[%c0_142, %c0_143, %c16_144], %358 {strides = array<i32>} : memref<1x4x256xf32, #tpu.memory_space<vmem>>, vector<1x4x16xf32>,
    %359 = vector.extract_strided_slice %350 {offsets = [0, 40], sizes = [4, 16], strides = [1, 1]} : vector<4x512xf32> to vector<4x16xf32>
    %c0_145 = arith.constant 0 : index
    %c0_146 = arith.constant 0 : index
    %c32_147 = arith.constant 32 : index
    %360 = vector.load %arg8[%c0_145, %c0_146, %c32_147] : memref<1x4x256xf32, #tpu.memory_space<vmem>>, vector<1x4x16xf32>
    %361 = vector.shape_cast %360 : vector<1x4x16xf32> to vector<4x16xf32>
    %362 = vector.shape_cast %359 : vector<4x16xf32> to vector<1x4x16xf32>
    tpu.vector_store %arg8[%c0_145, %c0_146, %c32_147], %362 {strides = array<i32>} : memref<1x4x256xf32, #tpu.memory_space<vmem>>, vector<1x4x16xf32>,
    %363 = vector.extract_strided_slice %350 {offsets = [0, 60], sizes = [4, 16], strides = [1, 1]} : vector<4x512xf32> to vector<4x16xf32>
    %c0_148 = arith.constant 0 : index
    %c0_149 = arith.constant 0 : index
    %c48_150 = arith.constant 48 : index
    %364 = vector.load %arg8[%c0_148, %c0_149, %c48_150] : memref<1x4x256xf32, #tpu.memory_space<vmem>>, vector<1x4x16xf32>
    %365 = vector.shape_cast %364 : vector<1x4x16xf32> to vector<4x16xf32>
    %366 = vector.shape_cast %363 : vector<4x16xf32> to vector<1x4x16xf32>
    tpu.vector_store %arg8[%c0_148, %c0_149, %c48_150], %366 {strides = array<i32>} : memref<1x4x256xf32, #tpu.memory_space<vmem>>, vector<1x4x16xf32>,
    %367 = vector.extract_strided_slice %350 {offsets = [0, 80], sizes = [4, 16], strides = [1, 1]} : vector<4x512xf32> to vector<4x16xf32>
    %c0_151 = arith.constant 0 : index
    %c0_152 = arith.constant 0 : index
    %c64_153 = arith.constant 64 : index
    %368 = vector.load %arg8[%c0_151, %c0_152, %c64_153] : memref<1x4x256xf32, #tpu.memory_space<vmem>>, vector<1x4x16xf32>
    %369 = vector.shape_cast %368 : vector<1x4x16xf32> to vector<4x16xf32>
    %370 = vector.shape_cast %367 : vector<4x16xf32> to vector<1x4x16xf32>
    tpu.vector_store %arg8[%c0_151, %c0_152, %c64_153], %370 {strides = array<i32>} : memref<1x4x256xf32, #tpu.memory_space<vmem>>, vector<1x4x16xf32>,
    %371 = vector.extract_strided_slice %350 {offsets = [0, 100], sizes = [4, 16], strides = [1, 1]} : vector<4x512xf32> to vector<4x16xf32>
    %c0_154 = arith.constant 0 : index
    %c0_155 = arith.constant 0 : index
    %c80_156 = arith.constant 80 : index
    %372 = vector.load %arg8[%c0_154, %c0_155, %c80_156] : memref<1x4x256xf32, #tpu.memory_space<vmem>>, vector<1x4x16xf32>
    %373 = vector.shape_cast %372 : vector<1x4x16xf32> to vector<4x16xf32>
    %374 = vector.shape_cast %371 : vector<4x16xf32> to vector<1x4x16xf32>
    tpu.vector_store %arg8[%c0_154, %c0_155, %c80_156], %374 {strides = array<i32>} : memref<1x4x256xf32, #tpu.memory_space<vmem>>, vector<1x4x16xf32>,
    %375 = vector.extract_strided_slice %350 {offsets = [0, 120], sizes = [4, 16], strides = [1, 1]} : vector<4x512xf32> to vector<4x16xf32>
    %c0_157 = arith.constant 0 : index
    %c0_158 = arith.constant 0 : index
    %c96_159 = arith.constant 96 : index
    %376 = vector.load %arg8[%c0_157, %c0_158, %c96_159] : memref<1x4x256xf32, #tpu.memory_space<vmem>>, vector<1x4x16xf32>
    %377 = vector.shape_cast %376 : vector<1x4x16xf32> to vector<4x16xf32>
    %378 = vector.shape_cast %375 : vector<4x16xf32> to vector<1x4x16xf32>
    tpu.vector_store %arg8[%c0_157, %c0_158, %c96_159], %378 {strides = array<i32>} : memref<1x4x256xf32, #tpu.memory_space<vmem>>, vector<1x4x16xf32>,
    %379 = vector.extract_strided_slice %350 {offsets = [0, 140], sizes = [4, 16], strides = [1, 1]} : vector<4x512xf32> to vector<4x16xf32>
    %c0_160 = arith.constant 0 : index
    %c0_161 = arith.constant 0 : index
    %c112_162 = arith.constant 112 : index
    %380 = vector.load %arg8[%c0_160, %c0_161, %c112_162] : memref<1x4x256xf32, #tpu.memory_space<vmem>>, vector<1x4x16xf32>
    %381 = vector.shape_cast %380 : vector<1x4x16xf32> to vector<4x16xf32>
    %382 = vector.shape_cast %379 : vector<4x16xf32> to vector<1x4x16xf32>
    tpu.vector_store %arg8[%c0_160, %c0_161, %c112_162], %382 {strides = array<i32>} : memref<1x4x256xf32, #tpu.memory_space<vmem>>, vector<1x4x16xf32>,
    %383 = vector.extract_strided_slice %350 {offsets = [0, 160], sizes = [4, 16], strides = [1, 1]} : vector<4x512xf32> to vector<4x16xf32>
    %c0_163 = arith.constant 0 : index
    %c0_164 = arith.constant 0 : index
    %c128_165 = arith.constant 128 : index
    %384 = vector.load %arg8[%c0_163, %c0_164, %c128_165] : memref<1x4x256xf32, #tpu.memory_space<vmem>>, vector<1x4x16xf32>
    %385 = vector.shape_cast %384 : vector<1x4x16xf32> to vector<4x16xf32>
    %386 = vector.shape_cast %383 : vector<4x16xf32> to vector<1x4x16xf32>
    tpu.vector_store %arg8[%c0_163, %c0_164, %c128_165], %386 {strides = array<i32>} : memref<1x4x256xf32, #tpu.memory_space<vmem>>, vector<1x4x16xf32>,
    %387 = vector.extract_strided_slice %350 {offsets = [0, 180], sizes = [4, 16], strides = [1, 1]} : vector<4x512xf32> to vector<4x16xf32>
    %c0_166 = arith.constant 0 : index
    %c0_167 = arith.constant 0 : index
    %c144_168 = arith.constant 144 : index
    %388 = vector.load %arg8[%c0_166, %c0_167, %c144_168] : memref<1x4x256xf32, #tpu.memory_space<vmem>>, vector<1x4x16xf32>
    %389 = vector.shape_cast %388 : vector<1x4x16xf32> to vector<4x16xf32>
    %390 = vector.shape_cast %387 : vector<4x16xf32> to vector<1x4x16xf32>
    tpu.vector_store %arg8[%c0_166, %c0_167, %c144_168], %390 {strides = array<i32>} : memref<1x4x256xf32, #tpu.memory_space<vmem>>, vector<1x4x16xf32>,
    %391 = vector.extract_strided_slice %350 {offsets = [0, 200], sizes = [4, 16], strides = [1, 1]} : vector<4x512xf32> to vector<4x16xf32>
    %c0_169 = arith.constant 0 : index
    %c0_170 = arith.constant 0 : index
    %c160_171 = arith.constant 160 : index
    %392 = vector.load %arg8[%c0_169, %c0_170, %c160_171] : memref<1x4x256xf32, #tpu.memory_space<vmem>>, vector<1x4x16xf32>
    %393 = vector.shape_cast %392 : vector<1x4x16xf32> to vector<4x16xf32>
    %394 = vector.shape_cast %391 : vector<4x16xf32> to vector<1x4x16xf32>
    tpu.vector_store %arg8[%c0_169, %c0_170, %c160_171], %394 {strides = array<i32>} : memref<1x4x256xf32, #tpu.memory_space<vmem>>, vector<1x4x16xf32>,
    %395 = vector.extract_strided_slice %350 {offsets = [0, 220], sizes = [4, 16], strides = [1, 1]} : vector<4x512xf32> to vector<4x16xf32>
    %c0_172 = arith.constant 0 : index
    %c0_173 = arith.constant 0 : index
    %c176_174 = arith.constant 176 : index
    %396 = vector.load %arg8[%c0_172, %c0_173, %c176_174] : memref<1x4x256xf32, #tpu.memory_space<vmem>>, vector<1x4x16xf32>
    %397 = vector.shape_cast %396 : vector<1x4x16xf32> to vector<4x16xf32>
    %398 = vector.shape_cast %395 : vector<4x16xf32> to vector<1x4x16xf32>
    tpu.vector_store %arg8[%c0_172, %c0_173, %c176_174], %398 {strides = array<i32>} : memref<1x4x256xf32, #tpu.memory_space<vmem>>, vector<1x4x16xf32>,
    %399 = vector.extract_strided_slice %350 {offsets = [0, 240], sizes = [4, 16], strides = [1, 1]} : vector<4x512xf32> to vector<4x16xf32>
    %c0_175 = arith.constant 0 : index
    %c0_176 = arith.constant 0 : index
    %c192_177 = arith.constant 192 : index
    %400 = vector.load %arg8[%c0_175, %c0_176, %c192_177] : memref<1x4x256xf32, #tpu.memory_space<vmem>>, vector<1x4x16xf32>
    %401 = vector.shape_cast %400 : vector<1x4x16xf32> to vector<4x16xf32>
    %402 = vector.shape_cast %399 : vector<4x16xf32> to vector<1x4x16xf32>
    tpu.vector_store %arg8[%c0_175, %c0_176, %c192_177], %402 {strides = array<i32>} : memref<1x4x256xf32, #tpu.memory_space<vmem>>, vector<1x4x16xf32>,
    %403 = vector.extract_strided_slice %350 {offsets = [0, 260], sizes = [4, 16], strides = [1, 1]} : vector<4x512xf32> to vector<4x16xf32>
    %c0_178 = arith.constant 0 : index
    %c0_179 = arith.constant 0 : index
    %c208_180 = arith.constant 208 : index
    %404 = vector.load %arg8[%c0_178, %c0_179, %c208_180] : memref<1x4x256xf32, #tpu.memory_space<vmem>>, vector<1x4x16xf32>
    %405 = vector.shape_cast %404 : vector<1x4x16xf32> to vector<4x16xf32>
    %406 = vector.shape_cast %403 : vector<4x16xf32> to vector<1x4x16xf32>
    tpu.vector_store %arg8[%c0_178, %c0_179, %c208_180], %406 {strides = array<i32>} : memref<1x4x256xf32, #tpu.memory_space<vmem>>, vector<1x4x16xf32>,
    %407 = vector.extract_strided_slice %350 {offsets = [0, 280], sizes = [4, 16], strides = [1, 1]} : vector<4x512xf32> to vector<4x16xf32>
    %c0_181 = arith.constant 0 : index
    %c0_182 = arith.constant 0 : index
    %c224_183 = arith.constant 224 : index
    %408 = vector.load %arg8[%c0_181, %c0_182, %c224_183] : memref<1x4x256xf32, #tpu.memory_space<vmem>>, vector<1x4x16xf32>
    %409 = vector.shape_cast %408 : vector<1x4x16xf32> to vector<4x16xf32>
    %410 = vector.shape_cast %407 : vector<4x16xf32> to vector<1x4x16xf32>
    tpu.vector_store %arg8[%c0_181, %c0_182, %c224_183], %410 {strides = array<i32>} : memref<1x4x256xf32, #tpu.memory_space<vmem>>, vector<1x4x16xf32>,
    %411 = vector.extract_strided_slice %350 {offsets = [0, 300], sizes = [4, 16], strides = [1, 1]} : vector<4x512xf32> to vector<4x16xf32>
    %c0_184 = arith.constant 0 : index
    %c0_185 = arith.constant 0 : index
    %c240_186 = arith.constant 240 : index
    %412 = vector.load %arg8[%c0_184, %c0_185, %c240_186] : memref<1x4x256xf32, #tpu.memory_space<vmem>>, vector<1x4x16xf32>
    %413 = vector.shape_cast %412 : vector<1x4x16xf32> to vector<4x16xf32>
    %414 = vector.shape_cast %411 : vector<4x16xf32> to vector<1x4x16xf32>
    tpu.vector_store %arg8[%c0_184, %c0_185, %c240_186], %414 {strides = array<i32>} : memref<1x4x256xf32, #tpu.memory_space<vmem>>, vector<1x4x16xf32>,
    return
  }
  func.func @transform_0(%arg0: i32) -> (i32, i32, i32) {
    %c0_i32 = arith.constant 0 : i32
    %c0_i32_0 = arith.constant 0 : i32
    %c0_i32_1 = arith.constant 0 : i32
    return %arg0, %c0_i32, %c0_i32_0 : i32, i32, i32
  }
  func.func @transform_1(%arg0: i32) -> (i32, i32) {
    %c0_i32 = arith.constant 0 : i32
    %c0_i32_0 = arith.constant 0 : i32
    %c0_i32_1 = arith.constant 0 : i32
    return %c0_i32, %c0_i32_0 : i32, i32
  }
  func.func @transform_2(%arg0: i32) -> (i32, i32) {
    %c0_i32 = arith.constant 0 : i32
    %c0_i32_0 = arith.constant 0 : i32
    %c0_i32_1 = arith.constant 0 : i32
    return %c0_i32, %c0_i32_0 : i32, i32
  }
  func.func @transform_3(%arg0: i32) -> (i32, i32) {
    %c0_i32 = arith.constant 0 : i32
    %c0_i32_0 = arith.constant 0 : i32
    %c0_i32_1 = arith.constant 0 : i32
    return %c0_i32, %c0_i32_0 : i32, i32
  }
  func.func @transform_4(%arg0: i32) -> (i32, i32) {
    %c0_i32 = arith.constant 0 : i32
    %c0_i32_0 = arith.constant 0 : i32
    %c0_i32_1 = arith.constant 0 : i32
    return %c0_i32, %c0_i32_0 : i32, i32
  }
  func.func @transform_5(%arg0: i32) -> (i32, i32) {
    %c0_i32 = arith.constant 0 : i32
    %c0_i32_0 = arith.constant 0 : i32
    %c0_i32_1 = arith.constant 0 : i32
    return %c0_i32, %c0_i32_0 : i32, i32
  }
  func.func @transform_6(%arg0: i32) -> (i32, i32) {
    %c0_i32 = arith.constant 0 : i32
    %c0_i32_0 = arith.constant 0 : i32
    %c0_i32_1 = arith.constant 0 : i32
    return %c0_i32, %c0_i32_0 : i32, i32
  }
  func.func @transform_7(%arg0: i32) -> (i32, i32, i32) {
    %c0_i32 = arith.constant 0 : i32
    %c0_i32_0 = arith.constant 0 : i32
    %c0_i32_1 = arith.constant 0 : i32
    return %arg0, %c0_i32, %c0_i32_0 : i32, i32, i32
  }
}

</mosaic_0001>

<llo_original>
// kernel: gan_forward.1
$region0: #{gan_forward.1}
  #allocation0 [shape = 'u32[]', space=smem, size = 0x4, offset = 0x4, fixed_abs, tag = 'smem constant byte address 0x4 - core index']
  #allocation1 [shape = 'u32[144,128]{1,0:T(1,128)}', space=vmem, size = 0x12000, scoped, tag = 'internal scratch']
  #allocation2 [shape = 'f32[4,512]{1,0:T(4,128)}', space=vmem, size = 0x2000, scoped, tag = 'scratch operand']
  #allocation3 [shape = 'bf16[72,512]{1,0:T(8,128)(2,1)}', space=vmem, size = 0x12000, scoped, tag = 'scratch operand']
  %s0 = inlined_call_operand.vmem [shape: f32[2,4,256], index: 0, kind: input, shape index: {}]
  %s1 = inlined_call_operand.vmem [shape: bf16[8,36], index: 1, kind: input, shape index: {}]
  %s2 = inlined_call_operand.vmem [shape: f32[8,1], index: 2, kind: input, shape index: {}]
  %s3 = inlined_call_operand.vmem [shape: bf16[8,72], index: 3, kind: input, shape index: {}]
  %s4 = inlined_call_operand.vmem [shape: f32[8,1], index: 4, kind: input, shape index: {}]
  %s5 = inlined_call_operand.vmem [shape: bf16[4,72], index: 5, kind: input, shape index: {}]
  %s6 = inlined_call_operand.vmem [shape: f32[4,1], index: 6, kind: input, shape index: {}]
  %s7 = inlined_call_operand.vmem [shape: f32[2,4,256], index: 7, kind: output, shape index: {}]
  %s8 = sld [smem:[#allocation0]]
  $region61: #{gan_forward.1} parent=0
    _
  %s10 = ssub.s32 1, %s8
  %s11 = scalar_select 0, %s10, %s8
  loop: start=0, step=1, limit=4
  $region2: #{gan_forward.1} parent=0 // loop_pre_header
    _
  $region3: #{gan_forward.1} parent=0 // loop_header
    %s13 = sphi 0, %s17
    %p14 = scmp.ge.s32.totalorder %s13, 4
    %s23 = sphi 0, %s25
    %s26 = sphi 0, %s23
    %s27 = sphi 0, %s26
    %s43 = sphi 0, %s27
    %s47 = sphi 0, %s47
    %s49 = sphi 0, %s47
    %s50 = sphi 0, %s49
    %s64 = sphi 0, %s50
    %s68 = sphi 0, %s68
    %s70 = sphi 0, %s68
    %s71 = sphi 0, %s70
    %s85 = sphi 0, %s71
    %s89 = sphi 0, %s89
    %s91 = sphi 0, %s89
    %s92 = sphi 0, %s91
    %s106 = sphi 0, %s92
    %s110 = sphi 0, %s110
    %s112 = sphi 0, %s110
    %s113 = sphi 0, %s112
    %s127 = sphi 0, %s113
    %s131 = sphi 0, %s131
    %s133 = sphi 0, %s131
    %s134 = sphi 0, %s133
    %s148 = sphi 0, %s134
    %s152 = sphi 0, %s152
    %s154 = sphi 0, %s152
    %s155 = sphi 0, %s154
    %s169 = sphi 0, %s155
    %s175 = sphi 0, %s177
    %s178 = sphi 0, %s175
    %s179 = sphi 0, %s178
    %s195 = sphi 0, %s179
  $region4: #{gan_forward.1} parent=0 // loop_header_branch
    %16 = sbr.rel (%p14) target = $region8
  $region5: #{gan_forward.1} parent=0 // loop_body
    %s18 = ssub.s32 %s13, 1
    %s19 = ssub.s32 %s13, 2
    %s20 = sadd.s32 %s13, 1
    %s21 = ssub.s32 %s13, %s20
    %p22 = scmp.eq.s32.totalorder %s21, 0
    %s24 = sadd.s32 %s23, 1
    %s25 = scalar_select %p22, %s23, %s24
    %p28 = pneg %p22
    %p29 = scmp.eq.s32.totalorder %s13, 1
    %p30 = por %p28, %p29
    %p31 = scmp.ne.s32.totalorder %s23, %s26
    %p32 = scmp.eq.s32.totalorder %s13, 0
    %p33 = por %p31, %p32
    %p34 = scmp.ne.s32.totalorder %s23, %s26
    %p35 = scmp.eq.s32.totalorder %s18, 1
    %p36 = por %p34, %p35
    %p37 = scmp.ne.s32.totalorder %s26, %s27
    %p38 = scmp.eq.s32.totalorder %s18, 0
    %p39 = por %p37, %p38
    %p40 = scmp.ne.s32.totalorder %s26, %s27
    %p41 = scmp.eq.s32.totalorder %s19, 1
    %p42 = por %p40, %p41
    %p44 = scmp.ne.s32.totalorder %s27, %s43
    %p45 = scmp.eq.s32.totalorder %s19, 0
    %p46 = por %p44, %p45
    %s48 = sadd.s32 %s47, 1
    %p51 = scmp.eq.s32.totalorder %s13, 1
    %p52 = scmp.ne.s32.totalorder %s47, %s49
    %p53 = scmp.eq.s32.totalorder %s13, 0
    %p54 = por %p52, %p53
    %p55 = scmp.ne.s32.totalorder %s47, %s49
    %p56 = scmp.eq.s32.totalorder %s18, 1
    %p57 = por %p55, %p56
    %p58 = scmp.ne.s32.totalorder %s49, %s50
    %p59 = scmp.eq.s32.totalorder %s18, 0
    %p60 = por %p58, %p59
    %p61 = scmp.ne.s32.totalorder %s49, %s50
    %p62 = scmp.eq.s32.totalorder %s19, 1
    %p63 = por %p61, %p62
    %p65 = scmp.ne.s32.totalorder %s50, %s64
    %p66 = scmp.eq.s32.totalorder %s19, 0
    %p67 = por %p65, %p66
    %s69 = sadd.s32 %s68, 1
    %p72 = scmp.eq.s32.totalorder %s13, 1
    %p73 = scmp.ne.s32.totalorder %s68, %s70
    %p74 = scmp.eq.s32.totalorder %s13, 0
    %p75 = por %p73, %p74
    %p76 = scmp.ne.s32.totalorder %s68, %s70
    %p77 = scmp.eq.s32.totalorder %s18, 1
    %p78 = por %p76, %p77
    %p79 = scmp.ne.s32.totalorder %s70, %s71
    %p80 = scmp.eq.s32.totalorder %s18, 0
    %p81 = por %p79, %p80
    %p82 = scmp.ne.s32.totalorder %s70, %s71
    %p83 = scmp.eq.s32.totalorder %s19, 1
    %p84 = por %p82, %p83
    %p86 = scmp.ne.s32.totalorder %s71, %s85
    %p87 = scmp.eq.s32.totalorder %s19, 0
    %p88 = por %p86, %p87
    %s90 = sadd.s32 %s89, 1
    %p93 = scmp.eq.s32.totalorder %s13, 1
    %p94 = scmp.ne.s32.totalorder %s89, %s91
    %p95 = scmp.eq.s32.totalorder %s13, 0
    %p96 = por %p94, %p95
    %p97 = scmp.ne.s32.totalorder %s89, %s91
    %p98 = scmp.eq.s32.totalorder %s18, 1
    %p99 = por %p97, %p98
    %p100 = scmp.ne.s32.totalorder %s91, %s92
    %p101 = scmp.eq.s32.totalorder %s18, 0
    %p102 = por %p100, %p101
    %p103 = scmp.ne.s32.totalorder %s91, %s92
    %p104 = scmp.eq.s32.totalorder %s19, 1
    %p105 = por %p103, %p104
    %p107 = scmp.ne.s32.totalorder %s92, %s106
    %p108 = scmp.eq.s32.totalorder %s19, 0
    %p109 = por %p107, %p108
    %s111 = sadd.s32 %s110, 1
    %p114 = scmp.eq.s32.totalorder %s13, 1
    %p115 = scmp.ne.s32.totalorder %s110, %s112
    %p116 = scmp.eq.s32.totalorder %s13, 0
    %p117 = por %p115, %p116
    %p118 = scmp.ne.s32.totalorder %s110, %s112
    %p119 = scmp.eq.s32.totalorder %s18, 1
    %p120 = por %p118, %p119
    %p121 = scmp.ne.s32.totalorder %s112, %s113
    %p122 = scmp.eq.s32.totalorder %s18, 0
    %p123 = por %p121, %p122
    %p124 = scmp.ne.s32.totalorder %s112, %s113
    %p125 = scmp.eq.s32.totalorder %s19, 1
    %p126 = por %p124, %p125
    %p128 = scmp.ne.s32.totalorder %s113, %s127
    %p129 = scmp.eq.s32.totalorder %s19, 0
    %p130 = por %p128, %p129
    %s132 = sadd.s32 %s131, 1
    %p135 = scmp.eq.s32.totalorder %s13, 1
    %p136 = scmp.ne.s32.totalorder %s131, %s133
    %p137 = scmp.eq.s32.totalorder %s13, 0
    %p138 = por %p136, %p137
    %p139 = scmp.ne.s32.totalorder %s131, %s133
    %p140 = scmp.eq.s32.totalorder %s18, 1
    %p141 = por %p139, %p140
    %p142 = scmp.ne.s32.totalorder %s133, %s134
    %p143 = scmp.eq.s32.totalorder %s18, 0
    %p144 = por %p142, %p143
    %p145 = scmp.ne.s32.totalorder %s133, %s134
    %p146 = scmp.eq.s32.totalorder %s19, 1
    %p147 = por %p145, %p146
    %p149 = scmp.ne.s32.totalorder %s134, %s148
    %p150 = scmp.eq.s32.totalorder %s19, 0
    %p151 = por %p149, %p150
    %s153 = sadd.s32 %s152, 1
    %p156 = scmp.eq.s32.totalorder %s13, 1
    %p157 = scmp.ne.s32.totalorder %s152, %s154
    %p158 = scmp.eq.s32.totalorder %s13, 0
    %p159 = por %p157, %p158
    %p160 = scmp.ne.s32.totalorder %s152, %s154
    %p161 = scmp.eq.s32.totalorder %s18, 1
    %p162 = por %p160, %p161
    %p163 = scmp.ne.s32.totalorder %s154, %s155
    %p164 = scmp.eq.s32.totalorder %s18, 0
    %p165 = por %p163, %p164
    %p166 = scmp.ne.s32.totalorder %s154, %s155
    %p167 = scmp.eq.s32.totalorder %s19, 1
    %p168 = por %p166, %p167
    %p170 = scmp.ne.s32.totalorder %s155, %s169
    %p171 = scmp.eq.s32.totalorder %s19, 0
    %p172 = por %p170, %p171
    %s173 = ssub.s32 %s13, %s20
    %p174 = scmp.eq.s32.totalorder %s173, 0
    %s176 = sadd.s32 %s175, 1
    %s177 = scalar_select %p174, %s175, %s176
    %p180 = pneg %p174
    %p181 = scmp.eq.s32.totalorder %s13, 1
    %p182 = por %p180, %p181
    %p183 = scmp.ne.s32.totalorder %s175, %s178
    %p184 = scmp.eq.s32.totalorder %s13, 0
    %p185 = por %p183, %p184
    %p186 = scmp.ne.s32.totalorder %s175, %s178
    %p187 = scmp.eq.s32.totalorder %s18, 1
    %p188 = por %p186, %p187
    %p189 = scmp.ne.s32.totalorder %s178, %s179
    %p190 = scmp.eq.s32.totalorder %s18, 0
    %p191 = por %p189, %p190
    %p192 = scmp.ne.s32.totalorder %s178, %s179
    %p193 = scmp.eq.s32.totalorder %s19, 1
    %p194 = por %p192, %p193
    %p196 = scmp.ne.s32.totalorder %s179, %s195
    %p197 = scmp.eq.s32.totalorder %s19, 0
    %p198 = por %p196, %p197
    %p199 = scmp.le.s32.totalorder 1, %s13
    %p200 = scmp.lt.s32.totalorder %s13, 3
    %p201 = pnand %p199, %p200
    %p202 = pneg %p201
    // Predicated region
    $region9: #{gan_forward.1} parent=5 // pred_check
      _
    $region10: #{gan_forward.1} parent=5 // pred_check_branch
      %204 = sbr.rel (%p201) target = $region12
    $region11: #{gan_forward.1} parent=5 // pred_region
      %s205 = ssub.s32 %s13, 1
      // Predicated region
      $region13: #{gan_forward.1} parent=11 // pred_check
        %p206 = pneg %p60
      $region14: #{gan_forward.1} parent=11 // pred_check_branch
        %208 = sbr.rel (%p206) target = $region16
      $region15: #{gan_forward.1} parent=11 // pred_region
        _
      $region16: #{gan_forward.1} parent=11 // pred_fallthru
        _
      // Predicated region
      $region17: #{gan_forward.1} parent=11 // pred_check
        %p209 = pneg %p81
      $region18: #{gan_forward.1} parent=11 // pred_check_branch
        %211 = sbr.rel (%p209) target = $region20
      $region19: #{gan_forward.1} parent=11 // pred_region
        _
      $region20: #{gan_forward.1} parent=11 // pred_fallthru
        _
      // Predicated region
      $region21: #{gan_forward.1} parent=11 // pred_check
        %p212 = pneg %p102
      $region22: #{gan_forward.1} parent=11 // pred_check_branch
        %214 = sbr.rel (%p212) target = $region24
      $region23: #{gan_forward.1} parent=11 // pred_region
        _
      $region24: #{gan_forward.1} parent=11 // pred_fallthru
        _
      // Predicated region
      $region25: #{gan_forward.1} parent=11 // pred_check
        %p215 = pneg %p123
      $region26: #{gan_forward.1} parent=11 // pred_check_branch
        %217 = sbr.rel (%p215) target = $region28
      $region27: #{gan_forward.1} parent=11 // pred_region
        _
      $region28: #{gan_forward.1} parent=11 // pred_fallthru
        _
      // Predicated region
      $region29: #{gan_forward.1} parent=11 // pred_check
        %p218 = pneg %p144
      $region30: #{gan_forward.1} parent=11 // pred_check_branch
        %220 = sbr.rel (%p218) target = $region32
      $region31: #{gan_forward.1} parent=11 // pred_region
        _
      $region32: #{gan_forward.1} parent=11 // pred_fallthru
        _
      // Predicated region
      $region33: #{gan_forward.1} parent=11 // pred_check
        %p221 = pneg %p165
      $region34: #{gan_forward.1} parent=11 // pred_check_branch
        %223 = sbr.rel (%p221) target = $region36
      $region35: #{gan_forward.1} parent=11 // pred_region
        _
      $region36: #{gan_forward.1} parent=11 // pred_fallthru
        _
    $region12: #{gan_forward.1} parent=5 // pred_fallthru
      _
    %p224 = scmp.lt.s32.totalorder %s13, 2
    // Predicated region
    $region37: #{gan_forward.1} parent=5 // pred_check
      %p225 = pneg %p224
    $region38: #{gan_forward.1} parent=5 // pred_check_branch
      %227 = sbr.rel (%p225) target = $region40
    $region39: #{gan_forward.1} parent=5 // pred_region
      // Predicated region
      $region41: #{gan_forward.1} parent=39 // pred_check
        %p228 = pneg %p33
      $region42: #{gan_forward.1} parent=39 // pred_check_branch
        %230 = sbr.rel (%p228) target = $region44
      $region43: #{gan_forward.1} parent=39 // pred_region
        %p231 = scmp.lt.s32.totalorder %s13, 1
        %s232 = scalar_select %p231, %s13, 1
        %s233 = smul.addr %s232, 2
        %s234 = smul.addr %s233, 4
        %s235 = scalar_lea.vmem %s0, %s234
      $region44: #{gan_forward.1} parent=39 // pred_fallthru
        _
    $region40: #{gan_forward.1} parent=5 // pred_fallthru
      _
    %p236 = scmp.le.s32.totalorder 1, %s13
    %p237 = scmp.lt.s32.totalorder %s13, 3
    %p238 = pnand %p236, %p237
    %p239 = pneg %p238
    // Predicated region
    $region45: #{gan_forward.1} parent=5 // pred_check
      _
    $region46: #{gan_forward.1} parent=5 // pred_check_branch
      %241 = sbr.rel (%p238) target = $region48
    $region47: #{gan_forward.1} parent=5 // pred_region
      %s242 = ssub.s32 %s13, 1
      %p243 = scmp.lt.s32.totalorder %s18, 1
      %s244 = scalar_select %p243, %s18, 1
      %s245 = smul.addr %s244, 2
      %s246 = smul.addr %s245, 4
      %s247 = scalar_lea.vmem %s0, %s246
      %p248 = pneg %p39
      %p249 = pneg %p36
      %p250 = pneg %p60
      %p251 = pneg %p57
      %p252 = pneg %p81
      %p253 = pneg %p78
      %p254 = pneg %p102
      %p255 = pneg %p99
      %p256 = pneg %p123
      %p257 = pneg %p120
      %p258 = pneg %p144
      %p259 = pneg %p141
      %p260 = pneg %p165
      %p261 = pneg %p162
      %p262 = pneg %p191
      %p263 = pneg %p188
      %p264 = scmp.lt.s32.totalorder %s18, 1
      %s265 = scalar_select %p264, %s18, 1
      %s266 = smul.addr %s265, 2
      %s267 = smul.addr %s266, 4
      %s268 = scalar_lea.vmem %s7, %s267
      %p269 = scmp.lt.s32.totalorder %s18, 1
      %s270 = scalar_select %p269, %s18, 1
      %s271 = smul.addr %s270, 2
      %s272 = smul.addr %s271, 4
      %s273 = scalar_lea.vmem %s0, %s272
      %p274 = scmp.lt.s32.totalorder %s18, 1
      %s275 = scalar_select %p274, %s18, 1
      %s276 = smul.addr %s275, 2
      %s277 = smul.addr %s276, 4
      %s278 = scalar_lea.vmem %s7, %s277
      %280 = vst [vmem:[#allocation2] sm:$0xff] 0.0
      %281 = vst [vmem:[#allocation2 + $0x8] sm:$0xff] 0.0
      %v282 = vld [vmem:[%s273] sm:$0xf]
      %284 = vrot.lane.b32.xlu0 %v282, 63
      %v285 = vpop.permute.xlu0 %284
      %vm287 = vcmask 642552
      %288 = vst.msk [vmem:[#allocation2] sm:$0xf] %vm287, %v285
      %v289 = vld [vmem:[%s273] sm:$0xf]
      %291 = vrot.lane.b32.xlu0 %v289, 67
      %v292 = vpop.permute.xlu0 %291
      %vm294 = vcmask 806552
      %295 = vst.msk [vmem:[#allocation2] sm:$0xf] %vm294, %v292
      %v296 = vld [vmem:[%s273] sm:$0xf]
      %298 = vrot.lane.b32.xlu0 %v296, 71
      %v299 = vpop.permute.xlu0 %298
      %vm301 = vcmask 970552
      %302 = vst.msk [vmem:[#allocation2] sm:$0xf] %vm301, %v299
      %v303 = vld [vmem:[%s273] sm:$0xf]
      %305 = vrot.lane.b32.xlu0 %v303, 75
      %v306 = vpop.permute.xlu0 %305
      %v307 = vrot.slane %v306, 4
      %vm308 = vcmask 613376
      %v309 = vsel %vm308, %v307, %v306
      %vm311 = vcmask 1044440
      %vm312 = vcmask 89092
      %vm313 = vmor %vm312, %vm311
      %314 = vst.msk [vmem:[#allocation2] sm:$0xff] %vm313, %v309
      %v315 = vld [vmem:[%s273] sm:$0xf]
      %317 = vrot.lane.b32.xlu0 %v315, 79
      %v318 = vpop.permute.xlu0 %317
      %vm320 = vcmask 248952
      %321 = vst.msk [vmem:[#allocation2 + $0x4] sm:$0xf] %vm320, %v318
      %v322 = vld [vmem:[%s273] sm:$0xf]
      %324 = vrot.lane.b32.xlu0 %v322, 83
      %v325 = vpop.permute.xlu0 %324
      %vm327 = vcmask 412952
      %328 = vst.msk [vmem:[#allocation2 + $0x4] sm:$0xf] %vm327, %v325
      %v329 = vld [vmem:[%s273] sm:$0xf]
      %331 = vrot.lane.b32.xlu0 %v329, 87
      %v332 = vpop.permute.xlu0 %331
      %vm334 = vcmask 576952
      %335 = vst.msk [vmem:[#allocation2 + $0x4] sm:$0xf] %vm334, %v332
      %v336 = vld [vmem:[%s273] sm:$0xf]
      %338 = vrot.lane.b32.xlu0 %v336, 91
      %v339 = vpop.permute.xlu0 %338
      %vm341 = vcmask 740952
      %342 = vst.msk [vmem:[#allocation2 + $0x4] sm:$0xf] %vm341, %v339
      %v343 = vld [vmem:[%s273 + $0x4] sm:$0xf]
      %345 = vrot.lane.b32.xlu0 %v343, 95
      %v346 = vpop.permute.xlu0 %345
      %vm348 = vcmask 904952
      %349 = vst.msk [vmem:[#allocation2 + $0x4] sm:$0xf] %vm348, %v346
      %v350 = vld [vmem:[%s273 + $0x4] sm:$0xf]
      %352 = vrot.lane.b32.xlu0 %v350, 99
      %v353 = vpop.permute.xlu0 %352
      %v354 = vrot.slane %v353, 4
      %vm355 = vcmask 809984
      %v356 = vsel %vm355, %v354, %v353
      %vm358 = vcmask 1044376
      %vm359 = vcmask 23556
      %vm360 = vmor %vm359, %vm358
      %361 = vst.msk [vmem:[#allocation2 + $0x4] sm:$0xff] %vm360, %v356
      %v362 = vld [vmem:[%s273 + $0x4] sm:$0xf]
      %364 = vrot.lane.b32.xlu0 %v362, 103
      %v365 = vpop.permute.xlu0 %364
      %vm367 = vcmask 183352
      %368 = vst.msk [vmem:[#allocation2 + $0x8] sm:$0xf] %vm367, %v365
      %v369 = vld [vmem:[%s273 + $0x4] sm:$0xf]
      %371 = vrot.lane.b32.xlu0 %v369, 107
      %v372 = vpop.permute.xlu0 %371
      %vm374 = vcmask 347352
      %375 = vst.msk [vmem:[#allocation2 + $0x8] sm:$0xf] %vm374, %v372
      %v376 = vld [vmem:[%s273 + $0x4] sm:$0xf]
      %378 = vrot.lane.b32.xlu0 %v376, 111
      %v379 = vpop.permute.xlu0 %378
      %vm381 = vcmask 511352
      %382 = vst.msk [vmem:[#allocation2 + $0x8] sm:$0xf] %vm381, %v379
      %v383 = vld [vmem:[%s273 + $0x4] sm:$0xf]
      %385 = vrot.lane.b32.xlu0 %v383, 115
      %v386 = vpop.permute.xlu0 %385
      %vm388 = vcmask 675352
      %389 = vst.msk [vmem:[#allocation2 + $0x8] sm:$0xf] %vm388, %v386
      %v390 = vld [vmem:[%s273 + $0x4] sm:$0xf]
      %392 = vrot.lane.b32.xlu0 %v390, 119
      %v393 = vpop.permute.xlu0 %392
      %vm395 = vcmask 839352
      %396 = vst.msk [vmem:[#allocation2 + $0x8] sm:$0xf] %vm395, %v393
      %v397 = vld [vmem:[%s273 + $0x4] sm:$0xf]
      %399 = vrot.lane.b32.xlu0 %v397, 123
      %v400 = vpop.permute.xlu0 %399
      %vm402 = vcmask 1003352
      %403 = vst.msk [vmem:[#allocation2 + $0x8] sm:$0xf] %vm402, %v400
      %v404 = vlaneseq
      %v405 = vand.u32 %v404, 127
      %v406 = vadd.s32 %v405, 128
      %v407 = vadd.s32 %v405, 256
      %v408 = vadd.s32 %v405, 384
      %vm409 = vcmp.ge.s32.totalorder %v405, 42
      %vm410 = vcmp.ge.s32.totalorder %v406, 42
      %vm411 = vcmp.ge.s32.totalorder %v407, 42
      %vm412 = vcmp.ge.s32.totalorder %v408, 42
      %vm413 = vcmp.lt.s32.totalorder %v405, 58
      %vm414 = vcmp.lt.s32.totalorder %v406, 58
      %vm415 = vcmp.lt.s32.totalorder %v407, 58
      %vm416 = vcmp.lt.s32.totalorder %v408, 58
      %vm417 = vmand %vm409, %vm413
      %vm418 = vmand %vm410, %vm414
      %vm419 = vmand %vm411, %vm415
      %vm420 = vmand %vm412, %vm416
      %vm421 = vcmp.ge.s32.totalorder %v405, 62
      %vm422 = vcmp.ge.s32.totalorder %v406, 62
      %vm423 = vcmp.ge.s32.totalorder %v407, 62
      %vm424 = vcmp.ge.s32.totalorder %v408, 62
      %vm425 = vcmp.lt.s32.totalorder %v405, 78
      %vm426 = vcmp.lt.s32.totalorder %v406, 78
      %vm427 = vcmp.lt.s32.totalorder %v407, 78
      %vm428 = vcmp.lt.s32.totalorder %v408, 78
      %vm429 = vmand %vm421, %vm425
      %vm430 = vmand %vm422, %vm426
      %vm431 = vmand %vm423, %vm427
      %vm432 = vmand %vm424, %vm428
      %vm433 = vmor %vm417, %vm429
      %vm434 = vmor %vm418, %vm430
      %vm435 = vmor %vm419, %vm431
      %vm436 = vmor %vm420, %vm432
      %vm437 = vcmp.ge.s32.totalorder %v405, 82
      %vm438 = vcmp.ge.s32.totalorder %v406, 82
      %vm439 = vcmp.ge.s32.totalorder %v407, 82
      %vm440 = vcmp.ge.s32.totalorder %v408, 82
      %vm441 = vcmp.lt.s32.totalorder %v405, 98
      %vm442 = vcmp.lt.s32.totalorder %v406, 98
      %vm443 = vcmp.lt.s32.totalorder %v407, 98
      %vm444 = vcmp.lt.s32.totalorder %v408, 98
      %vm445 = vmand %vm437, %vm441
      %vm446 = vmand %vm438, %vm442
      %vm447 = vmand %vm439, %vm443
      %vm448 = vmand %vm440, %vm444
      %vm449 = vmor %vm433, %vm445
      %vm450 = vmor %vm434, %vm446
      %vm451 = vmor %vm435, %vm447
      %vm452 = vmor %vm436, %vm448
      %vm453 = vcmp.ge.s32.totalorder %v405, 102
      %vm454 = vcmp.ge.s32.totalorder %v406, 102
      %vm455 = vcmp.ge.s32.totalorder %v407, 102
      %vm456 = vcmp.ge.s32.totalorder %v408, 102
      %vm457 = vcmp.lt.s32.totalorder %v405, 118
      %vm458 = vcmp.lt.s32.totalorder %v406, 118
      %vm459 = vcmp.lt.s32.totalorder %v407, 118
      %vm460 = vcmp.lt.s32.totalorder %v408, 118
      %vm461 = vmand %vm453, %vm457
      %vm462 = vmand %vm454, %vm458
      %vm463 = vmand %vm455, %vm459
      %vm464 = vmand %vm456, %vm460
      %vm465 = vmor %vm449, %vm461
      %vm466 = vmor %vm450, %vm462
      %vm467 = vmor %vm451, %vm463
      %vm468 = vmor %vm452, %vm464
      %vm469 = vcmp.ge.s32.totalorder %v405, 122
      %vm470 = vcmp.ge.s32.totalorder %v406, 122
      %vm471 = vcmp.ge.s32.totalorder %v407, 122
      %vm472 = vcmp.ge.s32.totalorder %v408, 122
      %vm473 = vcmp.lt.s32.totalorder %v405, 138
      %vm474 = vcmp.lt.s32.totalorder %v406, 138
      %vm475 = vcmp.lt.s32.totalorder %v407, 138
      %vm476 = vcmp.lt.s32.totalorder %v408, 138
      %vm477 = vmand %vm469, %vm473
      %vm478 = vmand %vm470, %vm474
      %vm479 = vmand %vm471, %vm475
      %vm480 = vmand %vm472, %vm476
      %vm481 = vmor %vm465, %vm477
      %vm482 = vmor %vm466, %vm478
      %vm483 = vmor %vm467, %vm479
      %vm484 = vmor %vm468, %vm480
      %vm485 = vcmp.ge.s32.totalorder %v405, 142
      %vm486 = vcmp.ge.s32.totalorder %v406, 142
      %vm487 = vcmp.ge.s32.totalorder %v407, 142
      %vm488 = vcmp.ge.s32.totalorder %v408, 142
      %vm489 = vcmp.lt.s32.totalorder %v405, 158
      %vm490 = vcmp.lt.s32.totalorder %v406, 158
      %vm491 = vcmp.lt.s32.totalorder %v407, 158
      %vm492 = vcmp.lt.s32.totalorder %v408, 158
      %vm493 = vmand %vm485, %vm489
      %vm494 = vmand %vm486, %vm490
      %vm495 = vmand %vm487, %vm491
      %vm496 = vmand %vm488, %vm492
      %vm497 = vmor %vm481, %vm493
      %vm498 = vmor %vm482, %vm494
      %vm499 = vmor %vm483, %vm495
      %vm500 = vmor %vm484, %vm496
      %vm501 = vcmp.ge.s32.totalorder %v405, 162
      %vm502 = vcmp.ge.s32.totalorder %v406, 162
      %vm503 = vcmp.ge.s32.totalorder %v407, 162
      %vm504 = vcmp.ge.s32.totalorder %v408, 162
      %vm505 = vcmp.lt.s32.totalorder %v405, 178
      %vm506 = vcmp.lt.s32.totalorder %v406, 178
      %vm507 = vcmp.lt.s32.totalorder %v407, 178
      %vm508 = vcmp.lt.s32.totalorder %v408, 178
      %vm509 = vmand %vm501, %vm505
      %vm510 = vmand %vm502, %vm506
      %vm511 = vmand %vm503, %vm507
      %vm512 = vmand %vm504, %vm508
      %vm513 = vmor %vm497, %vm509
      %vm514 = vmor %vm498, %vm510
      %vm515 = vmor %vm499, %vm511
      %vm516 = vmor %vm500, %vm512
      %vm517 = vcmp.ge.s32.totalorder %v405, 182
      %vm518 = vcmp.ge.s32.totalorder %v406, 182
      %vm519 = vcmp.ge.s32.totalorder %v407, 182
      %vm520 = vcmp.ge.s32.totalorder %v408, 182
      %vm521 = vcmp.lt.s32.totalorder %v405, 198
      %vm522 = vcmp.lt.s32.totalorder %v406, 198
      %vm523 = vcmp.lt.s32.totalorder %v407, 198
      %vm524 = vcmp.lt.s32.totalorder %v408, 198
      %vm525 = vmand %vm517, %vm521
      %vm526 = vmand %vm518, %vm522
      %vm527 = vmand %vm519, %vm523
      %vm528 = vmand %vm520, %vm524
      %vm529 = vmor %vm513, %vm525
      %vm530 = vmor %vm514, %vm526
      %vm531 = vmor %vm515, %vm527
      %vm532 = vmor %vm516, %vm528
      %vm533 = vcmp.ge.s32.totalorder %v405, 202
      %vm534 = vcmp.ge.s32.totalorder %v406, 202
      %vm535 = vcmp.ge.s32.totalorder %v407, 202
      %vm536 = vcmp.ge.s32.totalorder %v408, 202
      %vm537 = vcmp.lt.s32.totalorder %v405, 218
      %vm538 = vcmp.lt.s32.totalorder %v406, 218
      %vm539 = vcmp.lt.s32.totalorder %v407, 218
      %vm540 = vcmp.lt.s32.totalorder %v408, 218
      %vm541 = vmand %vm533, %vm537
      %vm542 = vmand %vm534, %vm538
      %vm543 = vmand %vm535, %vm539
      %vm544 = vmand %vm536, %vm540
      %vm545 = vmor %vm529, %vm541
      %vm546 = vmor %vm530, %vm542
      %vm547 = vmor %vm531, %vm543
      %vm548 = vmor %vm532, %vm544
      %vm549 = vcmp.ge.s32.totalorder %v405, 222
      %vm550 = vcmp.ge.s32.totalorder %v406, 222
      %vm551 = vcmp.ge.s32.totalorder %v407, 222
      %vm552 = vcmp.ge.s32.totalorder %v408, 222
      %vm553 = vcmp.lt.s32.totalorder %v405, 238
      %vm554 = vcmp.lt.s32.totalorder %v406, 238
      %vm555 = vcmp.lt.s32.totalorder %v407, 238
      %vm556 = vcmp.lt.s32.totalorder %v408, 238
      %vm557 = vmand %vm549, %vm553
      %vm558 = vmand %vm550, %vm554
      %vm559 = vmand %vm551, %vm555
      %vm560 = vmand %vm552, %vm556
      %vm561 = vmor %vm545, %vm557
      %vm562 = vmor %vm546, %vm558
      %vm563 = vmor %vm547, %vm559
      %vm564 = vmor %vm548, %vm560
      %vm565 = vcmp.ge.s32.totalorder %v405, 242
      %vm566 = vcmp.ge.s32.totalorder %v406, 242
      %vm567 = vcmp.ge.s32.totalorder %v407, 242
      %vm568 = vcmp.ge.s32.totalorder %v408, 242
      %vm569 = vcmp.lt.s32.totalorder %v405, 258
      %vm570 = vcmp.lt.s32.totalorder %v406, 258
      %vm571 = vcmp.lt.s32.totalorder %v407, 258
      %vm572 = vcmp.lt.s32.totalorder %v408, 258
      %vm573 = vmand %vm565, %vm569
      %vm574 = vmand %vm566, %vm570
      %vm575 = vmand %vm567, %vm571
      %vm576 = vmand %vm568, %vm572
      %vm577 = vmor %vm561, %vm573
      %vm578 = vmor %vm562, %vm574
      %vm579 = vmor %vm563, %vm575
      %vm580 = vmor %vm564, %vm576
      %vm581 = vcmp.ge.s32.totalorder %v405, 262
      %vm582 = vcmp.ge.s32.totalorder %v406, 262
      %vm583 = vcmp.ge.s32.totalorder %v407, 262
      %vm584 = vcmp.ge.s32.totalorder %v408, 262
      %vm585 = vcmp.lt.s32.totalorder %v405, 278
      %vm586 = vcmp.lt.s32.totalorder %v406, 278
      %vm587 = vcmp.lt.s32.totalorder %v407, 278
      %vm588 = vcmp.lt.s32.totalorder %v408, 278
      %vm589 = vmand %vm581, %vm585
      %vm590 = vmand %vm582, %vm586
      %vm591 = vmand %vm583, %vm587
      %vm592 = vmand %vm584, %vm588
      %vm593 = vmor %vm577, %vm589
      %vm594 = vmor %vm578, %vm590
      %vm595 = vmor %vm579, %vm591
      %vm596 = vmor %vm580, %vm592
      %vm597 = vcmp.ge.s32.totalorder %v405, 282
      %vm598 = vcmp.ge.s32.totalorder %v406, 282
      %vm599 = vcmp.ge.s32.totalorder %v407, 282
      %vm600 = vcmp.ge.s32.totalorder %v408, 282
      %vm601 = vcmp.lt.s32.totalorder %v405, 298
      %vm602 = vcmp.lt.s32.totalorder %v406, 298
      %vm603 = vcmp.lt.s32.totalorder %v407, 298
      %vm604 = vcmp.lt.s32.totalorder %v408, 298
      %vm605 = vmand %vm597, %vm601
      %vm606 = vmand %vm598, %vm602
      %vm607 = vmand %vm599, %vm603
      %vm608 = vmand %vm600, %vm604
      %vm609 = vmor %vm593, %vm605
      %vm610 = vmor %vm594, %vm606
      %vm611 = vmor %vm595, %vm607
      %vm612 = vmor %vm596, %vm608
      %vm613 = vcmp.ge.s32.totalorder %v405, 302
      %vm614 = vcmp.ge.s32.totalorder %v406, 302
      %vm615 = vcmp.ge.s32.totalorder %v407, 302
      %vm616 = vcmp.ge.s32.totalorder %v408, 302
      %vm617 = vcmp.lt.s32.totalorder %v405, 318
      %vm618 = vcmp.lt.s32.totalorder %v406, 318
      %vm619 = vcmp.lt.s32.totalorder %v407, 318
      %vm620 = vcmp.lt.s32.totalorder %v408, 318
      %vm621 = vmand %vm613, %vm617
      %vm622 = vmand %vm614, %vm618
      %vm623 = vmand %vm615, %vm619
      %vm624 = vmand %vm616, %vm620
      %vm625 = vmor %vm609, %vm621
      %vm626 = vmor %vm610, %vm622
      %vm627 = vmor %vm611, %vm623
      %vm628 = vmor %vm612, %vm624
      %vm629 = vcmp.ge.s32.totalorder %v405, 322
      %vm630 = vcmp.ge.s32.totalorder %v406, 322
      %vm631 = vcmp.ge.s32.totalorder %v407, 322
      %vm632 = vcmp.ge.s32.totalorder %v408, 322
      %vm633 = vcmp.lt.s32.totalorder %v405, 338
      %vm634 = vcmp.lt.s32.totalorder %v406, 338
      %vm635 = vcmp.lt.s32.totalorder %v407, 338
      %vm636 = vcmp.lt.s32.totalorder %v408, 338
      %vm637 = vmand %vm629, %vm633
      %vm638 = vmand %vm630, %vm634
      %vm639 = vmand %vm631, %vm635
      %vm640 = vmand %vm632, %vm636
      %vm641 = vmor %vm625, %vm637
      %vm642 = vmor %vm626, %vm638
      %vm643 = vmor %vm627, %vm639
      %vm644 = vmor %vm628, %vm640
      %vm645 = vcmp.ge.s32.totalorder %v405, 342
      %vm646 = vcmp.ge.s32.totalorder %v406, 342
      %vm647 = vcmp.ge.s32.totalorder %v407, 342
      %vm648 = vcmp.ge.s32.totalorder %v408, 342
      %vm649 = vcmp.lt.s32.totalorder %v405, 358
      %vm650 = vcmp.lt.s32.totalorder %v406, 358
      %vm651 = vcmp.lt.s32.totalorder %v407, 358
      %vm652 = vcmp.lt.s32.totalorder %v408, 358
      %vm653 = vmand %vm645, %vm649
      %vm654 = vmand %vm646, %vm650
      %vm655 = vmand %vm647, %vm651
      %vm656 = vmand %vm648, %vm652
      %vm657 = vmor %vm641, %vm653
      %vm658 = vmor %vm642, %vm654
      %vm659 = vmor %vm643, %vm655
      %vm660 = vmor %vm644, %vm656
      %vm661 = vcmp.ge.s32.totalorder %v405, 21
      %vm662 = vcmp.ge.s32.totalorder %v406, 21
      %vm663 = vcmp.ge.s32.totalorder %v407, 21
      %vm664 = vcmp.ge.s32.totalorder %v408, 21
      %vm665 = vcmp.lt.s32.totalorder %v405, 37
      %vm666 = vcmp.lt.s32.totalorder %v406, 37
      %vm667 = vcmp.lt.s32.totalorder %v407, 37
      %vm668 = vcmp.lt.s32.totalorder %v408, 37
      %vm669 = vmand %vm661, %vm665
      %vm670 = vmand %vm662, %vm666
      %vm671 = vmand %vm663, %vm667
      %vm672 = vmand %vm664, %vm668
      %vm673 = vcmp.ge.s32.totalorder %v405, 41
      %vm674 = vcmp.ge.s32.totalorder %v406, 41
      %vm675 = vcmp.ge.s32.totalorder %v407, 41
      %vm676 = vcmp.ge.s32.totalorder %v408, 41
      %vm677 = vcmp.lt.s32.totalorder %v405, 57
      %vm678 = vcmp.lt.s32.totalorder %v406, 57
      %vm679 = vcmp.lt.s32.totalorder %v407, 57
      %vm680 = vcmp.lt.s32.totalorder %v408, 57
      %vm681 = vmand %vm673, %vm677
      %vm682 = vmand %vm674, %vm678
      %vm683 = vmand %vm675, %vm679
      %vm684 = vmand %vm676, %vm680
      %vm685 = vmor %vm669, %vm681
      %vm686 = vmor %vm670, %vm682
      %vm687 = vmor %vm671, %vm683
      %vm688 = vmor %vm672, %vm684
      %vm689 = vcmp.ge.s32.totalorder %v405, 61
      %vm690 = vcmp.ge.s32.totalorder %v406, 61
      %vm691 = vcmp.ge.s32.totalorder %v407, 61
      %vm692 = vcmp.ge.s32.totalorder %v408, 61
      %vm693 = vcmp.lt.s32.totalorder %v405, 77
      %vm694 = vcmp.lt.s32.totalorder %v406, 77
      %vm695 = vcmp.lt.s32.totalorder %v407, 77
      %vm696 = vcmp.lt.s32.totalorder %v408, 77
      %vm697 = vmand %vm689, %vm693
      %vm698 = vmand %vm690, %vm694
      %vm699 = vmand %vm691, %vm695
      %vm700 = vmand %vm692, %vm696
      %vm701 = vmor %vm685, %vm697
      %vm702 = vmor %vm686, %vm698
      %vm703 = vmor %vm687, %vm699
      %vm704 = vmor %vm688, %vm700
      %vm705 = vcmp.ge.s32.totalorder %v405, 81
      %vm706 = vcmp.ge.s32.totalorder %v406, 81
      %vm707 = vcmp.ge.s32.totalorder %v407, 81
      %vm708 = vcmp.ge.s32.totalorder %v408, 81
      %vm709 = vcmp.lt.s32.totalorder %v405, 97
      %vm710 = vcmp.lt.s32.totalorder %v406, 97
      %vm711 = vcmp.lt.s32.totalorder %v407, 97
      %vm712 = vcmp.lt.s32.totalorder %v408, 97
      %vm713 = vmand %vm705, %vm709
      %vm714 = vmand %vm706, %vm710
      %vm715 = vmand %vm707, %vm711
      %vm716 = vmand %vm708, %vm712
      %vm717 = vmor %vm701, %vm713
      %vm718 = vmor %vm702, %vm714
      %vm719 = vmor %vm703, %vm715
      %vm720 = vmor %vm704, %vm716
      %vm721 = vcmp.ge.s32.totalorder %v405, 101
      %vm722 = vcmp.ge.s32.totalorder %v406, 101
      %vm723 = vcmp.ge.s32.totalorder %v407, 101
      %vm724 = vcmp.ge.s32.totalorder %v408, 101
      %vm725 = vcmp.lt.s32.totalorder %v405, 117
      %vm726 = vcmp.lt.s32.totalorder %v406, 117
      %vm727 = vcmp.lt.s32.totalorder %v407, 117
      %vm728 = vcmp.lt.s32.totalorder %v408, 117
      %vm729 = vmand %vm721, %vm725
      %vm730 = vmand %vm722, %vm726
      %vm731 = vmand %vm723, %vm727
      %vm732 = vmand %vm724, %vm728
      %vm733 = vmor %vm717, %vm729
      %vm734 = vmor %vm718, %vm730
      %vm735 = vmor %vm719, %vm731
      %vm736 = vmor %vm720, %vm732
      %vm737 = vcmp.ge.s32.totalorder %v405, 121
      %vm738 = vcmp.ge.s32.totalorder %v406, 121
      %vm739 = vcmp.ge.s32.totalorder %v407, 121
      %vm740 = vcmp.ge.s32.totalorder %v408, 121
      %vm741 = vcmp.lt.s32.totalorder %v405, 137
      %vm742 = vcmp.lt.s32.totalorder %v406, 137
      %vm743 = vcmp.lt.s32.totalorder %v407, 137
      %vm744 = vcmp.lt.s32.totalorder %v408, 137
      %vm745 = vmand %vm737, %vm741
      %vm746 = vmand %vm738, %vm742
      %vm747 = vmand %vm739, %vm743
      %vm748 = vmand %vm740, %vm744
      %vm749 = vmor %vm733, %vm745
      %vm750 = vmor %vm734, %vm746
      %vm751 = vmor %vm735, %vm747
      %vm752 = vmor %vm736, %vm748
      %vm753 = vcmp.ge.s32.totalorder %v405, 141
      %vm754 = vcmp.ge.s32.totalorder %v406, 141
      %vm755 = vcmp.ge.s32.totalorder %v407, 141
      %vm756 = vcmp.ge.s32.totalorder %v408, 141
      %vm757 = vcmp.lt.s32.totalorder %v405, 157
      %vm758 = vcmp.lt.s32.totalorder %v406, 157
      %vm759 = vcmp.lt.s32.totalorder %v407, 157
      %vm760 = vcmp.lt.s32.totalorder %v408, 157
      %vm761 = vmand %vm753, %vm757
      %vm762 = vmand %vm754, %vm758
      %vm763 = vmand %vm755, %vm759
      %vm764 = vmand %vm756, %vm760
      %vm765 = vmor %vm749, %vm761
      %vm766 = vmor %vm750, %vm762
      %vm767 = vmor %vm751, %vm763
      %vm768 = vmor %vm752, %vm764
      %vm769 = vcmp.ge.s32.totalorder %v405, 161
      %vm770 = vcmp.ge.s32.totalorder %v406, 161
      %vm771 = vcmp.ge.s32.totalorder %v407, 161
      %vm772 = vcmp.ge.s32.totalorder %v408, 161
      %vm773 = vcmp.lt.s32.totalorder %v405, 177
      %vm774 = vcmp.lt.s32.totalorder %v406, 177
      %vm775 = vcmp.lt.s32.totalorder %v407, 177
      %vm776 = vcmp.lt.s32.totalorder %v408, 177
      %vm777 = vmand %vm769, %vm773
      %vm778 = vmand %vm770, %vm774
      %vm779 = vmand %vm771, %vm775
      %vm780 = vmand %vm772, %vm776
      %vm781 = vmor %vm765, %vm777
      %vm782 = vmor %vm766, %vm778
      %vm783 = vmor %vm767, %vm779
      %vm784 = vmor %vm768, %vm780
      %vm785 = vcmp.ge.s32.totalorder %v405, 181
      %vm786 = vcmp.ge.s32.totalorder %v406, 181
      %vm787 = vcmp.ge.s32.totalorder %v407, 181
      %vm788 = vcmp.ge.s32.totalorder %v408, 181
      %vm789 = vcmp.lt.s32.totalorder %v405, 197
      %vm790 = vcmp.lt.s32.totalorder %v406, 197
      %vm791 = vcmp.lt.s32.totalorder %v407, 197
      %vm792 = vcmp.lt.s32.totalorder %v408, 197
      %vm793 = vmand %vm785, %vm789
      %vm794 = vmand %vm786, %vm790
      %vm795 = vmand %vm787, %vm791
      %vm796 = vmand %vm788, %vm792
      %vm797 = vmor %vm781, %vm793
      %vm798 = vmor %vm782, %vm794
      %vm799 = vmor %vm783, %vm795
      %vm800 = vmor %vm784, %vm796
      %vm801 = vcmp.ge.s32.totalorder %v405, 201
      %vm802 = vcmp.ge.s32.totalorder %v406, 201
      %vm803 = vcmp.ge.s32.totalorder %v407, 201
      %vm804 = vcmp.ge.s32.totalorder %v408, 201
      %vm805 = vcmp.lt.s32.totalorder %v405, 217
      %vm806 = vcmp.lt.s32.totalorder %v406, 217
      %vm807 = vcmp.lt.s32.totalorder %v407, 217
      %vm808 = vcmp.lt.s32.totalorder %v408, 217
      %vm809 = vmand %vm801, %vm805
      %vm810 = vmand %vm802, %vm806
      %vm811 = vmand %vm803, %vm807
      %vm812 = vmand %vm804, %vm808
      %vm813 = vmor %vm797, %vm809
      %vm814 = vmor %vm798, %vm810
      %vm815 = vmor %vm799, %vm811
      %vm816 = vmor %vm800, %vm812
      %vm817 = vcmp.ge.s32.totalorder %v405, 221
      %vm818 = vcmp.ge.s32.totalorder %v406, 221
      %vm819 = vcmp.ge.s32.totalorder %v407, 221
      %vm820 = vcmp.ge.s32.totalorder %v408, 221
      %vm821 = vcmp.lt.s32.totalorder %v405, 237
      %vm822 = vcmp.lt.s32.totalorder %v406, 237
      %vm823 = vcmp.lt.s32.totalorder %v407, 237
      %vm824 = vcmp.lt.s32.totalorder %v408, 237
      %vm825 = vmand %vm817, %vm821
      %vm826 = vmand %vm818, %vm822
      %vm827 = vmand %vm819, %vm823
      %vm828 = vmand %vm820, %vm824
      %vm829 = vmor %vm813, %vm825
      %vm830 = vmor %vm814, %vm826
      %vm831 = vmor %vm815, %vm827
      %vm832 = vmor %vm816, %vm828
      %vm833 = vcmp.ge.s32.totalorder %v405, 241
      %vm834 = vcmp.ge.s32.totalorder %v406, 241
      %vm835 = vcmp.ge.s32.totalorder %v407, 241
      %vm836 = vcmp.ge.s32.totalorder %v408, 241
      %vm837 = vcmp.lt.s32.totalorder %v405, 257
      %vm838 = vcmp.lt.s32.totalorder %v406, 257
      %vm839 = vcmp.lt.s32.totalorder %v407, 257
      %vm840 = vcmp.lt.s32.totalorder %v408, 257
      %vm841 = vmand %vm833, %vm837
      %vm842 = vmand %vm834, %vm838
      %vm843 = vmand %vm835, %vm839
      %vm844 = vmand %vm836, %vm840
      %vm845 = vmor %vm829, %vm841
      %vm846 = vmor %vm830, %vm842
      %vm847 = vmor %vm831, %vm843
      %vm848 = vmor %vm832, %vm844
      %vm849 = vcmp.ge.s32.totalorder %v405, 261
      %vm850 = vcmp.ge.s32.totalorder %v406, 261
      %vm851 = vcmp.ge.s32.totalorder %v407, 261
      %vm852 = vcmp.ge.s32.totalorder %v408, 261
      %vm853 = vcmp.lt.s32.totalorder %v405, 277
      %vm854 = vcmp.lt.s32.totalorder %v406, 277
      %vm855 = vcmp.lt.s32.totalorder %v407, 277
      %vm856 = vcmp.lt.s32.totalorder %v408, 277
      %vm857 = vmand %vm849, %vm853
      %vm858 = vmand %vm850, %vm854
      %vm859 = vmand %vm851, %vm855
      %vm860 = vmand %vm852, %vm856
      %vm861 = vmor %vm845, %vm857
      %vm862 = vmor %vm846, %vm858
      %vm863 = vmor %vm847, %vm859
      %vm864 = vmor %vm848, %vm860
      %vm865 = vcmp.ge.s32.totalorder %v405, 281
      %vm866 = vcmp.ge.s32.totalorder %v406, 281
      %vm867 = vcmp.ge.s32.totalorder %v407, 281
      %vm868 = vcmp.ge.s32.totalorder %v408, 281
      %vm869 = vcmp.lt.s32.totalorder %v405, 297
      %vm870 = vcmp.lt.s32.totalorder %v406, 297
      %vm871 = vcmp.lt.s32.totalorder %v407, 297
      %vm872 = vcmp.lt.s32.totalorder %v408, 297
      %vm873 = vmand %vm865, %vm869
      %vm874 = vmand %vm866, %vm870
      %vm875 = vmand %vm867, %vm871
      %vm876 = vmand %vm868, %vm872
      %vm877 = vmor %vm861, %vm873
      %vm878 = vmor %vm862, %vm874
      %vm879 = vmor %vm863, %vm875
      %vm880 = vmor %vm864, %vm876
      %vm881 = vcmp.ge.s32.totalorder %v405, 301
      %vm882 = vcmp.ge.s32.totalorder %v406, 301
      %vm883 = vcmp.ge.s32.totalorder %v407, 301
      %vm884 = vcmp.ge.s32.totalorder %v408, 301
      %vm885 = vcmp.lt.s32.totalorder %v405, 317
      %vm886 = vcmp.lt.s32.totalorder %v406, 317
      %vm887 = vcmp.lt.s32.totalorder %v407, 317
      %vm888 = vcmp.lt.s32.totalorder %v408, 317
      %vm889 = vmand %vm881, %vm885
      %vm890 = vmand %vm882, %vm886
      %vm891 = vmand %vm883, %vm887
      %vm892 = vmand %vm884, %vm888
      %vm893 = vmor %vm877, %vm889
      %vm894 = vmor %vm878, %vm890
      %vm895 = vmor %vm879, %vm891
      %vm896 = vmor %vm880, %vm892
      %vm897 = vcmp.ge.s32.totalorder %v405, 321
      %vm898 = vcmp.ge.s32.totalorder %v406, 321
      %vm899 = vcmp.ge.s32.totalorder %v407, 321
      %vm900 = vcmp.ge.s32.totalorder %v408, 321
      %vm901 = vcmp.lt.s32.totalorder %v405, 337
      %vm902 = vcmp.lt.s32.totalorder %v406, 337
      %vm903 = vcmp.lt.s32.totalorder %v407, 337
      %vm904 = vcmp.lt.s32.totalorder %v408, 337
      %vm905 = vmand %vm897, %vm901
      %vm906 = vmand %vm898, %vm902
      %vm907 = vmand %vm899, %vm903
      %vm908 = vmand %vm900, %vm904
      %vm909 = vmor %vm893, %vm905
      %vm910 = vmor %vm894, %vm906
      %vm911 = vmor %vm895, %vm907
      %vm912 = vmor %vm896, %vm908
      %v913 = vld [vmem:[#allocation2] sm:$0xff]
      %v914 = vld [vmem:[#allocation2 + $0x8] sm:$0xff]
      %v917 = vcombine.high %v913, %v913
      %v918 = vcombine.high %v914, %v914
      %v921 = vpack.c.bf16 %v913, %v913
      %v922 = vpack.c.bf16 %v917, %v917
      %v923 = vpack.c.bf16 %v914, %v914
      %v924 = vpack.c.bf16 %v918, %v918
      %v929 = vunpack.c.l.b16 %v921
      %v930 = vunpack.c.l.b16 %v922
      %v931 = vunpack.c.l.b16 %v923
      %v932 = vunpack.c.l.b16 %v924
      %v933 = vpack.c.b16 %v930, %v929
      %v934 = vpack.c.b16 %v932, %v931
      %937 = vst [vmem:[#allocation3] sm:$0x33] %v933
      %938 = vst [vmem:[#allocation3 + $0x8] sm:$0x33] %v934
      %939 = vrot.lane.b32.xlu0 %v913, 127
      %v940 = vpop.permute.xlu0 %939
      %941 = vrot.lane.b32.xlu0 %v917, 127
      %v942 = vpop.permute.xlu0 %941
      %943 = vrot.lane.b32.xlu0 %v914, 127
      %v944 = vpop.permute.xlu0 %943
      %945 = vrot.lane.b32.xlu0 %v918, 127
      %v946 = vpop.permute.xlu0 %945
      %vm947 = vcmp.lt.s32.totalorder %v405, 127
      %v948 = vsel %vm947, %v944, %v946
      %v949 = vsel %vm947, %v942, %v944
      %v950 = vsel %vm947, %v940, %v942
      %v951 = vsel %vm947, %v946, %v940
      %v952 = vpack.c.bf16 %v950, %v950
      %v953 = vpack.c.bf16 %v949, %v949
      %v954 = vpack.c.bf16 %v948, %v948
      %v955 = vpack.c.bf16 %v951, %v951
      %v960 = vunpack.c.l.b16 %v952
      %v961 = vunpack.c.l.b16 %v953
      %v962 = vunpack.c.l.b16 %v954
      %v963 = vunpack.c.l.b16 %v955
      %v964 = vpack.c.b16 %v961, %v960
      %v965 = vpack.c.b16 %v963, %v962
      %v966 = vrot.slane %v964, 6
      %v967 = vrot.slane %v965, 6
      %970 = vst [vmem:[#allocation3] sm:$0xcc] %v966
      %971 = vst [vmem:[#allocation3 + $0x8] sm:$0xcc] %v967
      %972 = vrot.lane.b32.xlu0 %v913, 126
      %v973 = vpop.permute.xlu0 %972
      %974 = vrot.lane.b32.xlu0 %v917, 126
      %v975 = vpop.permute.xlu0 %974
      %976 = vrot.lane.b32.xlu0 %v914, 126
      %v977 = vpop.permute.xlu0 %976
      %978 = vrot.lane.b32.xlu0 %v918, 126
      %v979 = vpop.permute.xlu0 %978
      %vm980 = vcmp.lt.s32.totalorder %v405, 126
      %v981 = vsel %vm980, %v977, %v979
      %v982 = vsel %vm980, %v975, %v977
      %v983 = vsel %vm980, %v973, %v975
      %v984 = vsel %vm980, %v979, %v973
      %v985 = vpack.c.bf16 %v983, %v983
      %v986 = vpack.c.bf16 %v982, %v982
      %v987 = vpack.c.bf16 %v981, %v981
      %v988 = vpack.c.bf16 %v984, %v984
      %v993 = vunpack.c.l.b16 %v985
      %v994 = vunpack.c.l.b16 %v986
      %v995 = vunpack.c.l.b16 %v987
      %v996 = vunpack.c.l.b16 %v988
      %v997 = vpack.c.b16 %v994, %v993
      %v998 = vpack.c.b16 %v996, %v995
      %1001 = vst [vmem:[#allocation3 + $0x10] sm:$0x33] %v997
      %1002 = vst [vmem:[#allocation3 + $0x18] sm:$0x33] %v998
      %1003 = vrot.lane.b32.xlu0 %v913, 108
      %v1004 = vpop.permute.xlu0 %1003
      %1005 = vrot.lane.b32.xlu0 %v917, 108
      %v1006 = vpop.permute.xlu0 %1005
      %1007 = vrot.lane.b32.xlu0 %v914, 108
      %v1008 = vpop.permute.xlu0 %1007
      %1009 = vrot.lane.b32.xlu0 %v918, 108
      %v1010 = vpop.permute.xlu0 %1009
      %vm1011 = vcmp.lt.s32.totalorder %v405, 108
      %v1012 = vsel %vm1011, %v1008, %v1010
      %v1013 = vsel %vm1011, %v1006, %v1008
      %v1014 = vsel %vm1011, %v1004, %v1006
      %v1015 = vsel %vm1011, %v1010, %v1004
      %v1016 = vpack.c.bf16 %v1014, %v1014
      %v1017 = vpack.c.bf16 %v1013, %v1013
      %v1018 = vpack.c.bf16 %v1012, %v1012
      %v1019 = vpack.c.bf16 %v1015, %v1015
      %v1024 = vunpack.c.l.b16 %v1016
      %v1025 = vunpack.c.l.b16 %v1017
      %v1026 = vunpack.c.l.b16 %v1018
      %v1027 = vunpack.c.l.b16 %v1019
      %v1028 = vpack.c.b16 %v1025, %v1024
      %v1029 = vpack.c.b16 %v1027, %v1026
      %v1030 = vrot.slane %v1028, 6
      %v1031 = vrot.slane %v1029, 6
      %1034 = vst [vmem:[#allocation3 + $0x10] sm:$0xcc] %v1030
      %1035 = vst [vmem:[#allocation3 + $0x18] sm:$0xcc] %v1031
      %1036 = vrot.lane.b32.xlu0 %v913, 107
      %v1037 = vpop.permute.xlu0 %1036
      %1038 = vrot.lane.b32.xlu0 %v917, 107
      %v1039 = vpop.permute.xlu0 %1038
      %1040 = vrot.lane.b32.xlu0 %v914, 107
      %v1041 = vpop.permute.xlu0 %1040
      %1042 = vrot.lane.b32.xlu0 %v918, 107
      %v1043 = vpop.permute.xlu0 %1042
      %vm1044 = vcmp.lt.s32.totalorder %v405, 107
      %v1045 = vsel %vm1044, %v1041, %v1043
      %v1046 = vsel %vm1044, %v1039, %v1041
      %v1047 = vsel %vm1044, %v1037, %v1039
      %v1048 = vsel %vm1044, %v1043, %v1037
      %v1049 = vpack.c.bf16 %v1047, %v1047
      %v1050 = vpack.c.bf16 %v1046, %v1046
      %v1051 = vpack.c.bf16 %v1045, %v1045
      %v1052 = vpack.c.bf16 %v1048, %v1048
      %v1057 = vunpack.c.l.b16 %v1049
      %v1058 = vunpack.c.l.b16 %v1050
      %v1059 = vunpack.c.l.b16 %v1051
      %v1060 = vunpack.c.l.b16 %v1052
      %v1061 = vpack.c.b16 %v1058, %v1057
      %v1062 = vpack.c.b16 %v1060, %v1059
      %1065 = vst [vmem:[#allocation3 + $0x20] sm:$0x33] %v1061
      %1066 = vst [vmem:[#allocation3 + $0x28] sm:$0x33] %v1062
      %1067 = vrot.lane.b32.xlu0 %v913, 106
      %v1068 = vpop.permute.xlu0 %1067
      %1069 = vrot.lane.b32.xlu0 %v917, 106
      %v1070 = vpop.permute.xlu0 %1069
      %1071 = vrot.lane.b32.xlu0 %v914, 106
      %v1072 = vpop.permute.xlu0 %1071
      %1073 = vrot.lane.b32.xlu0 %v918, 106
      %v1074 = vpop.permute.xlu0 %1073
      %vm1075 = vcmp.lt.s32.totalorder %v405, 106
      %v1076 = vsel %vm1075, %v1072, %v1074
      %v1077 = vsel %vm1075, %v1070, %v1072
      %v1078 = vsel %vm1075, %v1068, %v1070
      %v1079 = vsel %vm1075, %v1074, %v1068
      %v1080 = vpack.c.bf16 %v1078, %v1078
      %v1081 = vpack.c.bf16 %v1077, %v1077
      %v1082 = vpack.c.bf16 %v1076, %v1076
      %v1083 = vpack.c.bf16 %v1079, %v1079
      %v1088 = vunpack.c.l.b16 %v1080
      %v1089 = vunpack.c.l.b16 %v1081
      %v1090 = vunpack.c.l.b16 %v1082
      %v1091 = vunpack.c.l.b16 %v1083
      %v1092 = vpack.c.b16 %v1089, %v1088
      %v1093 = vpack.c.b16 %v1091, %v1090
      %v1094 = vrot.slane %v1092, 6
      %v1095 = vrot.slane %v1093, 6
      %1098 = vst [vmem:[#allocation3 + $0x20] sm:$0xcc] %v1094
      %1099 = vst [vmem:[#allocation3 + $0x28] sm:$0xcc] %v1095
      %1100 = vrot.lane.b32.xlu0 %v913, 88
      %v1101 = vpop.permute.xlu0 %1100
      %1102 = vrot.lane.b32.xlu0 %v917, 88
      %v1103 = vpop.permute.xlu0 %1102
      %1104 = vrot.lane.b32.xlu0 %v914, 88
      %v1105 = vpop.permute.xlu0 %1104
      %1106 = vrot.lane.b32.xlu0 %v918, 88
      %v1107 = vpop.permute.xlu0 %1106
      %vm1108 = vcmp.lt.s32.totalorder %v405, 88
      %v1109 = vsel %vm1108, %v1105, %v1107
      %v1110 = vsel %vm1108, %v1103, %v1105
      %v1111 = vsel %vm1108, %v1101, %v1103
      %v1112 = vsel %vm1108, %v1107, %v1101
      %v1113 = vpack.c.bf16 %v1111, %v1111
      %v1114 = vpack.c.bf16 %v1110, %v1110
      %v1115 = vpack.c.bf16 %v1109, %v1109
      %v1116 = vpack.c.bf16 %v1112, %v1112
      %v1121 = vunpack.c.l.b16 %v1113
      %v1122 = vunpack.c.l.b16 %v1114
      %v1123 = vunpack.c.l.b16 %v1115
      %v1124 = vunpack.c.l.b16 %v1116
      %v1125 = vpack.c.b16 %v1122, %v1121
      %v1126 = vpack.c.b16 %v1124, %v1123
      %1129 = vst [vmem:[#allocation3 + $0x30] sm:$0x33] %v1125
      %1130 = vst [vmem:[#allocation3 + $0x38] sm:$0x33] %v1126
      %1131 = vrot.lane.b32.xlu0 %v913, 87
      %v1132 = vpop.permute.xlu0 %1131
      %1133 = vrot.lane.b32.xlu0 %v917, 87
      %v1134 = vpop.permute.xlu0 %1133
      %1135 = vrot.lane.b32.xlu0 %v914, 87
      %v1136 = vpop.permute.xlu0 %1135
      %1137 = vrot.lane.b32.xlu0 %v918, 87
      %v1138 = vpop.permute.xlu0 %1137
      %vm1139 = vcmp.lt.s32.totalorder %v405, 87
      %v1140 = vsel %vm1139, %v1136, %v1138
      %v1141 = vsel %vm1139, %v1134, %v1136
      %v1142 = vsel %vm1139, %v1132, %v1134
      %v1143 = vsel %vm1139, %v1138, %v1132
      %v1144 = vpack.c.bf16 %v1142, %v1142
      %v1145 = vpack.c.bf16 %v1141, %v1141
      %v1146 = vpack.c.bf16 %v1140, %v1140
      %v1147 = vpack.c.bf16 %v1143, %v1143
      %v1152 = vunpack.c.l.b16 %v1144
      %v1153 = vunpack.c.l.b16 %v1145
      %v1154 = vunpack.c.l.b16 %v1146
      %v1155 = vunpack.c.l.b16 %v1147
      %v1156 = vpack.c.b16 %v1153, %v1152
      %v1157 = vpack.c.b16 %v1155, %v1154
      %v1158 = vrot.slane %v1156, 6
      %v1159 = vrot.slane %v1157, 6
      %1162 = vst [vmem:[#allocation3 + $0x30] sm:$0xcc] %v1158
      %1163 = vst [vmem:[#allocation3 + $0x38] sm:$0xcc] %v1159
      %1164 = vrot.lane.b32.xlu0 %v913, 86
      %v1165 = vpop.permute.xlu0 %1164
      %1166 = vrot.lane.b32.xlu0 %v917, 86
      %v1167 = vpop.permute.xlu0 %1166
      %1168 = vrot.lane.b32.xlu0 %v914, 86
      %v1169 = vpop.permute.xlu0 %1168
      %1170 = vrot.lane.b32.xlu0 %v918, 86
      %v1171 = vpop.permute.xlu0 %1170
      %vm1172 = vcmp.lt.s32.totalorder %v405, 86
      %v1173 = vsel %vm1172, %v1169, %v1171
      %v1174 = vsel %vm1172, %v1167, %v1169
      %v1175 = vsel %vm1172, %v1165, %v1167
      %v1176 = vsel %vm1172, %v1171, %v1165
      %v1177 = vpack.c.bf16 %v1175, %v1175
      %v1178 = vpack.c.bf16 %v1174, %v1174
      %v1179 = vpack.c.bf16 %v1173, %v1173
      %v1180 = vpack.c.bf16 %v1176, %v1176
      %v1185 = vunpack.c.l.b16 %v1177
      %v1186 = vunpack.c.l.b16 %v1178
      %v1187 = vunpack.c.l.b16 %v1179
      %v1188 = vunpack.c.l.b16 %v1180
      %v1189 = vpack.c.b16 %v1186, %v1185
      %v1190 = vpack.c.b16 %v1188, %v1187
      %1193 = vst [vmem:[#allocation3 + $0x40] sm:$0x33] %v1189
      %1194 = vst [vmem:[#allocation3 + $0x48] sm:$0x33] %v1190
      %v1195 = vld [vmem:[%s1] sm:$0xf]
      %v1196 = vld [vmem:[#allocation3] sm:$0xff]
      %v1197 = vld [vmem:[#allocation3 + $0x8] sm:$0xff]
      %v1198 = vld [vmem:[#allocation3 + $0x10] sm:$0xff]
      %v1199 = vld [vmem:[#allocation3 + $0x18] sm:$0xff]
      %v1200 = vld [vmem:[#allocation3 + $0x20] sm:$0xff]
      %v1201 = vld [vmem:[#allocation3 + $0x28] sm:$0xff]
      %v1202 = vld [vmem:[#allocation3 + $0x30] sm:$0xff]
      %v1203 = vld [vmem:[#allocation3 + $0x38] sm:$0xff]
      %v1204 = vld [vmem:[#allocation3 + $0x40] sm:$0x33]
      %v1205 = vld [vmem:[#allocation3 + $0x48] sm:$0x33]
      %v1206 = vld [vmem:[%s2] sm:$0xff]
      %1208 = vset.pattern.permute.xlu0 0
      %1209 = vperm.xlu0 %1208, %v1206
      %v1210 = vpop.permute.xlu0 %1209
      %v1222 = vunpack.c.l.b16 %v1196
      %v1223 = vunpack.c.h.b16 %v1196
      %v1224 = vunpack.c.l.b16 %v1197
      %v1225 = vunpack.c.h.b16 %v1197
      %v1226 = vunpack.c.l.b16 %v1198
      %v1227 = vunpack.c.h.b16 %v1198
      %v1228 = vunpack.c.l.b16 %v1199
      %v1229 = vunpack.c.h.b16 %v1199
      %v1230 = vunpack.c.l.b16 %v1200
      %v1231 = vunpack.c.h.b16 %v1200
      %v1232 = vunpack.c.l.b16 %v1201
      %v1233 = vunpack.c.h.b16 %v1201
      %v1234 = vunpack.c.l.b16 %v1202
      %v1235 = vunpack.c.h.b16 %v1202
      %v1236 = vunpack.c.l.b16 %v1203
      %v1237 = vunpack.c.h.b16 %v1203
      %v1238 = vunpack.c.l.b16 %v1204
      %v1239 = vunpack.c.h.b16 %v1204
      %v1240 = vunpack.c.l.b16 %v1205
      %v1241 = vunpack.c.h.b16 %v1205
      %v1242 = vpack.c.b16 %v1226, %v1222
      %v1243 = vpack.c.b16 %v1227, %v1223
      %v1244 = vpack.c.b16 %v1228, %v1224
      %v1245 = vpack.c.b16 %v1229, %v1225
      %v1246 = vpack.c.b16 %v1234, %v1230
      %v1247 = vpack.c.b16 %v1235, %v1231
      %v1248 = vpack.c.b16 %v1236, %v1232
      %v1249 = vpack.c.b16 %v1237, %v1233
      %v1250 = vpack.c.b16 %v1238, %v1238
      %v1251 = vpack.c.b16 %v1239, %v1239
      %v1252 = vpack.c.b16 %v1240, %v1240
      %v1253 = vpack.c.b16 %v1241, %v1241
      %vm1262 = vcmask 293888
      %v1264 = vsel %vm1262, %v1195, 0
      %vm1266 = vcmask 1041408
      %v1268 = vsel %vm1266, %v1250, 0
      %v1271 = vsel %vm1266, %v1251, 0
      %v1274 = vsel %vm1266, %v1252, 0
      %v1277 = vsel %vm1266, %v1253, 0
      %1279 = vmatprep.subr.bf16.mxu0 %v1243
      %1280 = vmatpush1.bf16.msra.mxu0 %v1242
      %1281 = vmatprep.subr.bf16.mxu0 %v1247
      %1282 = vmatpush1.bf16.msra.mxu0 %v1246
      %1283 = vmatprep.subr.bf16.mxu0 %v1271
      %1284 = vmatpush1.bf16.msra.mxu0 %v1268
      %1285 = vmatprep.subr.bf16.mxu0 0
      %1286 = vmatpush1.bf16.msra.mxu0 0
      %1287 = vmatprep.subr.bf16.mxu0 0
      %1288 = vmatpush1.bf16.msra.mxu0 0
      %1289 = vmatprep.subr.bf16.mxu0 0
      %1290 = vmatpush1.bf16.msra.mxu0 0
      %1291 = vmatprep.subr.bf16.mxu0 0
      %1292 = vmatpush1.bf16.msra.mxu0 0
      %1293 = vmatprep.subr.bf16.mxu0 0
      %1294 = vmatpush1.bf16.msra.mxu0 0
      %1295 = vmatprep.subr.bf16.mxu0 0
      %1296 = vmatpush1.bf16.msra.mxu0 0
      %1297 = vmatprep.subr.bf16.mxu0 0
      %1298 = vmatpush1.bf16.msra.mxu0 0
      %1299 = vmatprep.subr.bf16.mxu0 0
      %1300 = vmatpush1.bf16.msra.mxu0 0
      %1301 = vmatprep.subr.bf16.mxu0 0
      %1302 = vmatpush1.bf16.msra.mxu0 0
      %1303 = vmatprep.subr.bf16.mxu0 0
      %1304 = vmatpush1.bf16.msra.mxu0 0
      %1305 = vmatprep.subr.bf16.mxu0 0
      %1306 = vmatpush1.bf16.msra.mxu0 0
      %1307 = vmatprep.subr.bf16.mxu0 0
      %1308 = vmatpush1.bf16.msra.mxu0 0
      %1309 = vmatprep.subr.bf16.mxu0 0
      %1310 = vmatpush1.bf16.msra.mxu0 0
      %1311 = vmatprep.mubr.bf16.mxu0 0
      %1312 = vmatmul.mubr.bf16.gmra.mrb[0].mxu0 %v1264
      %v1313 = vpop.f32.mrb[0].mxu0
      %v1314 = vadd.f32 %v1210, %v1313
      %v1315 = vpop.f32.mrb[0].mxu0
      %v1316 = vadd.f32 %v1210, %v1315
      %v1317 = vpop.f32.mrb[0].mxu0
      %v1318 = vpop.f32.mrb[0].mxu0
      %1319 = vdwg.mxu0
      %1320 = vmatprep.subr.bf16.mxu0 %v1245
      %1321 = vmatpush1.bf16.msra.mxu0 %v1244
      %1322 = vmatprep.subr.bf16.mxu0 %v1249
      %1323 = vmatpush1.bf16.msra.mxu0 %v1248
      %1324 = vmatprep.subr.bf16.mxu0 %v1277
      %1325 = vmatpush1.bf16.msra.mxu0 %v1274
      %1326 = vmatprep.subr.bf16.mxu0 0
      %1327 = vmatpush1.bf16.msra.mxu0 0
      %1328 = vmatprep.subr.bf16.mxu0 0
      %1329 = vmatpush1.bf16.msra.mxu0 0
      %1330 = vmatprep.subr.bf16.mxu0 0
      %1331 = vmatpush1.bf16.msra.mxu0 0
      %1332 = vmatprep.subr.bf16.mxu0 0
      %1333 = vmatpush1.bf16.msra.mxu0 0
      %1334 = vmatprep.subr.bf16.mxu0 0
      %1335 = vmatpush1.bf16.msra.mxu0 0
      %1336 = vmatprep.subr.bf16.mxu0 0
      %1337 = vmatpush1.bf16.msra.mxu0 0
      %1338 = vmatprep.subr.bf16.mxu0 0
      %1339 = vmatpush1.bf16.msra.mxu0 0
      %1340 = vmatprep.subr.bf16.mxu0 0
      %1341 = vmatpush1.bf16.msra.mxu0 0
      %1342 = vmatprep.subr.bf16.mxu0 0
      %1343 = vmatpush1.bf16.msra.mxu0 0
      %1344 = vmatprep.subr.bf16.mxu0 0
      %1345 = vmatpush1.bf16.msra.mxu0 0
      %1346 = vmatprep.subr.bf16.mxu0 0
      %1347 = vmatpush1.bf16.msra.mxu0 0
      %1348 = vmatprep.subr.bf16.mxu0 0
      %1349 = vmatpush1.bf16.msra.mxu0 0
      %1350 = vmatprep.subr.bf16.mxu0 0
      %1351 = vmatpush1.bf16.msra.mxu0 0
      %1352 = vmatprep.mubr.bf16.mxu0 0
      %1353 = vmatmul.mubr.bf16.gmra.mrb[0].mxu0 %v1264
      %v1354 = vpop.f32.mrb[0].mxu0
      %v1355 = vadd.f32 %v1210, %v1354
      %v1356 = vpop.f32.mrb[0].mxu0
      %v1357 = vadd.f32 %v1210, %v1356
      %v1358 = vpop.f32.mrb[0].mxu0
      %v1359 = vpop.f32.mrb[0].mxu0
      %1360 = vdwg.mxu0
      %v1361 = vmax.f32 %v1314, 0.0
      %v1362 = vmax.f32 %v1316, 0.0
      %v1363 = vmax.f32 %v1355, 0.0
      %v1364 = vmax.f32 %v1357, 0.0
      %v1365 = vsel %vm657, 1, 0
      %v1366 = vsel %vm658, 1, 0
      %v1367 = vsel %vm659, 1, 0
      %v1368 = vsel %vm660, 1, 0
      %vm1369 = vcmp.eq.s32.totalorder %v1365, 1
      %vm1370 = vcmp.eq.s32.totalorder %v1366, 1
      %vm1371 = vcmp.eq.s32.totalorder %v1367, 1
      %vm1372 = vcmp.eq.s32.totalorder %v1368, 1
      %v1373 = vsel %vm1369, %v1361, 0.0
      %v1374 = vsel %vm1370, %v1362, 0.0
      %v1375 = vsel %vm1371, %v1363, 0.0
      %v1376 = vsel %vm1372, %v1364, 0.0
      %v1377 = vpack.c.bf16 %v1373, %v1373
      %v1378 = vpack.c.bf16 %v1374, %v1374
      %v1379 = vpack.c.bf16 %v1375, %v1375
      %v1380 = vpack.c.bf16 %v1376, %v1376
      %v1385 = vunpack.c.l.b16 %v1377
      %v1386 = vunpack.c.l.b16 %v1378
      %v1387 = vunpack.c.l.b16 %v1379
      %v1388 = vunpack.c.l.b16 %v1380
      %v1389 = vpack.c.b16 %v1386, %v1385
      %v1390 = vpack.c.b16 %v1388, %v1387
      %1393 = vst [vmem:[#allocation3] sm:$0xff] %v1389
      %1394 = vst [vmem:[#allocation3 + $0x8] sm:$0xff] %v1390
      %1395 = vrot.lane.b32.xlu0 %v1373, 127
      %v1396 = vpop.permute.xlu0 %1395
      %1397 = vrot.lane.b32.xlu0 %v1374, 127
      %v1398 = vpop.permute.xlu0 %1397
      %1399 = vrot.lane.b32.xlu0 %v1375, 127
      %v1400 = vpop.permute.xlu0 %1399
      %1401 = vrot.lane.b32.xlu0 %v1376, 127
      %v1402 = vpop.permute.xlu0 %1401
      %v1403 = vsel %vm947, %v1400, %v1402
      %v1404 = vsel %vm947, %v1398, %v1400
      %v1405 = vsel %vm947, %v1396, %v1398
      %v1406 = vsel %vm947, %v1402, %v1396
      %v1407 = vpack.c.bf16 %v1405, %v1405
      %v1408 = vpack.c.bf16 %v1404, %v1404
      %v1409 = vpack.c.bf16 %v1403, %v1403
      %v1410 = vpack.c.bf16 %v1406, %v1406
      %v1415 = vunpack.c.l.b16 %v1407
      %v1416 = vunpack.c.l.b16 %v1408
      %v1417 = vunpack.c.l.b16 %v1409
      %v1418 = vunpack.c.l.b16 %v1410
      %v1419 = vpack.c.b16 %v1416, %v1415
      %v1420 = vpack.c.b16 %v1418, %v1417
      %1423 = vst [vmem:[#allocation3 + $0x10] sm:$0xff] %v1419
      %1424 = vst [vmem:[#allocation3 + $0x18] sm:$0xff] %v1420
      %1425 = vrot.lane.b32.xlu0 %v1373, 126
      %v1426 = vpop.permute.xlu0 %1425
      %1427 = vrot.lane.b32.xlu0 %v1374, 126
      %v1428 = vpop.permute.xlu0 %1427
      %1429 = vrot.lane.b32.xlu0 %v1375, 126
      %v1430 = vpop.permute.xlu0 %1429
      %1431 = vrot.lane.b32.xlu0 %v1376, 126
      %v1432 = vpop.permute.xlu0 %1431
      %v1433 = vsel %vm980, %v1430, %v1432
      %v1434 = vsel %vm980, %v1428, %v1430
      %v1435 = vsel %vm980, %v1426, %v1428
      %v1436 = vsel %vm980, %v1432, %v1426
      %v1437 = vpack.c.bf16 %v1435, %v1435
      %v1438 = vpack.c.bf16 %v1434, %v1434
      %v1439 = vpack.c.bf16 %v1433, %v1433
      %v1440 = vpack.c.bf16 %v1436, %v1436
      %v1445 = vunpack.c.l.b16 %v1437
      %v1446 = vunpack.c.l.b16 %v1438
      %v1447 = vunpack.c.l.b16 %v1439
      %v1448 = vunpack.c.l.b16 %v1440
      %v1449 = vpack.c.b16 %v1446, %v1445
      %v1450 = vpack.c.b16 %v1448, %v1447
      %1453 = vst [vmem:[#allocation3 + $0x20] sm:$0xff] %v1449
      %1454 = vst [vmem:[#allocation3 + $0x28] sm:$0xff] %v1450
      %1455 = vrot.lane.b32.xlu0 %v1373, 108
      %v1456 = vpop.permute.xlu0 %1455
      %1457 = vrot.lane.b32.xlu0 %v1374, 108
      %v1458 = vpop.permute.xlu0 %1457
      %1459 = vrot.lane.b32.xlu0 %v1375, 108
      %v1460 = vpop.permute.xlu0 %1459
      %1461 = vrot.lane.b32.xlu0 %v1376, 108
      %v1462 = vpop.permute.xlu0 %1461
      %v1463 = vsel %vm1011, %v1460, %v1462
      %v1464 = vsel %vm1011, %v1458, %v1460
      %v1465 = vsel %vm1011, %v1456, %v1458
      %v1466 = vsel %vm1011, %v1462, %v1456
      %v1467 = vpack.c.bf16 %v1465, %v1465
      %v1468 = vpack.c.bf16 %v1464, %v1464
      %v1469 = vpack.c.bf16 %v1463, %v1463
      %v1470 = vpack.c.bf16 %v1466, %v1466
      %v1475 = vunpack.c.l.b16 %v1467
      %v1476 = vunpack.c.l.b16 %v1468
      %v1477 = vunpack.c.l.b16 %v1469
      %v1478 = vunpack.c.l.b16 %v1470
      %v1479 = vpack.c.b16 %v1476, %v1475
      %v1480 = vpack.c.b16 %v1478, %v1477
      %1483 = vst [vmem:[#allocation3 + $0x30] sm:$0xff] %v1479
      %1484 = vst [vmem:[#allocation3 + $0x38] sm:$0xff] %v1480
      %1485 = vrot.lane.b32.xlu0 %v1373, 107
      %v1486 = vpop.permute.xlu0 %1485
      %1487 = vrot.lane.b32.xlu0 %v1374, 107
      %v1488 = vpop.permute.xlu0 %1487
      %1489 = vrot.lane.b32.xlu0 %v1375, 107
      %v1490 = vpop.permute.xlu0 %1489
      %1491 = vrot.lane.b32.xlu0 %v1376, 107
      %v1492 = vpop.permute.xlu0 %1491
      %v1493 = vsel %vm1044, %v1490, %v1492
      %v1494 = vsel %vm1044, %v1488, %v1490
      %v1495 = vsel %vm1044, %v1486, %v1488
      %v1496 = vsel %vm1044, %v1492, %v1486
      %v1497 = vpack.c.bf16 %v1495, %v1495
      %v1498 = vpack.c.bf16 %v1494, %v1494
      %v1499 = vpack.c.bf16 %v1493, %v1493
      %v1500 = vpack.c.bf16 %v1496, %v1496
      %v1505 = vunpack.c.l.b16 %v1497
      %v1506 = vunpack.c.l.b16 %v1498
      %v1507 = vunpack.c.l.b16 %v1499
      %v1508 = vunpack.c.l.b16 %v1500
      %v1509 = vpack.c.b16 %v1506, %v1505
      %v1510 = vpack.c.b16 %v1508, %v1507
      %1513 = vst [vmem:[#allocation3 + $0x40] sm:$0xff] %v1509
      %1514 = vst [vmem:[#allocation3 + $0x48] sm:$0xff] %v1510
      %1515 = vrot.lane.b32.xlu0 %v1373, 106
      %v1516 = vpop.permute.xlu0 %1515
      %1517 = vrot.lane.b32.xlu0 %v1374, 106
      %v1518 = vpop.permute.xlu0 %1517
      %1519 = vrot.lane.b32.xlu0 %v1375, 106
      %v1520 = vpop.permute.xlu0 %1519
      %1521 = vrot.lane.b32.xlu0 %v1376, 106
      %v1522 = vpop.permute.xlu0 %1521
      %v1523 = vsel %vm1075, %v1520, %v1522
      %v1524 = vsel %vm1075, %v1518, %v1520
      %v1525 = vsel %vm1075, %v1516, %v1518
      %v1526 = vsel %vm1075, %v1522, %v1516
      %v1527 = vpack.c.bf16 %v1525, %v1525
      %v1528 = vpack.c.bf16 %v1524, %v1524
      %v1529 = vpack.c.bf16 %v1523, %v1523
      %v1530 = vpack.c.bf16 %v1526, %v1526
      %v1535 = vunpack.c.l.b16 %v1527
      %v1536 = vunpack.c.l.b16 %v1528
      %v1537 = vunpack.c.l.b16 %v1529
      %v1538 = vunpack.c.l.b16 %v1530
      %v1539 = vpack.c.b16 %v1536, %v1535
      %v1540 = vpack.c.b16 %v1538, %v1537
      %1543 = vst [vmem:[#allocation3 + $0x50] sm:$0xff] %v1539
      %1544 = vst [vmem:[#allocation3 + $0x58] sm:$0xff] %v1540
      %1545 = vrot.lane.b32.xlu0 %v1373, 88
      %v1546 = vpop.permute.xlu0 %1545
      %1547 = vrot.lane.b32.xlu0 %v1374, 88
      %v1548 = vpop.permute.xlu0 %1547
      %1549 = vrot.lane.b32.xlu0 %v1375, 88
      %v1550 = vpop.permute.xlu0 %1549
      %1551 = vrot.lane.b32.xlu0 %v1376, 88
      %v1552 = vpop.permute.xlu0 %1551
      %v1553 = vsel %vm1108, %v1550, %v1552
      %v1554 = vsel %vm1108, %v1548, %v1550
      %v1555 = vsel %vm1108, %v1546, %v1548
      %v1556 = vsel %vm1108, %v1552, %v1546
      %v1557 = vpack.c.bf16 %v1555, %v1555
      %v1558 = vpack.c.bf16 %v1554, %v1554
      %v1559 = vpack.c.bf16 %v1553, %v1553
      %v1560 = vpack.c.bf16 %v1556, %v1556
      %v1565 = vunpack.c.l.b16 %v1557
      %v1566 = vunpack.c.l.b16 %v1558
      %v1567 = vunpack.c.l.b16 %v1559
      %v1568 = vunpack.c.l.b16 %v1560
      %v1569 = vpack.c.b16 %v1566, %v1565
      %v1570 = vpack.c.b16 %v1568, %v1567
      %1573 = vst [vmem:[#allocation3 + $0x60] sm:$0xff] %v1569
      %1574 = vst [vmem:[#allocation3 + $0x68] sm:$0xff] %v1570
      %1575 = vrot.lane.b32.xlu0 %v1373, 87
      %v1576 = vpop.permute.xlu0 %1575
      %1577 = vrot.lane.b32.xlu0 %v1374, 87
      %v1578 = vpop.permute.xlu0 %1577
      %1579 = vrot.lane.b32.xlu0 %v1375, 87
      %v1580 = vpop.permute.xlu0 %1579
      %1581 = vrot.lane.b32.xlu0 %v1376, 87
      %v1582 = vpop.permute.xlu0 %1581
      %v1583 = vsel %vm1139, %v1580, %v1582
      %v1584 = vsel %vm1139, %v1578, %v1580
      %v1585 = vsel %vm1139, %v1576, %v1578
      %v1586 = vsel %vm1139, %v1582, %v1576
      %v1587 = vpack.c.bf16 %v1585, %v1585
      %v1588 = vpack.c.bf16 %v1584, %v1584
      %v1589 = vpack.c.bf16 %v1583, %v1583
      %v1590 = vpack.c.bf16 %v1586, %v1586
      %v1595 = vunpack.c.l.b16 %v1587
      %v1596 = vunpack.c.l.b16 %v1588
      %v1597 = vunpack.c.l.b16 %v1589
      %v1598 = vunpack.c.l.b16 %v1590
      %v1599 = vpack.c.b16 %v1596, %v1595
      %v1600 = vpack.c.b16 %v1598, %v1597
      %1603 = vst [vmem:[#allocation3 + $0x70] sm:$0xff] %v1599
      %1604 = vst [vmem:[#allocation3 + $0x78] sm:$0xff] %v1600
      %1605 = vrot.lane.b32.xlu0 %v1373, 86
      %v1606 = vpop.permute.xlu0 %1605
      %1607 = vrot.lane.b32.xlu0 %v1374, 86
      %v1608 = vpop.permute.xlu0 %1607
      %1609 = vrot.lane.b32.xlu0 %v1375, 86
      %v1610 = vpop.permute.xlu0 %1609
      %1611 = vrot.lane.b32.xlu0 %v1376, 86
      %v1612 = vpop.permute.xlu0 %1611
      %v1613 = vsel %vm1172, %v1610, %v1612
      %v1614 = vsel %vm1172, %v1608, %v1610
      %v1615 = vsel %vm1172, %v1606, %v1608
      %v1616 = vsel %vm1172, %v1612, %v1606
      %v1617 = vpack.c.bf16 %v1615, %v1615
      %v1618 = vpack.c.bf16 %v1614, %v1614
      %v1619 = vpack.c.bf16 %v1613, %v1613
      %v1620 = vpack.c.bf16 %v1616, %v1616
      %v1625 = vunpack.c.l.b16 %v1617
      %v1626 = vunpack.c.l.b16 %v1618
      %v1627 = vunpack.c.l.b16 %v1619
      %v1628 = vunpack.c.l.b16 %v1620
      %v1629 = vpack.c.b16 %v1626, %v1625
      %v1630 = vpack.c.b16 %v1628, %v1627
      %1633 = vst [vmem:[#allocation3 + $0x80] sm:$0xff] %v1629
      %1634 = vst [vmem:[#allocation3 + $0x88] sm:$0xff] %v1630
      %v1635 = vld [vmem:[%s3] sm:$0xf]
      %v1636 = vld [vmem:[#allocation3] sm:$0xff]
      %v1637 = vld [vmem:[#allocation3 + $0x8] sm:$0xff]
      %v1638 = vld [vmem:[#allocation3 + $0x10] sm:$0xff]
      %v1639 = vld [vmem:[#allocation3 + $0x18] sm:$0xff]
      %v1640 = vld [vmem:[#allocation3 + $0x20] sm:$0xff]
      %v1641 = vld [vmem:[#allocation3 + $0x28] sm:$0xff]
      %v1642 = vld [vmem:[#allocation3 + $0x30] sm:$0xff]
      %v1643 = vld [vmem:[#allocation3 + $0x38] sm:$0xff]
      %v1644 = vld [vmem:[#allocation3 + $0x40] sm:$0xff]
      %v1645 = vld [vmem:[#allocation3 + $0x48] sm:$0xff]
      %v1646 = vld [vmem:[#allocation3 + $0x50] sm:$0xff]
      %v1647 = vld [vmem:[#allocation3 + $0x58] sm:$0xff]
      %v1648 = vld [vmem:[#allocation3 + $0x60] sm:$0xff]
      %v1649 = vld [vmem:[#allocation3 + $0x68] sm:$0xff]
      %v1650 = vld [vmem:[#allocation3 + $0x70] sm:$0xff]
      %v1651 = vld [vmem:[#allocation3 + $0x78] sm:$0xff]
      %v1652 = vld [vmem:[#allocation3 + $0x80] sm:$0xff]
      %v1653 = vld [vmem:[#allocation3 + $0x88] sm:$0xff]
      %v1654 = vld [vmem:[%s4] sm:$0xff]
      %1656 = vset.pattern.permute.xlu0 0
      %1657 = vperm.xlu0 %1656, %v1654
      %v1658 = vpop.permute.xlu0 %1657
      %v1678 = vunpack.c.l.b16 %v1636
      %v1679 = vunpack.c.h.b16 %v1636
      %v1680 = vunpack.c.l.b16 %v1637
      %v1681 = vunpack.c.h.b16 %v1637
      %v1682 = vunpack.c.l.b16 %v1638
      %v1683 = vunpack.c.h.b16 %v1638
      %v1684 = vunpack.c.l.b16 %v1639
      %v1685 = vunpack.c.h.b16 %v1639
      %v1686 = vunpack.c.l.b16 %v1640
      %v1687 = vunpack.c.h.b16 %v1640
      %v1688 = vunpack.c.l.b16 %v1641
      %v1689 = vunpack.c.h.b16 %v1641
      %v1690 = vunpack.c.l.b16 %v1642
      %v1691 = vunpack.c.h.b16 %v1642
      %v1692 = vunpack.c.l.b16 %v1643
      %v1693 = vunpack.c.h.b16 %v1643
      %v1694 = vunpack.c.l.b16 %v1644
      %v1695 = vunpack.c.h.b16 %v1644
      %v1696 = vunpack.c.l.b16 %v1645
      %v1697 = vunpack.c.h.b16 %v1645
      %v1698 = vunpack.c.l.b16 %v1646
      %v1699 = vunpack.c.h.b16 %v1646
      %v1700 = vunpack.c.l.b16 %v1647
      %v1701 = vunpack.c.h.b16 %v1647
      %v1702 = vunpack.c.l.b16 %v1648
      %v1703 = vunpack.c.h.b16 %v1648
      %v1704 = vunpack.c.l.b16 %v1649
      %v1705 = vunpack.c.h.b16 %v1649
      %v1706 = vunpack.c.l.b16 %v1650
      %v1707 = vunpack.c.h.b16 %v1650
      %v1708 = vunpack.c.l.b16 %v1651
      %v1709 = vunpack.c.h.b16 %v1651
      %v1710 = vunpack.c.l.b16 %v1652
      %v1711 = vunpack.c.h.b16 %v1652
      %v1712 = vunpack.c.l.b16 %v1653
      %v1713 = vunpack.c.h.b16 %v1653
      %v1714 = vpack.c.b16 %v1682, %v1678
      %v1715 = vpack.c.b16 %v1683, %v1679
      %v1716 = vpack.c.b16 %v1684, %v1680
      %v1717 = vpack.c.b16 %v1685, %v1681
      %v1718 = vpack.c.b16 %v1690, %v1686
      %v1719 = vpack.c.b16 %v1691, %v1687
      %v1720 = vpack.c.b16 %v1692, %v1688
      %v1721 = vpack.c.b16 %v1693, %v1689
      %v1722 = vpack.c.b16 %v1698, %v1694
      %v1723 = vpack.c.b16 %v1699, %v1695
      %v1724 = vpack.c.b16 %v1700, %v1696
      %v1725 = vpack.c.b16 %v1701, %v1697
      %v1726 = vpack.c.b16 %v1706, %v1702
      %v1727 = vpack.c.b16 %v1707, %v1703
      %v1728 = vpack.c.b16 %v1708, %v1704
      %v1729 = vpack.c.b16 %v1709, %v1705
      %v1730 = vpack.c.b16 %v1710, %v1710
      %v1731 = vpack.c.b16 %v1711, %v1711
      %v1732 = vpack.c.b16 %v1712, %v1712
      %v1733 = vpack.c.b16 %v1713, %v1713
      %vm1750 = vcmask 588800
      %v1752 = vsel %vm1750, %v1635, 0
      %vm1754 = vcmask 1043456
      %v1756 = vsel %vm1754, %v1730, 0
      %v1759 = vsel %vm1754, %v1731, 0
      %v1762 = vsel %vm1754, %v1732, 0
      %v1765 = vsel %vm1754, %v1733, 0
      %1767 = vmatprep.subr.bf16.mxu0 %v1715
      %1768 = vmatpush1.bf16.msra.mxu0 %v1714
      %1769 = vmatprep.subr.bf16.mxu0 %v1719
      %1770 = vmatpush1.bf16.msra.mxu0 %v1718
      %1771 = vmatprep.subr.bf16.mxu0 %v1723
      %1772 = vmatpush1.bf16.msra.mxu0 %v1722
      %1773 = vmatprep.subr.bf16.mxu0 %v1727
      %1774 = vmatpush1.bf16.msra.mxu0 %v1726
      %1775 = vmatprep.subr.bf16.mxu0 %v1759
      %1776 = vmatpush1.bf16.msra.mxu0 %v1756
      %1777 = vmatprep.subr.bf16.mxu0 0
      %1778 = vmatpush1.bf16.msra.mxu0 0
      %1779 = vmatprep.subr.bf16.mxu0 0
      %1780 = vmatpush1.bf16.msra.mxu0 0
      %1781 = vmatprep.subr.bf16.mxu0 0
      %1782 = vmatpush1.bf16.msra.mxu0 0
      %1783 = vmatprep.subr.bf16.mxu0 0
      %1784 = vmatpush1.bf16.msra.mxu0 0
      %1785 = vmatprep.subr.bf16.mxu0 0
      %1786 = vmatpush1.bf16.msra.mxu0 0
      %1787 = vmatprep.subr.bf16.mxu0 0
      %1788 = vmatpush1.bf16.msra.mxu0 0
      %1789 = vmatprep.subr.bf16.mxu0 0
      %1790 = vmatpush1.bf16.msra.mxu0 0
      %1791 = vmatprep.subr.bf16.mxu0 0
      %1792 = vmatpush1.bf16.msra.mxu0 0
      %1793 = vmatprep.subr.bf16.mxu0 0
      %1794 = vmatpush1.bf16.msra.mxu0 0
      %1795 = vmatprep.subr.bf16.mxu0 0
      %1796 = vmatpush1.bf16.msra.mxu0 0
      %1797 = vmatprep.subr.bf16.mxu0 0
      %1798 = vmatpush1.bf16.msra.mxu0 0
      %1799 = vmatprep.mubr.bf16.mxu0 0
      %1800 = vmatmul.mubr.bf16.gmra.mrb[0].mxu0 %v1752
      %v1801 = vpop.f32.mrb[0].mxu0
      %v1802 = vadd.f32 %v1658, %v1801
      %v1803 = vpop.f32.mrb[0].mxu0
      %v1804 = vadd.f32 %v1658, %v1803
      %v1805 = vpop.f32.mrb[0].mxu0
      %v1806 = vpop.f32.mrb[0].mxu0
      %1807 = vdwg.mxu0
      %1808 = vmatprep.subr.bf16.mxu0 %v1717
      %1809 = vmatpush1.bf16.msra.mxu0 %v1716
      %1810 = vmatprep.subr.bf16.mxu0 %v1721
      %1811 = vmatpush1.bf16.msra.mxu0 %v1720
      %1812 = vmatprep.subr.bf16.mxu0 %v1725
      %1813 = vmatpush1.bf16.msra.mxu0 %v1724
      %1814 = vmatprep.subr.bf16.mxu0 %v1729
      %1815 = vmatpush1.bf16.msra.mxu0 %v1728
      %1816 = vmatprep.subr.bf16.mxu0 %v1765
      %1817 = vmatpush1.bf16.msra.mxu0 %v1762
      %1818 = vmatprep.subr.bf16.mxu0 0
      %1819 = vmatpush1.bf16.msra.mxu0 0
      %1820 = vmatprep.subr.bf16.mxu0 0
      %1821 = vmatpush1.bf16.msra.mxu0 0
      %1822 = vmatprep.subr.bf16.mxu0 0
      %1823 = vmatpush1.bf16.msra.mxu0 0
      %1824 = vmatprep.subr.bf16.mxu0 0
      %1825 = vmatpush1.bf16.msra.mxu0 0
      %1826 = vmatprep.subr.bf16.mxu0 0
      %1827 = vmatpush1.bf16.msra.mxu0 0
      %1828 = vmatprep.subr.bf16.mxu0 0
      %1829 = vmatpush1.bf16.msra.mxu0 0
      %1830 = vmatprep.subr.bf16.mxu0 0
      %1831 = vmatpush1.bf16.msra.mxu0 0
      %1832 = vmatprep.subr.bf16.mxu0 0
      %1833 = vmatpush1.bf16.msra.mxu0 0
      %1834 = vmatprep.subr.bf16.mxu0 0
      %1835 = vmatpush1.bf16.msra.mxu0 0
      %1836 = vmatprep.subr.bf16.mxu0 0
      %1837 = vmatpush1.bf16.msra.mxu0 0
      %1838 = vmatprep.subr.bf16.mxu0 0
      %1839 = vmatpush1.bf16.msra.mxu0 0
      %1840 = vmatprep.mubr.bf16.mxu0 0
      %1841 = vmatmul.mubr.bf16.gmra.mrb[0].mxu0 %v1752
      %v1842 = vpop.f32.mrb[0].mxu0
      %v1843 = vadd.f32 %v1658, %v1842
      %v1844 = vpop.f32.mrb[0].mxu0
      %v1845 = vadd.f32 %v1658, %v1844
      %v1846 = vpop.f32.mrb[0].mxu0
      %v1847 = vpop.f32.mrb[0].mxu0
      %1848 = vdwg.mxu0
      %v1849 = vmax.f32 %v1802, 0.0
      %v1850 = vmax.f32 %v1804, 0.0
      %v1851 = vmax.f32 %v1843, 0.0
      %v1852 = vmax.f32 %v1845, 0.0
      %v1853 = vsel %vm909, 1, 0
      %v1854 = vsel %vm910, 1, 0
      %v1855 = vsel %vm911, 1, 0
      %v1856 = vsel %vm912, 1, 0
      %vm1857 = vcmp.eq.s32.totalorder %v1853, 1
      %vm1858 = vcmp.eq.s32.totalorder %v1854, 1
      %vm1859 = vcmp.eq.s32.totalorder %v1855, 1
      %vm1860 = vcmp.eq.s32.totalorder %v1856, 1
      %v1861 = vsel %vm1857, %v1849, 0.0
      %v1862 = vsel %vm1858, %v1850, 0.0
      %v1863 = vsel %vm1859, %v1851, 0.0
      %v1864 = vsel %vm1860, %v1852, 0.0
      %v1865 = vpack.c.bf16 %v1861, %v1861
      %v1866 = vpack.c.bf16 %v1862, %v1862
      %v1867 = vpack.c.bf16 %v1863, %v1863
      %v1868 = vpack.c.bf16 %v1864, %v1864
      %v1873 = vunpack.c.l.b16 %v1865
      %v1874 = vunpack.c.l.b16 %v1866
      %v1875 = vunpack.c.l.b16 %v1867
      %v1876 = vunpack.c.l.b16 %v1868
      %v1877 = vpack.c.b16 %v1874, %v1873
      %v1878 = vpack.c.b16 %v1876, %v1875
      %1881 = vst [vmem:[#allocation3] sm:$0xff] %v1877
      %1882 = vst [vmem:[#allocation3 + $0x8] sm:$0xff] %v1878
      %1883 = vrot.lane.b32.xlu0 %v1861, 127
      %v1884 = vpop.permute.xlu0 %1883
      %1885 = vrot.lane.b32.xlu0 %v1862, 127
      %v1886 = vpop.permute.xlu0 %1885
      %1887 = vrot.lane.b32.xlu0 %v1863, 127
      %v1888 = vpop.permute.xlu0 %1887
      %1889 = vrot.lane.b32.xlu0 %v1864, 127
      %v1890 = vpop.permute.xlu0 %1889
      %v1891 = vsel %vm947, %v1888, %v1890
      %v1892 = vsel %vm947, %v1886, %v1888
      %v1893 = vsel %vm947, %v1884, %v1886
      %v1894 = vsel %vm947, %v1890, %v1884
      %v1895 = vpack.c.bf16 %v1893, %v1893
      %v1896 = vpack.c.bf16 %v1892, %v1892
      %v1897 = vpack.c.bf16 %v1891, %v1891
      %v1898 = vpack.c.bf16 %v1894, %v1894
      %v1903 = vunpack.c.l.b16 %v1895
      %v1904 = vunpack.c.l.b16 %v1896
      %v1905 = vunpack.c.l.b16 %v1897
      %v1906 = vunpack.c.l.b16 %v1898
      %v1907 = vpack.c.b16 %v1904, %v1903
      %v1908 = vpack.c.b16 %v1906, %v1905
      %1911 = vst [vmem:[#allocation3 + $0x10] sm:$0xff] %v1907
      %1912 = vst [vmem:[#allocation3 + $0x18] sm:$0xff] %v1908
      %1913 = vrot.lane.b32.xlu0 %v1861, 126
      %v1914 = vpop.permute.xlu0 %1913
      %1915 = vrot.lane.b32.xlu0 %v1862, 126
      %v1916 = vpop.permute.xlu0 %1915
      %1917 = vrot.lane.b32.xlu0 %v1863, 126
      %v1918 = vpop.permute.xlu0 %1917
      %1919 = vrot.lane.b32.xlu0 %v1864, 126
      %v1920 = vpop.permute.xlu0 %1919
      %v1921 = vsel %vm980, %v1918, %v1920
      %v1922 = vsel %vm980, %v1916, %v1918
      %v1923 = vsel %vm980, %v1914, %v1916
      %v1924 = vsel %vm980, %v1920, %v1914
      %v1925 = vpack.c.bf16 %v1923, %v1923
      %v1926 = vpack.c.bf16 %v1922, %v1922
      %v1927 = vpack.c.bf16 %v1921, %v1921
      %v1928 = vpack.c.bf16 %v1924, %v1924
      %v1933 = vunpack.c.l.b16 %v1925
      %v1934 = vunpack.c.l.b16 %v1926
      %v1935 = vunpack.c.l.b16 %v1927
      %v1936 = vunpack.c.l.b16 %v1928
      %v1937 = vpack.c.b16 %v1934, %v1933
      %v1938 = vpack.c.b16 %v1936, %v1935
      %1941 = vst [vmem:[#allocation3 + $0x20] sm:$0xff] %v1937
      %1942 = vst [vmem:[#allocation3 + $0x28] sm:$0xff] %v1938
      %1943 = vrot.lane.b32.xlu0 %v1861, 108
      %v1944 = vpop.permute.xlu0 %1943
      %1945 = vrot.lane.b32.xlu0 %v1862, 108
      %v1946 = vpop.permute.xlu0 %1945
      %1947 = vrot.lane.b32.xlu0 %v1863, 108
      %v1948 = vpop.permute.xlu0 %1947
      %1949 = vrot.lane.b32.xlu0 %v1864, 108
      %v1950 = vpop.permute.xlu0 %1949
      %v1951 = vsel %vm1011, %v1948, %v1950
      %v1952 = vsel %vm1011, %v1946, %v1948
      %v1953 = vsel %vm1011, %v1944, %v1946
      %v1954 = vsel %vm1011, %v1950, %v1944
      %v1955 = vpack.c.bf16 %v1953, %v1953
      %v1956 = vpack.c.bf16 %v1952, %v1952
      %v1957 = vpack.c.bf16 %v1951, %v1951
      %v1958 = vpack.c.bf16 %v1954, %v1954
      %v1963 = vunpack.c.l.b16 %v1955
      %v1964 = vunpack.c.l.b16 %v1956
      %v1965 = vunpack.c.l.b16 %v1957
      %v1966 = vunpack.c.l.b16 %v1958
      %v1967 = vpack.c.b16 %v1964, %v1963
      %v1968 = vpack.c.b16 %v1966, %v1965
      %1971 = vst [vmem:[#allocation3 + $0x30] sm:$0xff] %v1967
      %1972 = vst [vmem:[#allocation3 + $0x38] sm:$0xff] %v1968
      %1973 = vrot.lane.b32.xlu0 %v1861, 107
      %v1974 = vpop.permute.xlu0 %1973
      %1975 = vrot.lane.b32.xlu0 %v1862, 107
      %v1976 = vpop.permute.xlu0 %1975
      %1977 = vrot.lane.b32.xlu0 %v1863, 107
      %v1978 = vpop.permute.xlu0 %1977
      %1979 = vrot.lane.b32.xlu0 %v1864, 107
      %v1980 = vpop.permute.xlu0 %1979
      %v1981 = vsel %vm1044, %v1978, %v1980
      %v1982 = vsel %vm1044, %v1976, %v1978
      %v1983 = vsel %vm1044, %v1974, %v1976
      %v1984 = vsel %vm1044, %v1980, %v1974
      %v1985 = vpack.c.bf16 %v1983, %v1983
      %v1986 = vpack.c.bf16 %v1982, %v1982
      %v1987 = vpack.c.bf16 %v1981, %v1981
      %v1988 = vpack.c.bf16 %v1984, %v1984
      %v1993 = vunpack.c.l.b16 %v1985
      %v1994 = vunpack.c.l.b16 %v1986
      %v1995 = vunpack.c.l.b16 %v1987
      %v1996 = vunpack.c.l.b16 %v1988
      %v1997 = vpack.c.b16 %v1994, %v1993
      %v1998 = vpack.c.b16 %v1996, %v1995
      %2001 = vst [vmem:[#allocation3 + $0x40] sm:$0xff] %v1997
      %2002 = vst [vmem:[#allocation3 + $0x48] sm:$0xff] %v1998
      %2003 = vrot.lane.b32.xlu0 %v1861, 106
      %v2004 = vpop.permute.xlu0 %2003
      %2005 = vrot.lane.b32.xlu0 %v1862, 106
      %v2006 = vpop.permute.xlu0 %2005
      %2007 = vrot.lane.b32.xlu0 %v1863, 106
      %v2008 = vpop.permute.xlu0 %2007
      %2009 = vrot.lane.b32.xlu0 %v1864, 106
      %v2010 = vpop.permute.xlu0 %2009
      %v2011 = vsel %vm1075, %v2008, %v2010
      %v2012 = vsel %vm1075, %v2006, %v2008
      %v2013 = vsel %vm1075, %v2004, %v2006
      %v2014 = vsel %vm1075, %v2010, %v2004
      %v2015 = vpack.c.bf16 %v2013, %v2013
      %v2016 = vpack.c.bf16 %v2012, %v2012
      %v2017 = vpack.c.bf16 %v2011, %v2011
      %v2018 = vpack.c.bf16 %v2014, %v2014
      %v2023 = vunpack.c.l.b16 %v2015
      %v2024 = vunpack.c.l.b16 %v2016
      %v2025 = vunpack.c.l.b16 %v2017
      %v2026 = vunpack.c.l.b16 %v2018
      %v2027 = vpack.c.b16 %v2024, %v2023
      %v2028 = vpack.c.b16 %v2026, %v2025
      %2031 = vst [vmem:[#allocation3 + $0x50] sm:$0xff] %v2027
      %2032 = vst [vmem:[#allocation3 + $0x58] sm:$0xff] %v2028
      %2033 = vrot.lane.b32.xlu0 %v1861, 88
      %v2034 = vpop.permute.xlu0 %2033
      %2035 = vrot.lane.b32.xlu0 %v1862, 88
      %v2036 = vpop.permute.xlu0 %2035
      %2037 = vrot.lane.b32.xlu0 %v1863, 88
      %v2038 = vpop.permute.xlu0 %2037
      %2039 = vrot.lane.b32.xlu0 %v1864, 88
      %v2040 = vpop.permute.xlu0 %2039
      %v2041 = vsel %vm1108, %v2038, %v2040
      %v2042 = vsel %vm1108, %v2036, %v2038
      %v2043 = vsel %vm1108, %v2034, %v2036
      %v2044 = vsel %vm1108, %v2040, %v2034
      %v2045 = vpack.c.bf16 %v2043, %v2043
      %v2046 = vpack.c.bf16 %v2042, %v2042
      %v2047 = vpack.c.bf16 %v2041, %v2041
      %v2048 = vpack.c.bf16 %v2044, %v2044
      %v2053 = vunpack.c.l.b16 %v2045
      %v2054 = vunpack.c.l.b16 %v2046
      %v2055 = vunpack.c.l.b16 %v2047
      %v2056 = vunpack.c.l.b16 %v2048
      %v2057 = vpack.c.b16 %v2054, %v2053
      %v2058 = vpack.c.b16 %v2056, %v2055
      %2061 = vst [vmem:[#allocation3 + $0x60] sm:$0xff] %v2057
      %2062 = vst [vmem:[#allocation3 + $0x68] sm:$0xff] %v2058
      %2063 = vrot.lane.b32.xlu0 %v1861, 87
      %v2064 = vpop.permute.xlu0 %2063
      %2065 = vrot.lane.b32.xlu0 %v1862, 87
      %v2066 = vpop.permute.xlu0 %2065
      %2067 = vrot.lane.b32.xlu0 %v1863, 87
      %v2068 = vpop.permute.xlu0 %2067
      %2069 = vrot.lane.b32.xlu0 %v1864, 87
      %v2070 = vpop.permute.xlu0 %2069
      %v2071 = vsel %vm1139, %v2068, %v2070
      %v2072 = vsel %vm1139, %v2066, %v2068
      %v2073 = vsel %vm1139, %v2064, %v2066
      %v2074 = vsel %vm1139, %v2070, %v2064
      %v2075 = vpack.c.bf16 %v2073, %v2073
      %v2076 = vpack.c.bf16 %v2072, %v2072
      %v2077 = vpack.c.bf16 %v2071, %v2071
      %v2078 = vpack.c.bf16 %v2074, %v2074
      %v2083 = vunpack.c.l.b16 %v2075
      %v2084 = vunpack.c.l.b16 %v2076
      %v2085 = vunpack.c.l.b16 %v2077
      %v2086 = vunpack.c.l.b16 %v2078
      %v2087 = vpack.c.b16 %v2084, %v2083
      %v2088 = vpack.c.b16 %v2086, %v2085
      %2091 = vst [vmem:[#allocation3 + $0x70] sm:$0xff] %v2087
      %2092 = vst [vmem:[#allocation3 + $0x78] sm:$0xff] %v2088
      %2093 = vrot.lane.b32.xlu0 %v1861, 86
      %v2094 = vpop.permute.xlu0 %2093
      %2095 = vrot.lane.b32.xlu0 %v1862, 86
      %v2096 = vpop.permute.xlu0 %2095
      %2097 = vrot.lane.b32.xlu0 %v1863, 86
      %v2098 = vpop.permute.xlu0 %2097
      %2099 = vrot.lane.b32.xlu0 %v1864, 86
      %v2100 = vpop.permute.xlu0 %2099
      %v2101 = vsel %vm1172, %v2098, %v2100
      %v2102 = vsel %vm1172, %v2096, %v2098
      %v2103 = vsel %vm1172, %v2094, %v2096
      %v2104 = vsel %vm1172, %v2100, %v2094
      %v2105 = vpack.c.bf16 %v2103, %v2103
      %v2106 = vpack.c.bf16 %v2102, %v2102
      %v2107 = vpack.c.bf16 %v2101, %v2101
      %v2108 = vpack.c.bf16 %v2104, %v2104
      %v2113 = vunpack.c.l.b16 %v2105
      %v2114 = vunpack.c.l.b16 %v2106
      %v2115 = vunpack.c.l.b16 %v2107
      %v2116 = vunpack.c.l.b16 %v2108
      %v2117 = vpack.c.b16 %v2114, %v2113
      %v2118 = vpack.c.b16 %v2116, %v2115
      %2121 = vst [vmem:[#allocation3 + $0x80] sm:$0xff] %v2117
      %2122 = vst [vmem:[#allocation3 + $0x88] sm:$0xff] %v2118
      %v2123 = vld [vmem:[%s5] sm:$0x3]
      %v2124 = vld [vmem:[#allocation3] sm:$0xff]
      %v2125 = vld [vmem:[#allocation3 + $0x8] sm:$0xff]
      %v2126 = vld [vmem:[#allocation3 + $0x10] sm:$0xff]
      %v2127 = vld [vmem:[#allocation3 + $0x18] sm:$0xff]
      %v2128 = vld [vmem:[#allocation3 + $0x20] sm:$0xff]
      %v2129 = vld [vmem:[#allocation3 + $0x28] sm:$0xff]
      %v2130 = vld [vmem:[#allocation3 + $0x30] sm:$0xff]
      %v2131 = vld [vmem:[#allocation3 + $0x38] sm:$0xff]
      %v2132 = vld [vmem:[#allocation3 + $0x40] sm:$0xff]
      %v2133 = vld [vmem:[#allocation3 + $0x48] sm:$0xff]
      %v2134 = vld [vmem:[#allocation3 + $0x50] sm:$0xff]
      %v2135 = vld [vmem:[#allocation3 + $0x58] sm:$0xff]
      %v2136 = vld [vmem:[#allocation3 + $0x60] sm:$0xff]
      %v2137 = vld [vmem:[#allocation3 + $0x68] sm:$0xff]
      %v2138 = vld [vmem:[#allocation3 + $0x70] sm:$0xff]
      %v2139 = vld [vmem:[#allocation3 + $0x78] sm:$0xff]
      %v2140 = vld [vmem:[#allocation3 + $0x80] sm:$0xff]
      %v2141 = vld [vmem:[#allocation3 + $0x88] sm:$0xff]
      %v2142 = vld [vmem:[%s6] sm:$0xf]
      %2144 = vset.pattern.permute.xlu0 0
      %2145 = vperm.xlu0 %2144, %v2142
      %v2146 = vpop.permute.xlu0 %2145
      %v2166 = vunpack.c.l.b16 %v2124
      %v2167 = vunpack.c.h.b16 %v2124
      %v2168 = vunpack.c.l.b16 %v2125
      %v2169 = vunpack.c.h.b16 %v2125
      %v2170 = vunpack.c.l.b16 %v2126
      %v2171 = vunpack.c.h.b16 %v2126
      %v2172 = vunpack.c.l.b16 %v2127
      %v2173 = vunpack.c.h.b16 %v2127
      %v2174 = vunpack.c.l.b16 %v2128
      %v2175 = vunpack.c.h.b16 %v2128
      %v2176 = vunpack.c.l.b16 %v2129
      %v2177 = vunpack.c.h.b16 %v2129
      %v2178 = vunpack.c.l.b16 %v2130
      %v2179 = vunpack.c.h.b16 %v2130
      %v2180 = vunpack.c.l.b16 %v2131
      %v2181 = vunpack.c.h.b16 %v2131
      %v2182 = vunpack.c.l.b16 %v2132
      %v2183 = vunpack.c.h.b16 %v2132
      %v2184 = vunpack.c.l.b16 %v2133
      %v2185 = vunpack.c.h.b16 %v2133
      %v2186 = vunpack.c.l.b16 %v2134
      %v2187 = vunpack.c.h.b16 %v2134
      %v2188 = vunpack.c.l.b16 %v2135
      %v2189 = vunpack.c.h.b16 %v2135
      %v2190 = vunpack.c.l.b16 %v2136
      %v2191 = vunpack.c.h.b16 %v2136
      %v2192 = vunpack.c.l.b16 %v2137
      %v2193 = vunpack.c.h.b16 %v2137
      %v2194 = vunpack.c.l.b16 %v2138
      %v2195 = vunpack.c.h.b16 %v2138
      %v2196 = vunpack.c.l.b16 %v2139
      %v2197 = vunpack.c.h.b16 %v2139
      %v2198 = vunpack.c.l.b16 %v2140
      %v2199 = vunpack.c.h.b16 %v2140
      %v2200 = vunpack.c.l.b16 %v2141
      %v2201 = vunpack.c.h.b16 %v2141
      %v2202 = vpack.c.b16 %v2170, %v2166
      %v2203 = vpack.c.b16 %v2171, %v2167
      %v2204 = vpack.c.b16 %v2172, %v2168
      %v2205 = vpack.c.b16 %v2173, %v2169
      %v2206 = vpack.c.b16 %v2178, %v2174
      %v2207 = vpack.c.b16 %v2179, %v2175
      %v2208 = vpack.c.b16 %v2180, %v2176
      %v2209 = vpack.c.b16 %v2181, %v2177
      %v2210 = vpack.c.b16 %v2186, %v2182
      %v2211 = vpack.c.b16 %v2187, %v2183
      %v2212 = vpack.c.b16 %v2188, %v2184
      %v2213 = vpack.c.b16 %v2189, %v2185
      %v2214 = vpack.c.b16 %v2194, %v2190
      %v2215 = vpack.c.b16 %v2195, %v2191
      %v2216 = vpack.c.b16 %v2196, %v2192
      %v2217 = vpack.c.b16 %v2197, %v2193
      %v2218 = vpack.c.b16 %v2198, %v2198
      %v2219 = vpack.c.b16 %v2199, %v2199
      %v2220 = vpack.c.b16 %v2200, %v2200
      %v2221 = vpack.c.b16 %v2201, %v2201
      %v2239 = vsel %vm1750, %v2123, 0
      %v2242 = vsel %vm1754, %v2218, 0
      %v2245 = vsel %vm1754, %v2219, 0
      %v2248 = vsel %vm1754, %v2220, 0
      %v2251 = vsel %vm1754, %v2221, 0
      %2253 = vmatprep.subr.bf16.mxu0 %v2203
      %2254 = vmatpush1.bf16.msra.mxu0 %v2202
      %2255 = vmatprep.subr.bf16.mxu0 %v2207
      %2256 = vmatpush1.bf16.msra.mxu0 %v2206
      %2257 = vmatprep.subr.bf16.mxu0 %v2211
      %2258 = vmatpush1.bf16.msra.mxu0 %v2210
      %2259 = vmatprep.subr.bf16.mxu0 %v2215
      %2260 = vmatpush1.bf16.msra.mxu0 %v2214
      %2261 = vmatprep.subr.bf16.mxu0 %v2245
      %2262 = vmatpush1.bf16.msra.mxu0 %v2242
      %2263 = vmatprep.subr.bf16.mxu0 0
      %2264 = vmatpush1.bf16.msra.mxu0 0
      %2265 = vmatprep.subr.bf16.mxu0 0
      %2266 = vmatpush1.bf16.msra.mxu0 0
      %2267 = vmatprep.subr.bf16.mxu0 0
      %2268 = vmatpush1.bf16.msra.mxu0 0
      %2269 = vmatprep.subr.bf16.mxu0 0
      %2270 = vmatpush1.bf16.msra.mxu0 0
      %2271 = vmatprep.subr.bf16.mxu0 0
      %2272 = vmatpush1.bf16.msra.mxu0 0
      %2273 = vmatprep.subr.bf16.mxu0 0
      %2274 = vmatpush1.bf16.msra.mxu0 0
      %2275 = vmatprep.subr.bf16.mxu0 0
      %2276 = vmatpush1.bf16.msra.mxu0 0
      %2277 = vmatprep.subr.bf16.mxu0 0
      %2278 = vmatpush1.bf16.msra.mxu0 0
      %2279 = vmatprep.subr.bf16.mxu0 0
      %2280 = vmatpush1.bf16.msra.mxu0 0
      %2281 = vmatprep.subr.bf16.mxu0 0
      %2282 = vmatpush1.bf16.msra.mxu0 0
      %2283 = vmatprep.subr.bf16.mxu0 0
      %2284 = vmatpush1.bf16.msra.mxu0 0
      %2285 = vmatprep.mubr.bf16.mxu0 0
      %2286 = vmatmul.mubr.bf16.gmra.mrb[0].mxu0 %v2239
      %v2287 = vpop.f32.mrb[0].mxu0
      %v2288 = vadd.f32 %v2146, %v2287
      %v2289 = vpop.f32.mrb[0].mxu0
      %v2290 = vadd.f32 %v2146, %v2289
      %v2291 = vpop.f32.mrb[0].mxu0
      %v2292 = vpop.f32.mrb[0].mxu0
      %2293 = vdwg.mxu0
      %2294 = vmatprep.subr.bf16.mxu0 %v2205
      %2295 = vmatpush1.bf16.msra.mxu0 %v2204
      %2296 = vmatprep.subr.bf16.mxu0 %v2209
      %2297 = vmatpush1.bf16.msra.mxu0 %v2208
      %2298 = vmatprep.subr.bf16.mxu0 %v2213
      %2299 = vmatpush1.bf16.msra.mxu0 %v2212
      %2300 = vmatprep.subr.bf16.mxu0 %v2217
      %2301 = vmatpush1.bf16.msra.mxu0 %v2216
      %2302 = vmatprep.subr.bf16.mxu0 %v2251
      %2303 = vmatpush1.bf16.msra.mxu0 %v2248
      %2304 = vmatprep.subr.bf16.mxu0 0
      %2305 = vmatpush1.bf16.msra.mxu0 0
      %2306 = vmatprep.subr.bf16.mxu0 0
      %2307 = vmatpush1.bf16.msra.mxu0 0
      %2308 = vmatprep.subr.bf16.mxu0 0
      %2309 = vmatpush1.bf16.msra.mxu0 0
      %2310 = vmatprep.subr.bf16.mxu0 0
      %2311 = vmatpush1.bf16.msra.mxu0 0
      %2312 = vmatprep.subr.bf16.mxu0 0
      %2313 = vmatpush1.bf16.msra.mxu0 0
      %2314 = vmatprep.subr.bf16.mxu0 0
      %2315 = vmatpush1.bf16.msra.mxu0 0
      %2316 = vmatprep.subr.bf16.mxu0 0
      %2317 = vmatpush1.bf16.msra.mxu0 0
      %2318 = vmatprep.subr.bf16.mxu0 0
      %2319 = vmatpush1.bf16.msra.mxu0 0
      %2320 = vmatprep.subr.bf16.mxu0 0
      %2321 = vmatpush1.bf16.msra.mxu0 0
      %2322 = vmatprep.subr.bf16.mxu0 0
      %2323 = vmatpush1.bf16.msra.mxu0 0
      %2324 = vmatprep.subr.bf16.mxu0 0
      %2325 = vmatpush1.bf16.msra.mxu0 0
      %2326 = vmatprep.mubr.bf16.mxu0 0
      %2327 = vmatmul.mubr.bf16.gmra.mrb[0].mxu0 %v2239
      %v2328 = vpop.f32.mrb[0].mxu0
      %v2329 = vadd.f32 %v2146, %v2328
      %v2330 = vpop.f32.mrb[0].mxu0
      %v2331 = vpop.f32.mrb[0].mxu0
      %v2332 = vpop.f32.mrb[0].mxu0
      %2333 = vdwg.mxu0
      %v2334 = vtanh.pop %v2288
      %v2335 = vtanh.pop %v2290
      %v2336 = vtanh.pop %v2329
      %vm2337 = vcmask 125952
      %2338 = vst.msk [vmem:[%s278] sm:$0xf] %vm2337, %v2334
      %2340 = vrot.lane.b32.xlu0 %v2334, 124
      %v2341 = vpop.permute.xlu0 %2340
      %vm2343 = vcmask 257152
      %2344 = vst.msk [vmem:[%s278] sm:$0xf] %vm2343, %v2341
      %2345 = vrot.lane.b32.xlu0 %v2334, 120
      %v2346 = vpop.permute.xlu0 %2345
      %vm2348 = vcmask 388352
      %2349 = vst.msk [vmem:[%s278] sm:$0xf] %vm2348, %v2346
      %2350 = vrot.lane.b32.xlu0 %v2334, 116
      %v2351 = vpop.permute.xlu0 %2350
      %vm2353 = vcmask 519552
      %2354 = vst.msk [vmem:[%s278] sm:$0xf] %vm2353, %v2351
      %2355 = vrot.lane.b32.xlu0 %v2334, 112
      %v2356 = vpop.permute.xlu0 %2355
      %vm2358 = vcmask 650752
      %2359 = vst.msk [vmem:[%s278] sm:$0xf] %vm2358, %v2356
      %2360 = vrot.lane.b32.xlu0 %v2334, 108
      %v2361 = vpop.permute.xlu0 %2360
      %vm2363 = vcmask 781952
      %2364 = vst.msk [vmem:[%s278] sm:$0xf] %vm2363, %v2361
      %v2366 = vcombine.low %v2334, %v2335
      %2367 = vrot.lane.b32.xlu0 %v2366, 104
      %v2368 = vpop.permute.xlu0 %2367
      %v2369 = vrot.slane %v2368, 4
      %vm2370 = vcmask 850944
      %v2371 = vsel %vm2370, %v2368, %v2369
      %vm2373 = vcmask 913152
      %2374 = vst.msk [vmem:[%s278] sm:$0xf] %vm2373, %v2371
      %2375 = vrot.lane.b32.xlu0 %v2335, 100
      %v2376 = vpop.permute.xlu0 %2375
      %vm2378 = vcmask 1044352
      %2379 = vst.msk [vmem:[%s278] sm:$0xf] %vm2378, %v2376
      %2380 = vrot.lane.b32.xlu0 %v2335, 96
      %v2381 = vpop.permute.xlu0 %2380
      %2383 = vst.msk [vmem:[%s278 + $0x4] sm:$0xf] %vm2337, %v2381
      %2384 = vrot.lane.b32.xlu0 %v2335, 92
      %v2385 = vpop.permute.xlu0 %2384
      %2387 = vst.msk [vmem:[%s278 + $0x4] sm:$0xf] %vm2343, %v2385
      %2388 = vrot.lane.b32.xlu0 %v2335, 88
      %v2389 = vpop.permute.xlu0 %2388
      %2391 = vst.msk [vmem:[%s278 + $0x4] sm:$0xf] %vm2348, %v2389
      %2392 = vrot.lane.b32.xlu0 %v2335, 84
      %v2393 = vpop.permute.xlu0 %2392
      %2395 = vst.msk [vmem:[%s278 + $0x4] sm:$0xf] %vm2353, %v2393
      %2396 = vrot.lane.b32.xlu0 %v2335, 80
      %v2397 = vpop.permute.xlu0 %2396
      %2399 = vst.msk [vmem:[%s278 + $0x4] sm:$0xf] %vm2358, %v2397
      %2401 = vrot.lane.b32.xlu0 %v2336, 76
      %v2402 = vpop.permute.xlu0 %2401
      %2404 = vst.msk [vmem:[%s278 + $0x4] sm:$0xf] %vm2363, %v2402
      %2405 = vrot.lane.b32.xlu0 %v2336, 72
      %v2406 = vpop.permute.xlu0 %2405
      %2408 = vst.msk [vmem:[%s278 + $0x4] sm:$0xf] %vm2373, %v2406
      %2409 = vrot.lane.b32.xlu0 %v2336, 68
      %v2410 = vpop.permute.xlu0 %2409
      %2412 = vst.msk [vmem:[%s278 + $0x4] sm:$0xf] %vm2378, %v2410
      %p2413 = scmp.lt.s32.totalorder %s18, 1
      %s2414 = scalar_select %p2413, %s18, 1
      %s2415 = smul.addr %s2414, 2
      %s2416 = smul.addr %s2415, 4
      %s2417 = scalar_lea.vmem %s7, %s2416
      // Predicated region
      $region49: #{gan_forward.1} parent=47 // pred_check
        %p2418 = pneg %p188
      $region50: #{gan_forward.1} parent=47 // pred_check_branch
        %2420 = sbr.rel (%p2418) target = $region52
      $region51: #{gan_forward.1} parent=47 // pred_region
        _
      $region52: #{gan_forward.1} parent=47 // pred_fallthru
        _
    $region48: #{gan_forward.1} parent=5 // pred_fallthru
      _
    %p2421 = scmp.le.s32.totalorder 2, %s13
    // Predicated region
    $region53: #{gan_forward.1} parent=5 // pred_check
      %p2422 = pneg %p2421
    $region54: #{gan_forward.1} parent=5 // pred_check_branch
      %2424 = sbr.rel (%p2422) target = $region56
    $region55: #{gan_forward.1} parent=5 // pred_region
      %s2425 = ssub.s32 %s13, 2
      // Predicated region
      $region57: #{gan_forward.1} parent=55 // pred_check
        %p2426 = pneg %p194
      $region58: #{gan_forward.1} parent=55 // pred_check_branch
        %2428 = sbr.rel (%p2426) target = $region60
      $region59: #{gan_forward.1} parent=55 // pred_region
        %p2429 = scmp.lt.s32.totalorder %s19, 1
        %s2430 = scalar_select %p2429, %s19, 1
        %s2431 = smul.addr %s2430, 2
        %s2432 = smul.addr %s2431, 4
        %s2433 = scalar_lea.vmem %s7, %s2432
      $region60: #{gan_forward.1} parent=55 // pred_fallthru
        _
    $region56: #{gan_forward.1} parent=5 // pred_fallthru
      _
  $region6: #{gan_forward.1} parent=0 // loop_footer
    %s17 = sadd.s32 1, %s13
  $region7: #{gan_forward.1} parent=0 // loop_footer_branch
    %12 = sbr.rel target = $region3
  $region8: #{gan_forward.1} parent=0 // loop_exit
    _

</llo_original>
